<compile_context>
chip_gen: v7x
topology: tpu7x:2x2x1
jax: 0.10.0
libtpu: 0.0.40
codegen_flags: <defaults>
</compile_context>

<pallas_src>
import functools

import jax
import jax.numpy as jnp
from jax import lax
from jax.experimental import pallas as pl
from jax.experimental.pallas import tpu as pltpu


# ----------------------------------------------------------------------------
# In-kernel helpers
# ----------------------------------------------------------------------------
def _ln(x, gamma, beta, eps=1e-5):
    mean = jnp.mean(x, axis=-1, keepdims=True)
    var = jnp.mean((x - mean) ** 2, axis=-1, keepdims=True)
    return (x - mean) * lax.rsqrt(var + eps) * gamma + beta


def _quick_gelu(x):
    return x * jax.nn.sigmoid(1.702 * x)


# ----------------------------------------------------------------------------
# Kernel 1: patch embedding (== strided Conv2d, bias=False) as a tiled matmul
# ----------------------------------------------------------------------------
def _patch_embed_kernel(p_ref, w_ref, o_ref):
    o_ref[...] = jnp.dot(p_ref[...].astype(jnp.bfloat16), w_ref[...],
                         preferred_element_type=jnp.float32)


def patch_embed(patches, conv_w):
    M, K = patches.shape
    N = conv_w.shape[1]
    # pad contraction dim to a lane-aligned multiple of 128 (zeros are inert)
    K_pad = ((K + 127) // 128) * 128
    if K_pad != K:
        patches = jnp.pad(patches, ((0, 0), (0, K_pad - K)))
        conv_w = jnp.pad(conv_w, ((0, K_pad - K), (0, 0)))
    # pick the largest row tile that divides M (keeps the pipeline busy)
    tm = M
    for cand in (512, 256, 128, 64, 32, 16, 8):
        if M % cand == 0:
            tm = cand
            break
    return pl.pallas_call(
        _patch_embed_kernel,
        out_shape=jax.ShapeDtypeStruct((M, N), jnp.float32),
        grid=(M // tm,),
        in_specs=[pl.BlockSpec((tm, K_pad), lambda i: (i, 0)),
                  pl.BlockSpec((K_pad, N), lambda i: (0, 0))],
        out_specs=pl.BlockSpec((tm, N), lambda i: (i, 0)),
        compiler_params=pltpu.CompilerParams(
            dimension_semantics=("parallel",)),
    )(patches, conv_w)


# ----------------------------------------------------------------------------
# Kernel 2: the full transformer encoder stack (ln_pre fused into layer 0)
#   grid = (B, L, Ft): batch parallel, layers sequential (weights streamed),
#   feedforward dim tiled.  Activation lives in VMEM scratch across (L, Ft).
# ----------------------------------------------------------------------------
def _encoder_kernel(x_ref, lnp_w, lnp_b,
                    ln1_w, ln1_b, wqkv, bqkv, wo3, bo,
                    ln2_w, ln2_b, w1, b1, w2, b2,
                    o_ref,
                    x_sc, h2_sc, acc_sc, *, heads):
    l = pl.program_id(1)
    ft = pl.program_id(2)
    n_l = pl.num_programs(1)
    n_ft = pl.num_programs(2)
    S, W = x_sc.shape
    d = W // heads

    # ---- start of a new batch element: apply ln_pre and load activation ----
    @pl.when((l == 0) & (ft == 0))
    def _():
        x_sc[...] = _ln(x_ref[0], lnp_w[...], lnp_b[...])

    # ---- attention block + ln2 + FFN-accumulator init: once per layer ------
    @pl.when(ft == 0)
    def _():
        x = x_sc[...]                                        # (S, W) f32
        h = _ln(x, ln1_w[0], ln1_b[0]).astype(jnp.bfloat16)
        qkv = jnp.dot(h, wqkv[0],
                      preferred_element_type=jnp.float32) + bqkv[0]   # (S, 3W)
        # split heads into a batched (heads, S, d) layout (static slices)
        q3 = jnp.stack([qkv[:, i * d:(i + 1) * d]
                        for i in range(heads)], axis=0)
        k3 = jnp.stack([qkv[:, W + i * d:W + (i + 1) * d]
                        for i in range(heads)], axis=0)
        v3 = jnp.stack([qkv[:, 2 * W + i * d:2 * W + (i + 1) * d]
                        for i in range(heads)], axis=0)
        scale = 1.0 / (d ** 0.5)
        s = lax.dot_general(q3.astype(jnp.bfloat16), k3.astype(jnp.bfloat16),
                            (((2,), (2,)), ((0,), (0,))),
                            preferred_element_type=jnp.float32) * scale
        s = s - jnp.max(s, axis=-1, keepdims=True)
        p = jnp.exp(s)
        p = p * pl.reciprocal(jnp.sum(p, axis=-1, keepdims=True), approx=True)
        ctx = lax.dot_general(p.astype(jnp.bfloat16), v3.astype(jnp.bfloat16),
                              (((2,), (1,)), ((0,), (0,))),
                              preferred_element_type=jnp.float32)  # (H, S, d)
        # output projection: attn @ Wo == sum_h ctx_h @ Wo[h*d:(h+1)*d, :]
        proj = lax.dot_general(ctx.astype(jnp.bfloat16), wo3[0],
                               (((2,), (1,)), ((0,), (0,))),
                               preferred_element_type=jnp.float32)  # (H, S, W)
        attn = jnp.sum(proj, axis=0) + bo[0]
        x = x + attn
        x_sc[...] = x
        # ln2 output is cached in bf16: normalized once, re-used for every
        # feed-forward tile (also halves this scratch's VMEM footprint).
        h2_sc[...] = _ln(x, ln2_w[0], ln2_b[0]).astype(jnp.bfloat16)
        acc_sc[...] = jnp.zeros_like(acc_sc)

    # ---- feed-forward chunk over this F tile (quick_gelu activation) -------
    f = jnp.dot(h2_sc[...], w1[0], preferred_element_type=jnp.float32) + b1[0]
    f = _quick_gelu(f)
    acc_sc[...] += jnp.dot(f.astype(jnp.bfloat16), w2[0],
                           preferred_element_type=jnp.float32)

    # ---- finalize this layer's residual at the last F tile -----------------
    @pl.when(ft == n_ft - 1)
    def _():
        x_sc[...] = x_sc[...] + acc_sc[...] + b2[0]

    # ---- write the batch element's output after the last layer -------------
    @pl.when((l == n_l - 1) & (ft == n_ft - 1))
    def _():
        o_ref[0] = x_sc[...]


def transformer_encoder(x, params, *, heads):
    B, S, W = x.shape
    lp = params["layers"]
    L = lp["wqkv"].shape[0]
    F = lp["w1"].shape[2]
    d = W // heads

    # choose an F tile: large enough for MXU, small enough for VMEM (v7x-safe)
    tF = F
    for cand in (512, 256, 128):
        if F % cand == 0:
            tF = cand
            break
    n_ft = F // tF

    kernel = functools.partial(_encoder_kernel, heads=heads)
    in_specs = [
        pl.BlockSpec((1, S, W), lambda b, l, ft: (b, 0, 0)),          # x
        pl.BlockSpec((1, W), lambda b, l, ft: (0, 0)),                # ln_pre w
        pl.BlockSpec((1, W), lambda b, l, ft: (0, 0)),                # ln_pre b
        pl.BlockSpec((1, 1, W), lambda b, l, ft: (l, 0, 0)),          # ln1 w
        pl.BlockSpec((1, 1, W), lambda b, l, ft: (l, 0, 0)),          # ln1 b
        pl.BlockSpec((1, W, 3 * W), lambda b, l, ft: (l, 0, 0)),      # wqkv
        pl.BlockSpec((1, 1, 3 * W), lambda b, l, ft: (l, 0, 0)),      # bqkv
        pl.BlockSpec((1, heads, d, W), lambda b, l, ft: (l, 0, 0, 0)),  # wo3
        pl.BlockSpec((1, 1, W), lambda b, l, ft: (l, 0, 0)),          # bo
        pl.BlockSpec((1, 1, W), lambda b, l, ft: (l, 0, 0)),          # ln2 w
        pl.BlockSpec((1, 1, W), lambda b, l, ft: (l, 0, 0)),          # ln2 b
        pl.BlockSpec((1, W, tF), lambda b, l, ft: (l, 0, ft)),        # w1 tile
        pl.BlockSpec((1, 1, tF), lambda b, l, ft: (l, 0, ft)),        # b1 tile
        pl.BlockSpec((1, tF, W), lambda b, l, ft: (l, ft, 0)),        # w2 tile
        pl.BlockSpec((1, 1, W), lambda b, l, ft: (l, 0, 0)),          # b2
    ]

    return pl.pallas_call(
        kernel,
        out_shape=jax.ShapeDtypeStruct((B, S, W), jnp.float32),
        grid=(B, L, n_ft),
        in_specs=in_specs,
        out_specs=pl.BlockSpec((1, S, W), lambda b, l, ft: (b, 0, 0)),
        scratch_shapes=[pltpu.VMEM((S, W), jnp.float32),    # resident activation
                        pltpu.VMEM((S, W), jnp.bfloat16),   # ln2 output (bf16)
                        pltpu.VMEM((S, W), jnp.float32)],   # FFN accumulator
        compiler_params=pltpu.CompilerParams(
            dimension_semantics=("parallel", "arbitrary", "arbitrary"),
            vmem_limit_bytes=48 * 1024 * 1024),
    )(x, params["ln_pre_w"], params["ln_pre_b"],
      lp["ln1_w"], lp["ln1_b"], lp["wqkv"], lp["bqkv"], lp["wo3"], lp["bo"],
      lp["ln2_w"], lp["ln2_b"], lp["w1"], lp["b1"], lp["w2"], lp["b2"])


# ----------------------------------------------------------------------------
# Kernel 3: ln_post on the CLS token + output projection
# ----------------------------------------------------------------------------
def _head_kernel(x_ref, g_ref, b_ref, proj_ref, o_ref):
    xn = _ln(x_ref[...], g_ref[...], b_ref[...])
    o_ref[...] = jnp.dot(xn.astype(jnp.bfloat16), proj_ref[...],
                         preferred_element_type=jnp.float32)


def head_call(x_cls, gamma, beta, proj):
    B, W = x_cls.shape
    E = proj.shape[1]
    return pl.pallas_call(
        _head_kernel,
        out_shape=jax.ShapeDtypeStruct((B, E), jnp.float32),
        grid=(1,),
        in_specs=[pl.BlockSpec((B, W), lambda i: (0, 0)),
                  pl.BlockSpec((1, W), lambda i: (0, 0)),
                  pl.BlockSpec((1, W), lambda i: (0, 0)),
                  pl.BlockSpec((W, E), lambda i: (0, 0))],
        out_specs=pl.BlockSpec((B, E), lambda i: (0, 0)),
    )(x_cls, gamma, beta, proj)


# ----------------------------------------------------------------------------
# JAX glue: patch extraction + parameter init + full forward
# ----------------------------------------------------------------------------
def extract_patches(x, patch_size):
    """NCHW -> (B*N, 3*P*P) with per-patch flatten order (c, ph, pw)."""
    B, C, H, W = x.shape
    P = patch_size
    gh, gw = H // P, W // P
    x = x.reshape(B, C, gh, P, gw, P)
    x = x.transpose(0, 2, 4, 1, 3, 5)          # (B, gh, gw, C, P, P)
    return x.reshape(B * gh * gw, C * P * P)


def init_params(key, *, embedding_dim, patch_size, image_size, width, heads,
                layers):
    n_patches = (image_size // patch_size) ** 2
    W, F = width, 4 * width
    d = W // heads
    scale = W ** (-0.5)
    keys = jax.random.split(key, 4 + layers)

    params = {
        "conv_w": (scale * jax.random.normal(
            keys[0], (3 * patch_size * patch_size, W))).astype(jnp.bfloat16),
        "cls": scale * jax.random.normal(keys[1], (W,), jnp.float32),
        "pos": scale * jax.random.normal(
            keys[2], (n_patches + 1, W), jnp.float32),
        "ln_pre_w": jnp.ones((1, W), jnp.float32),
        "ln_pre_b": jnp.zeros((1, W), jnp.float32),
        "ln_post_w": jnp.ones((1, W), jnp.float32),
        "ln_post_b": jnp.zeros((1, W), jnp.float32),
        "proj": (scale * jax.random.normal(
            keys[3], (W, embedding_dim))).astype(jnp.bfloat16),
    }

    names = ("ln1_w", "ln1_b", "wqkv", "bqkv", "wo3", "bo",
             "ln2_w", "ln2_b", "w1", "b1", "w2", "b2")
    per = {n: [] for n in names}
    for l in range(layers):
        lk = jax.random.split(keys[4 + l], 6)
        wq = scale * jax.random.normal(lk[0], (W, W))
        wk = scale * jax.random.normal(lk[1], (W, W))
        wv = scale * jax.random.normal(lk[2], (W, W))
        wo = scale * jax.random.normal(lk[3], (W, W))
        per["ln1_w"].append(jnp.ones((1, W), jnp.float32))
        per["ln1_b"].append(jnp.zeros((1, W), jnp.float32))
        # fused QKV weight in "x @ W" orientation, columns = [Q | K | V]
        per["wqkv"].append(
            jnp.concatenate([wq, wk, wv], axis=1).astype(jnp.bfloat16))
        per["bqkv"].append(jnp.zeros((1, 3 * W), jnp.float32))
        # output projection reshaped per head on the host: (heads, d, W)
        per["wo3"].append(wo.reshape(heads, d, W).astype(jnp.bfloat16))
        per["bo"].append(jnp.zeros((1, W), jnp.float32))
        per["ln2_w"].append(jnp.ones((1, W), jnp.float32))
        per["ln2_b"].append(jnp.zeros((1, W), jnp.float32))
        per["w1"].append(
            (scale * jax.random.normal(lk[4], (W, F))).astype(jnp.bfloat16))
        per["b1"].append(jnp.zeros((1, F), jnp.float32))
        per["w2"].append(
            ((F ** -0.5) * jax.random.normal(lk[5], (F, W))).astype(jnp.bfloat16))
        per["b2"].append(jnp.zeros((1, W), jnp.float32))
    params["layers"] = {n: jnp.stack(v, axis=0) for n, v in per.items()}
    return params


def clip_vit_encoder_forward(x, params, *, patch_size, image_size, heads):
    if x.shape[2] != image_size or x.shape[3] != image_size:
        raise ValueError("bad spatial size")
    if x.shape[1] != 3:
        raise ValueError("expected 3 channels")

    B = x.shape[0]
    width = params["conv_w"].shape[1]

    patches = extract_patches(x, patch_size)                 # (B*N, 3*P*P)
    tok = patch_embed(patches, params["conv_w"])             # (B*N, width)
    n_patches = patches.shape[0] // B
    tok = tok.reshape(B, n_patches, width)                   # (B, N, width)

    cls = jnp.broadcast_to(params["cls"][None, None, :], (B, 1, width))
    h = jnp.concatenate([cls, tok], axis=1) + params["pos"][None]

    # ln_pre is fused into the first iteration of the encoder kernel.
    h = transformer_encoder(h, params, heads=heads)

    cls_tok = h[:, 0, :]                                     # (B, width)
    return head_call(cls_tok, params["ln_post_w"], params["ln_post_b"],
                     params["proj"])                         # (B, embed_dim)


# ----------------------------------------------------------------------------
if __name__ == "__main__":
    # small config: image 16x16, patch 4 -> 16 patches, seq 17
    embedding_dim = 16
    patch_size = 4
    image_size = 16
    width = 32
    heads = 4
    layers = 2
    batch = 2

    key = jax.random.PRNGKey(0)
    k_img, k_par = jax.random.split(key)
    x = jax.random.normal(k_img, (batch, 3, image_size, image_size),
                          jnp.float32)
    params = init_params(k_par, embedding_dim=embedding_dim,
                         patch_size=patch_size, image_size=image_size,
                         width=width, heads=heads, layers=layers)

    fwd = jax.jit(functools.partial(clip_vit_encoder_forward,
                                    patch_size=patch_size,
                                    image_size=image_size, heads=heads))
    out = fwd(x, params)
    out = jax.block_until_ready(out)
    assert out.shape == (batch, embedding_dim)
    assert bool(jnp.all(jnp.isfinite(out)))
    print("KERNEL_OK")
</pallas_src>

<mosaic_0001>
module attributes {stable_mosaic.version = 11 : i64} {
  func.func @_patch_embed_kernel(%arg0: i32, %arg1: memref<32x128xf32, #tpu.memory_space<vmem>>, %arg2: memref<128x32xbf16, #tpu.memory_space<vmem>>, %arg3: memref<32x32xf32, #tpu.memory_space<vmem>>) attributes {dimension_semantics = [#tpu.dimension_semantics<parallel>], iteration_bounds = array<i64: 1>, scalar_prefetch = 0 : i64, scratch_operands = 0 : i64, tpu.core_type = #tpu.core_type<tc>, window_params = [{transform_indices = @transform_0, window_bounds = array<i64: 32, 128>}, {pipeline_mode = #tpu.pipeline_mode<synchronous>, transform_indices = @transform_1, window_bounds = array<i64: 128, 32>}, {transform_indices = @transform_2, window_bounds = array<i64: 32, 32>}]} {
    %c0 = arith.constant 0 : index
    %c0_0 = arith.constant 0 : index
    %0 = vector.load %arg1[%c0, %c0_0] : memref<32x128xf32, #tpu.memory_space<vmem>>, vector<32x128xf32>
    %1 = arith.truncf %0 : vector<32x128xf32> to vector<32x128xbf16>
    %c0_1 = arith.constant 0 : index
    %c0_2 = arith.constant 0 : index
    %2 = vector.load %arg2[%c0_1, %c0_2] : memref<128x32xbf16, #tpu.memory_space<vmem>>, vector<128x32xbf16>
    %cst = arith.constant dense<0.000000e+00> : vector<32x32xf32>
    %3 = tpu.matmul %1, %2, %cst {dimension_numbers = #tpu.dot_dimension_numbers<[1], [0], [0], [1], [0, 0, 1, 1], [], []>} : vector<32x128xbf16>, vector<128x32xbf16>, vector<32x32xf32> -> vector<32x32xf32>
    %c0_3 = arith.constant 0 : index
    %c0_4 = arith.constant 0 : index
    %4 = vector.load %arg3[%c0_3, %c0_4] : memref<32x32xf32, #tpu.memory_space<vmem>>, vector<32x32xf32>
    tpu.vector_store %arg3[%c0_3, %c0_4], %3 {strides = array<i32>} : memref<32x32xf32, #tpu.memory_space<vmem>>, vector<32x32xf32>,
    return
  }
  func.func @transform_0(%arg0: i32) -> (i32, i32) {
    %c0_i32 = arith.constant 0 : i32
    %c0_i32_0 = arith.constant 0 : i32
    return %arg0, %c0_i32 : i32, i32
  }
  func.func @transform_1(%arg0: i32) -> (i32, i32) {
    %c0_i32 = arith.constant 0 : i32
    %c0_i32_0 = arith.constant 0 : i32
    %c0_i32_1 = arith.constant 0 : i32
    return %c0_i32, %c0_i32_0 : i32, i32
  }
  func.func @transform_2(%arg0: i32) -> (i32, i32) {
    %c0_i32 = arith.constant 0 : i32
    %c0_i32_0 = arith.constant 0 : i32
    return %arg0, %c0_i32 : i32, i32
  }
}

module attributes {stable_mosaic.version = 11 : i64} {
  func.func @_encoder_kernel(%arg0: i32, %arg1: i32, %arg2: i32, %arg3: memref<1x17x32xf32, #tpu.memory_space<vmem>>, %arg4: memref<1x32xf32, #tpu.memory_space<vmem>>, %arg5: memref<1x32xf32, #tpu.memory_space<vmem>>, %arg6: memref<1x1x32xf32, #tpu.memory_space<vmem>>, %arg7: memref<1x1x32xf32, #tpu.memory_space<vmem>>, %arg8: memref<1x32x96xbf16, #tpu.memory_space<vmem>>, %arg9: memref<1x1x96xf32, #tpu.memory_space<vmem>>, %arg10: memref<1x4x8x32xbf16, #tpu.memory_space<vmem>>, %arg11: memref<1x1x32xf32, #tpu.memory_space<vmem>>, %arg12: memref<1x1x32xf32, #tpu.memory_space<vmem>>, %arg13: memref<1x1x32xf32, #tpu.memory_space<vmem>>, %arg14: memref<1x32x128xbf16, #tpu.memory_space<vmem>>, %arg15: memref<1x1x128xf32, #tpu.memory_space<vmem>>, %arg16: memref<1x128x32xbf16, #tpu.memory_space<vmem>>, %arg17: memref<1x1x32xf32, #tpu.memory_space<vmem>>, %arg18: memref<1x17x32xf32, #tpu.memory_space<vmem>>, %arg19: memref<17x32xf32, #tpu.memory_space<vmem>>, %arg20: memref<17x32xbf16, #tpu.memory_space<vmem>>, %arg21: memref<17x32xf32, #tpu.memory_space<vmem>>) attributes {dimension_semantics = [#tpu.dimension_semantics<parallel>, #tpu.dimension_semantics<arbitrary>, #tpu.dimension_semantics<arbitrary>], iteration_bounds = array<i64: 2, 2, 1>, scalar_prefetch = 0 : i64, scratch_operands = 3 : i64, tpu.core_type = #tpu.core_type<tc>, window_params = [{transform_indices = @transform_0, window_bounds = array<i64: 1, 17, 32>}, {pipeline_mode = #tpu.pipeline_mode<synchronous>, transform_indices = @transform_1, window_bounds = array<i64: 1, 32>}, {pipeline_mode = #tpu.pipeline_mode<synchronous>, transform_indices = @transform_2, window_bounds = array<i64: 1, 32>}, {transform_indices = @transform_3, window_bounds = array<i64: 1, 1, 32>}, {transform_indices = @transform_4, window_bounds = array<i64: 1, 1, 32>}, {transform_indices = @transform_5, window_bounds = array<i64: 1, 32, 96>}, {transform_indices = @transform_6, window_bounds = array<i64: 1, 1, 96>}, {transform_indices = @transform_7, window_bounds = array<i64: 1, 4, 8, 32>}, {transform_indices = @transform_8, window_bounds = array<i64: 1, 1, 32>}, {transform_indices = @transform_9, window_bounds = array<i64: 1, 1, 32>}, {transform_indices = @transform_10, window_bounds = array<i64: 1, 1, 32>}, {transform_indices = @transform_11, window_bounds = array<i64: 1, 32, 128>}, {transform_indices = @transform_12, window_bounds = array<i64: 1, 1, 128>}, {transform_indices = @transform_13, window_bounds = array<i64: 1, 128, 32>}, {transform_indices = @transform_14, window_bounds = array<i64: 1, 1, 32>}, {transform_indices = @transform_15, window_bounds = array<i64: 1, 17, 32>}]} {
    %c0_i32 = arith.constant 0 : i32
    %0 = arith.cmpi eq, %arg1, %c0_i32 : i32
    %c0_i32_0 = arith.constant 0 : i32
    %1 = arith.cmpi eq, %arg2, %c0_i32_0 : i32
    %2 = arith.andi %0, %1 : i1
    %3 = arith.extui %2 : i1 to i32
    %c0_i32_1 = arith.constant 0 : i32
    %4 = arith.cmpi ne, %3, %c0_i32_1 : i32
    scf.if %4 {
      %c0_25 = arith.constant 0 : index
      %c0_26 = arith.constant 0 : index
      %c0_27 = arith.constant 0 : index
      %39 = vector.load %arg3[%c0_25, %c0_26, %c0_27] : memref<1x17x32xf32, #tpu.memory_space<vmem>>, vector<1x17x32xf32>
      %40 = vector.shape_cast %39 : vector<1x17x32xf32> to vector<17x32xf32>
      %c0_28 = arith.constant 0 : index
      %c0_29 = arith.constant 0 : index
      %41 = vector.load %arg4[%c0_28, %c0_29] : memref<1x32xf32, #tpu.memory_space<vmem>>, vector<1x32xf32>
      %c0_30 = arith.constant 0 : index
      %c0_31 = arith.constant 0 : index
      %42 = vector.load %arg5[%c0_30, %c0_31] : memref<1x32xf32, #tpu.memory_space<vmem>>, vector<1x32xf32>
      %cst_32 = arith.constant dense<0.000000e+00> : vector<17xf32>
      %43 = vector.multi_reduction <add>, %40, %cst_32 [1] : vector<17x32xf32> to vector<17xf32>
      %44 = vector.shape_cast %43 : vector<17xf32> to vector<17x1xf32>
      %cst_33 = arith.constant 3.200000e+01 : f32
      %45 = vector.broadcast %cst_33 : f32 to vector<17x1xf32>
      %46 = arith.divf %44, %45 : vector<17x1xf32>
      %47 = vector.broadcast %46 : vector<17x1xf32> to vector<17x32xf32>
      %48 = arith.subf %40, %47 : vector<17x32xf32>
      %49 = arith.mulf %48, %48 : vector<17x32xf32>
      %cst_34 = arith.constant dense<0.000000e+00> : vector<17xf32>
      %50 = vector.multi_reduction <add>, %49, %cst_34 [1] : vector<17x32xf32> to vector<17xf32>
      %51 = vector.shape_cast %50 : vector<17xf32> to vector<17x1xf32>
      %cst_35 = arith.constant 3.200000e+01 : f32
      %52 = vector.broadcast %cst_35 : f32 to vector<17x1xf32>
      %53 = arith.divf %51, %52 : vector<17x1xf32>
      %54 = vector.broadcast %46 : vector<17x1xf32> to vector<17x32xf32>
      %55 = arith.subf %40, %54 : vector<17x32xf32>
      %cst_36 = arith.constant 9.99999974E-6 : f32
      %56 = vector.broadcast %cst_36 : f32 to vector<17x1xf32>
      %57 = arith.addf %53, %56 : vector<17x1xf32>
      %58 = math.rsqrt %57 : vector<17x1xf32>
      %59 = vector.broadcast %58 : vector<17x1xf32> to vector<17x32xf32>
      %60 = arith.mulf %55, %59 : vector<17x32xf32>
      %61 = vector.broadcast %41 : vector<1x32xf32> to vector<17x32xf32>
      %62 = arith.mulf %60, %61 : vector<17x32xf32>
      %63 = vector.broadcast %42 : vector<1x32xf32> to vector<17x32xf32>
      %64 = arith.addf %62, %63 : vector<17x32xf32>
      %c0_37 = arith.constant 0 : index
      %c0_38 = arith.constant 0 : index
      %65 = vector.load %arg19[%c0_37, %c0_38] : memref<17x32xf32, #tpu.memory_space<vmem>>, vector<17x32xf32>
      tpu.vector_store %arg19[%c0_37, %c0_38], %64 {strides = array<i32>} : memref<17x32xf32, #tpu.memory_space<vmem>>, vector<17x32xf32>,
    } else {
    }
    %c0_i32_2 = arith.constant 0 : i32
    %5 = arith.cmpi eq, %arg2, %c0_i32_2 : i32
    %6 = arith.extui %5 : i1 to i32
    %c0_i32_3 = arith.constant 0 : i32
    %7 = arith.cmpi ne, %6, %c0_i32_3 : i32
    scf.if %7 {
      %c0_25 = arith.constant 0 : index
      %c0_26 = arith.constant 0 : index
      %39 = vector.load %arg19[%c0_25, %c0_26] : memref<17x32xf32, #tpu.memory_space<vmem>>, vector<17x32xf32>
      %c0_27 = arith.constant 0 : index
      %c0_28 = arith.constant 0 : index
      %c0_29 = arith.constant 0 : index
      %40 = vector.load %arg6[%c0_27, %c0_28, %c0_29] : memref<1x1x32xf32, #tpu.memory_space<vmem>>, vector<1x1x32xf32>
      %41 = vector.shape_cast %40 : vector<1x1x32xf32> to vector<1x32xf32>
      %c0_30 = arith.constant 0 : index
      %c0_31 = arith.constant 0 : index
      %c0_32 = arith.constant 0 : index
      %42 = vector.load %arg7[%c0_30, %c0_31, %c0_32] : memref<1x1x32xf32, #tpu.memory_space<vmem>>, vector<1x1x32xf32>
      %43 = vector.shape_cast %42 : vector<1x1x32xf32> to vector<1x32xf32>
      %cst_33 = arith.constant dense<0.000000e+00> : vector<17xf32>
      %44 = vector.multi_reduction <add>, %39, %cst_33 [1] : vector<17x32xf32> to vector<17xf32>
      %45 = vector.shape_cast %44 : vector<17xf32> to vector<17x1xf32>
      %cst_34 = arith.constant 3.200000e+01 : f32
      %46 = vector.broadcast %cst_34 : f32 to vector<17x1xf32>
      %47 = arith.divf %45, %46 : vector<17x1xf32>
      %48 = vector.broadcast %47 : vector<17x1xf32> to vector<17x32xf32>
      %49 = arith.subf %39, %48 : vector<17x32xf32>
      %50 = arith.mulf %49, %49 : vector<17x32xf32>
      %cst_35 = arith.constant dense<0.000000e+00> : vector<17xf32>
      %51 = vector.multi_reduction <add>, %50, %cst_35 [1] : vector<17x32xf32> to vector<17xf32>
      %52 = vector.shape_cast %51 : vector<17xf32> to vector<17x1xf32>
      %cst_36 = arith.constant 3.200000e+01 : f32
      %53 = vector.broadcast %cst_36 : f32 to vector<17x1xf32>
      %54 = arith.divf %52, %53 : vector<17x1xf32>
      %55 = vector.broadcast %47 : vector<17x1xf32> to vector<17x32xf32>
      %56 = arith.subf %39, %55 : vector<17x32xf32>
      %cst_37 = arith.constant 9.99999974E-6 : f32
      %57 = vector.broadcast %cst_37 : f32 to vector<17x1xf32>
      %58 = arith.addf %54, %57 : vector<17x1xf32>
      %59 = math.rsqrt %58 : vector<17x1xf32>
      %60 = vector.broadcast %59 : vector<17x1xf32> to vector<17x32xf32>
      %61 = arith.mulf %56, %60 : vector<17x32xf32>
      %62 = vector.broadcast %41 : vector<1x32xf32> to vector<17x32xf32>
      %63 = arith.mulf %61, %62 : vector<17x32xf32>
      %64 = vector.broadcast %43 : vector<1x32xf32> to vector<17x32xf32>
      %65 = arith.addf %63, %64 : vector<17x32xf32>
      %66 = arith.truncf %65 : vector<17x32xf32> to vector<17x32xbf16>
      %c0_38 = arith.constant 0 : index
      %c0_39 = arith.constant 0 : index
      %c0_40 = arith.constant 0 : index
      %67 = vector.load %arg8[%c0_38, %c0_39, %c0_40] : memref<1x32x96xbf16, #tpu.memory_space<vmem>>, vector<1x32x96xbf16>
      %68 = vector.shape_cast %67 : vector<1x32x96xbf16> to vector<32x96xbf16>
      %cst_41 = arith.constant dense<0.000000e+00> : vector<17x96xf32>
      %69 = tpu.matmul %66, %68, %cst_41 {dimension_numbers = #tpu.dot_dimension_numbers<[1], [0], [0], [1], [0, 0, 1, 1], [], []>} : vector<17x32xbf16>, vector<32x96xbf16>, vector<17x96xf32> -> vector<17x96xf32>
      %c0_42 = arith.constant 0 : index
      %c0_43 = arith.constant 0 : index
      %c0_44 = arith.constant 0 : index
      %70 = vector.load %arg9[%c0_42, %c0_43, %c0_44] : memref<1x1x96xf32, #tpu.memory_space<vmem>>, vector<1x1x96xf32>
      %71 = vector.shape_cast %70 : vector<1x1x96xf32> to vector<1x96xf32>
      %72 = vector.broadcast %71 : vector<1x96xf32> to vector<17x96xf32>
      %73 = arith.addf %69, %72 : vector<17x96xf32>
      %74 = vector.extract_strided_slice %73 {offsets = [0, 0], sizes = [17, 8], strides = [1, 1]} : vector<17x96xf32> to vector<17x8xf32>
      %75 = vector.extract_strided_slice %73 {offsets = [0, 8], sizes = [17, 8], strides = [1, 1]} : vector<17x96xf32> to vector<17x8xf32>
      %76 = vector.extract_strided_slice %73 {offsets = [0, 16], sizes = [17, 8], strides = [1, 1]} : vector<17x96xf32> to vector<17x8xf32>
      %77 = vector.extract_strided_slice %73 {offsets = [0, 24], sizes = [17, 8], strides = [1, 1]} : vector<17x96xf32> to vector<17x8xf32>
      %78 = vector.shape_cast %74 : vector<17x8xf32> to vector<1x17x8xf32>
      %79 = vector.shape_cast %75 : vector<17x8xf32> to vector<1x17x8xf32>
      %80 = vector.shape_cast %76 : vector<17x8xf32> to vector<1x17x8xf32>
      %81 = vector.shape_cast %77 : vector<17x8xf32> to vector<1x17x8xf32>
      %82 = tpu.concatenate %78, %79, %80, %81 in 0 : vector<1x17x8xf32>, vector<1x17x8xf32>, vector<1x17x8xf32>, vector<1x17x8xf32> -> vector<4x17x8xf32>
      %83 = vector.extract_strided_slice %73 {offsets = [0, 32], sizes = [17, 8], strides = [1, 1]} : vector<17x96xf32> to vector<17x8xf32>
      %84 = vector.extract_strided_slice %73 {offsets = [0, 40], sizes = [17, 8], strides = [1, 1]} : vector<17x96xf32> to vector<17x8xf32>
      %85 = vector.extract_strided_slice %73 {offsets = [0, 48], sizes = [17, 8], strides = [1, 1]} : vector<17x96xf32> to vector<17x8xf32>
      %86 = vector.extract_strided_slice %73 {offsets = [0, 56], sizes = [17, 8], strides = [1, 1]} : vector<17x96xf32> to vector<17x8xf32>
      %87 = vector.shape_cast %83 : vector<17x8xf32> to vector<1x17x8xf32>
      %88 = vector.shape_cast %84 : vector<17x8xf32> to vector<1x17x8xf32>
      %89 = vector.shape_cast %85 : vector<17x8xf32> to vector<1x17x8xf32>
      %90 = vector.shape_cast %86 : vector<17x8xf32> to vector<1x17x8xf32>
      %91 = tpu.concatenate %87, %88, %89, %90 in 0 : vector<1x17x8xf32>, vector<1x17x8xf32>, vector<1x17x8xf32>, vector<1x17x8xf32> -> vector<4x17x8xf32>
      %92 = vector.extract_strided_slice %73 {offsets = [0, 64], sizes = [17, 8], strides = [1, 1]} : vector<17x96xf32> to vector<17x8xf32>
      %93 = vector.extract_strided_slice %73 {offsets = [0, 72], sizes = [17, 8], strides = [1, 1]} : vector<17x96xf32> to vector<17x8xf32>
      %94 = vector.extract_strided_slice %73 {offsets = [0, 80], sizes = [17, 8], strides = [1, 1]} : vector<17x96xf32> to vector<17x8xf32>
      %95 = vector.extract_strided_slice %73 {offsets = [0, 88], sizes = [17, 8], strides = [1, 1]} : vector<17x96xf32> to vector<17x8xf32>
      %96 = vector.shape_cast %92 : vector<17x8xf32> to vector<1x17x8xf32>
      %97 = vector.shape_cast %93 : vector<17x8xf32> to vector<1x17x8xf32>
      %98 = vector.shape_cast %94 : vector<17x8xf32> to vector<1x17x8xf32>
      %99 = vector.shape_cast %95 : vector<17x8xf32> to vector<1x17x8xf32>
      %100 = tpu.concatenate %96, %97, %98, %99 in 0 : vector<1x17x8xf32>, vector<1x17x8xf32>, vector<1x17x8xf32>, vector<1x17x8xf32> -> vector<4x17x8xf32>
      %101 = arith.truncf %82 : vector<4x17x8xf32> to vector<4x17x8xbf16>
      %102 = arith.truncf %91 : vector<4x17x8xf32> to vector<4x17x8xbf16>
      %cst_45 = arith.constant dense<0.000000e+00> : vector<4x17x17xf32>
      %103 = tpu.matmul %101, %102, %cst_45 {dimension_numbers = #tpu.dot_dimension_numbers<[2], [2], [1], [1], [0, 0, 0, 1, 1, 1], [0], [0]>} : vector<4x17x8xbf16>, vector<4x17x8xbf16>, vector<4x17x17xf32> -> vector<4x17x17xf32>
      %cst_46 = arith.constant 0.353553385 : f32
      %104 = vector.broadcast %cst_46 : f32 to vector<4x17x17xf32>
      %105 = arith.mulf %103, %104 : vector<4x17x17xf32>
      %cst_47 = arith.constant dense<0xFF800000> : vector<4x17xf32>
      %106 = vector.multi_reduction <maximumf>, %105, %cst_47 [2] : vector<4x17x17xf32> to vector<4x17xf32>
      %107 = vector.shape_cast %106 : vector<4x17xf32> to vector<4x17x1xf32>
      %108 = vector.broadcast %107 : vector<4x17x1xf32> to vector<4x17x17xf32>
      %109 = arith.subf %105, %108 : vector<4x17x17xf32>
      %110 = math.exp %109 : vector<4x17x17xf32>
      %cst_48 = arith.constant dense<0.000000e+00> : vector<4x17xf32>
      %111 = vector.multi_reduction <add>, %110, %cst_48 [2] : vector<4x17x17xf32> to vector<4x17xf32>
      %112 = vector.shape_cast %111 : vector<4x17xf32> to vector<4x17x1xf32>
      %113 = tpu.reciprocal %112 {approx = true} : vector<4x17x1xf32> -> vector<4x17x1xf32>
      %114 = vector.broadcast %113 : vector<4x17x1xf32> to vector<4x17x17xf32>
      %115 = arith.mulf %110, %114 : vector<4x17x17xf32>
      %116 = arith.truncf %115 : vector<4x17x17xf32> to vector<4x17x17xbf16>
      %117 = arith.truncf %100 : vector<4x17x8xf32> to vector<4x17x8xbf16>
      %cst_49 = arith.constant dense<0.000000e+00> : vector<4x17x8xf32>
      %118 = tpu.matmul %116, %117, %cst_49 {dimension_numbers = #tpu.dot_dimension_numbers<[2], [1], [1], [2], [0, 0, 0, 1, 1, 2], [0], [0]>} : vector<4x17x17xbf16>, vector<4x17x8xbf16>, vector<4x17x8xf32> -> vector<4x17x8xf32>
      %119 = arith.truncf %118 : vector<4x17x8xf32> to vector<4x17x8xbf16>
      %c0_50 = arith.constant 0 : index
      %c0_51 = arith.constant 0 : index
      %c0_52 = arith.constant 0 : index
      %c0_53 = arith.constant 0 : index
      %120 = vector.load %arg10[%c0_50, %c0_51, %c0_52, %c0_53] : memref<1x4x8x32xbf16, #tpu.memory_space<vmem>>, vector<1x4x8x32xbf16>
      %121 = vector.shape_cast %120 : vector<1x4x8x32xbf16> to vector<4x8x32xbf16>
      %cst_54 = arith.constant dense<0.000000e+00> : vector<4x17x32xf32>
      %122 = tpu.matmul %119, %121, %cst_54 {dimension_numbers = #tpu.dot_dimension_numbers<[2], [1], [1], [2], [0, 0, 0, 1, 1, 2], [0], [0]>} : vector<4x17x8xbf16>, vector<4x8x32xbf16>, vector<4x17x32xf32> -> vector<4x17x32xf32>
      %cst_55 = arith.constant dense<0.000000e+00> : vector<17x32xf32>
      %123 = vector.multi_reduction <add>, %122, %cst_55 [0] : vector<4x17x32xf32> to vector<17x32xf32>
      %c0_56 = arith.constant 0 : index
      %c0_57 = arith.constant 0 : index
      %c0_58 = arith.constant 0 : index
      %124 = vector.load %arg11[%c0_56, %c0_57, %c0_58] : memref<1x1x32xf32, #tpu.memory_space<vmem>>, vector<1x1x32xf32>
      %125 = vector.shape_cast %124 : vector<1x1x32xf32> to vector<1x32xf32>
      %126 = vector.broadcast %125 : vector<1x32xf32> to vector<17x32xf32>
      %127 = arith.addf %123, %126 : vector<17x32xf32>
      %128 = arith.addf %39, %127 : vector<17x32xf32>
      %c0_59 = arith.constant 0 : index
      %c0_60 = arith.constant 0 : index
      %129 = vector.load %arg19[%c0_59, %c0_60] : memref<17x32xf32, #tpu.memory_space<vmem>>, vector<17x32xf32>
      tpu.vector_store %arg19[%c0_59, %c0_60], %128 {strides = array<i32>} : memref<17x32xf32, #tpu.memory_space<vmem>>, vector<17x32xf32>,
      %c0_61 = arith.constant 0 : index
      %c0_62 = arith.constant 0 : index
      %c0_63 = arith.constant 0 : index
      %130 = vector.load %arg12[%c0_61, %c0_62, %c0_63] : memref<1x1x32xf32, #tpu.memory_space<vmem>>, vector<1x1x32xf32>
      %131 = vector.shape_cast %130 : vector<1x1x32xf32> to vector<1x32xf32>
      %c0_64 = arith.constant 0 : index
      %c0_65 = arith.constant 0 : index
      %c0_66 = arith.constant 0 : index
      %132 = vector.load %arg13[%c0_64, %c0_65, %c0_66] : memref<1x1x32xf32, #tpu.memory_space<vmem>>, vector<1x1x32xf32>
      %133 = vector.shape_cast %132 : vector<1x1x32xf32> to vector<1x32xf32>
      %cst_67 = arith.constant dense<0.000000e+00> : vector<17xf32>
      %134 = vector.multi_reduction <add>, %128, %cst_67 [1] : vector<17x32xf32> to vector<17xf32>
      %135 = vector.shape_cast %134 : vector<17xf32> to vector<17x1xf32>
      %cst_68 = arith.constant 3.200000e+01 : f32
      %136 = vector.broadcast %cst_68 : f32 to vector<17x1xf32>
      %137 = arith.divf %135, %136 : vector<17x1xf32>
      %138 = vector.broadcast %137 : vector<17x1xf32> to vector<17x32xf32>
      %139 = arith.subf %128, %138 : vector<17x32xf32>
      %140 = arith.mulf %139, %139 : vector<17x32xf32>
      %cst_69 = arith.constant dense<0.000000e+00> : vector<17xf32>
      %141 = vector.multi_reduction <add>, %140, %cst_69 [1] : vector<17x32xf32> to vector<17xf32>
      %142 = vector.shape_cast %141 : vector<17xf32> to vector<17x1xf32>
      %cst_70 = arith.constant 3.200000e+01 : f32
      %143 = vector.broadcast %cst_70 : f32 to vector<17x1xf32>
      %144 = arith.divf %142, %143 : vector<17x1xf32>
      %145 = vector.broadcast %137 : vector<17x1xf32> to vector<17x32xf32>
      %146 = arith.subf %128, %145 : vector<17x32xf32>
      %cst_71 = arith.constant 9.99999974E-6 : f32
      %147 = vector.broadcast %cst_71 : f32 to vector<17x1xf32>
      %148 = arith.addf %144, %147 : vector<17x1xf32>
      %149 = math.rsqrt %148 : vector<17x1xf32>
      %150 = vector.broadcast %149 : vector<17x1xf32> to vector<17x32xf32>
      %151 = arith.mulf %146, %150 : vector<17x32xf32>
      %152 = vector.broadcast %131 : vector<1x32xf32> to vector<17x32xf32>
      %153 = arith.mulf %151, %152 : vector<17x32xf32>
      %154 = vector.broadcast %133 : vector<1x32xf32> to vector<17x32xf32>
      %155 = arith.addf %153, %154 : vector<17x32xf32>
      %156 = arith.truncf %155 : vector<17x32xf32> to vector<17x32xbf16>
      %c0_72 = arith.constant 0 : index
      %c0_73 = arith.constant 0 : index
      %157 = vector.load %arg20[%c0_72, %c0_73] : memref<17x32xbf16, #tpu.memory_space<vmem>>, vector<17x32xbf16>
      tpu.vector_store %arg20[%c0_72, %c0_73], %156 {strides = array<i32>} : memref<17x32xbf16, #tpu.memory_space<vmem>>, vector<17x32xbf16>,
      %cst_74 = arith.constant 0.000000e+00 : f32
      %158 = vector.broadcast %cst_74 : f32 to vector<17x32xf32>
      %c0_75 = arith.constant 0 : index
      %c0_76 = arith.constant 0 : index
      %159 = vector.load %arg21[%c0_75, %c0_76] : memref<17x32xf32, #tpu.memory_space<vmem>>, vector<17x32xf32>
      tpu.vector_store %arg21[%c0_75, %c0_76], %158 {strides = array<i32>} : memref<17x32xf32, #tpu.memory_space<vmem>>, vector<17x32xf32>,
    } else {
    }
    %c0 = arith.constant 0 : index
    %c0_4 = arith.constant 0 : index
    %8 = vector.load %arg20[%c0, %c0_4] : memref<17x32xbf16, #tpu.memory_space<vmem>>, vector<17x32xbf16>
    %c0_5 = arith.constant 0 : index
    %c0_6 = arith.constant 0 : index
    %c0_7 = arith.constant 0 : index
    %9 = vector.load %arg14[%c0_5, %c0_6, %c0_7] : memref<1x32x128xbf16, #tpu.memory_space<vmem>>, vector<1x32x128xbf16>
    %10 = vector.shape_cast %9 : vector<1x32x128xbf16> to vector<32x128xbf16>
    %cst = arith.constant dense<0.000000e+00> : vector<17x128xf32>
    %11 = tpu.matmul %8, %10, %cst {dimension_numbers = #tpu.dot_dimension_numbers<[1], [0], [0], [1], [0, 0, 1, 1], [], []>} : vector<17x32xbf16>, vector<32x128xbf16>, vector<17x128xf32> -> vector<17x128xf32>
    %c0_8 = arith.constant 0 : index
    %c0_9 = arith.constant 0 : index
    %c0_10 = arith.constant 0 : index
    %12 = vector.load %arg15[%c0_8, %c0_9, %c0_10] : memref<1x1x128xf32, #tpu.memory_space<vmem>>, vector<1x1x128xf32>
    %13 = vector.shape_cast %12 : vector<1x1x128xf32> to vector<1x128xf32>
    %14 = vector.broadcast %13 : vector<1x128xf32> to vector<17x128xf32>
    %15 = arith.addf %11, %14 : vector<17x128xf32>
    %cst_11 = arith.constant 1.702000e+00 : f32
    %16 = vector.broadcast %cst_11 : f32 to vector<17x128xf32>
    %17 = arith.mulf %16, %15 : vector<17x128xf32>
    %18 = arith.negf %17 : vector<17x128xf32>
    %19 = math.exp %18 : vector<17x128xf32>
    %cst_12 = arith.constant 1.000000e+00 : f32
    %20 = vector.broadcast %cst_12 : f32 to vector<17x128xf32>
    %21 = arith.addf %20, %19 : vector<17x128xf32>
    %22 = arith.divf %20, %21 : vector<17x128xf32>
    %23 = arith.mulf %15, %22 : vector<17x128xf32>
    %c0_13 = arith.constant 0 : index
    %c0_14 = arith.constant 0 : index
    %24 = vector.load %arg21[%c0_13, %c0_14] : memref<17x32xf32, #tpu.memory_space<vmem>>, vector<17x32xf32>
    %25 = arith.truncf %23 : vector<17x128xf32> to vector<17x128xbf16>
    %c0_15 = arith.constant 0 : index
    %c0_16 = arith.constant 0 : index
    %c0_17 = arith.constant 0 : index
    %26 = vector.load %arg16[%c0_15, %c0_16, %c0_17] : memref<1x128x32xbf16, #tpu.memory_space<vmem>>, vector<1x128x32xbf16>
    %27 = vector.shape_cast %26 : vector<1x128x32xbf16> to vector<128x32xbf16>
    %cst_18 = arith.constant dense<0.000000e+00> : vector<17x32xf32>
    %28 = tpu.matmul %25, %27, %cst_18 {dimension_numbers = #tpu.dot_dimension_numbers<[1], [0], [0], [1], [0, 0, 1, 1], [], []>} : vector<17x128xbf16>, vector<128x32xbf16>, vector<17x32xf32> -> vector<17x32xf32>
    %29 = arith.addf %24, %28 : vector<17x32xf32>
    %c0_19 = arith.constant 0 : index
    %c0_20 = arith.constant 0 : index
    %30 = vector.load %arg21[%c0_19, %c0_20] : memref<17x32xf32, #tpu.memory_space<vmem>>, vector<17x32xf32>
    tpu.vector_store %arg21[%c0_19, %c0_20], %29 {strides = array<i32>} : memref<17x32xf32, #tpu.memory_space<vmem>>, vector<17x32xf32>,
    %c0_i32_21 = arith.constant 0 : i32
    %31 = arith.cmpi eq, %arg2, %c0_i32_21 : i32
    %32 = arith.extui %31 : i1 to i32
    %c0_i32_22 = arith.constant 0 : i32
    %33 = arith.cmpi ne, %32, %c0_i32_22 : i32
    scf.if %33 {
      %c0_25 = arith.constant 0 : index
      %c0_26 = arith.constant 0 : index
      %39 = vector.load %arg19[%c0_25, %c0_26] : memref<17x32xf32, #tpu.memory_space<vmem>>, vector<17x32xf32>
      %c0_27 = arith.constant 0 : index
      %c0_28 = arith.constant 0 : index
      %40 = vector.load %arg21[%c0_27, %c0_28] : memref<17x32xf32, #tpu.memory_space<vmem>>, vector<17x32xf32>
      %41 = arith.addf %39, %40 : vector<17x32xf32>
      %c0_29 = arith.constant 0 : index
      %c0_30 = arith.constant 0 : index
      %c0_31 = arith.constant 0 : index
      %42 = vector.load %arg17[%c0_29, %c0_30, %c0_31] : memref<1x1x32xf32, #tpu.memory_space<vmem>>, vector<1x1x32xf32>
      %43 = vector.shape_cast %42 : vector<1x1x32xf32> to vector<1x32xf32>
      %44 = vector.broadcast %43 : vector<1x32xf32> to vector<17x32xf32>
      %45 = arith.addf %41, %44 : vector<17x32xf32>
      %c0_32 = arith.constant 0 : index
      %c0_33 = arith.constant 0 : index
      %46 = vector.load %arg19[%c0_32, %c0_33] : memref<17x32xf32, #tpu.memory_space<vmem>>, vector<17x32xf32>
      tpu.vector_store %arg19[%c0_32, %c0_33], %45 {strides = array<i32>} : memref<17x32xf32, #tpu.memory_space<vmem>>, vector<17x32xf32>,
    } else {
    }
    %c1_i32 = arith.constant 1 : i32
    %34 = arith.cmpi eq, %arg1, %c1_i32 : i32
    %c0_i32_23 = arith.constant 0 : i32
    %35 = arith.cmpi eq, %arg2, %c0_i32_23 : i32
    %36 = arith.andi %34, %35 : i1
    %37 = arith.extui %36 : i1 to i32
    %c0_i32_24 = arith.constant 0 : i32
    %38 = arith.cmpi ne, %37, %c0_i32_24 : i32
    scf.if %38 {
      %c0_25 = arith.constant 0 : index
      %c0_26 = arith.constant 0 : index
      %39 = vector.load %arg19[%c0_25, %c0_26] : memref<17x32xf32, #tpu.memory_space<vmem>>, vector<17x32xf32>
      %c0_27 = arith.constant 0 : index
      %c0_28 = arith.constant 0 : index
      %c0_29 = arith.constant 0 : index
      %40 = vector.load %arg18[%c0_27, %c0_28, %c0_29] : memref<1x17x32xf32, #tpu.memory_space<vmem>>, vector<1x17x32xf32>
      %41 = vector.shape_cast %40 : vector<1x17x32xf32> to vector<17x32xf32>
      %42 = vector.shape_cast %39 : vector<17x32xf32> to vector<1x17x32xf32>
      tpu.vector_store %arg18[%c0_27, %c0_28, %c0_29], %42 {strides = array<i32>} : memref<1x17x32xf32, #tpu.memory_space<vmem>>, vector<1x17x32xf32>,
    } else {
    }
    return
  }
  func.func @transform_0(%arg0: i32, %arg1: i32, %arg2: i32) -> (i32, i32, i32) {
    %c0_i32 = arith.constant 0 : i32
    %c0_i32_0 = arith.constant 0 : i32
    %c0_i32_1 = arith.constant 0 : i32
    return %arg0, %c0_i32, %c0_i32_0 : i32, i32, i32
  }
  func.func @transform_1(%arg0: i32, %arg1: i32, %arg2: i32) -> (i32, i32) {
    %c0_i32 = arith.constant 0 : i32
    %c0_i32_0 = arith.constant 0 : i32
    %c0_i32_1 = arith.constant 0 : i32
    return %c0_i32, %c0_i32_0 : i32, i32
  }
  func.func @transform_2(%arg0: i32, %arg1: i32, %arg2: i32) -> (i32, i32) {
    %c0_i32 = arith.constant 0 : i32
    %c0_i32_0 = arith.constant 0 : i32
    %c0_i32_1 = arith.constant 0 : i32
    return %c0_i32, %c0_i32_0 : i32, i32
  }
  func.func @transform_3(%arg0: i32, %arg1: i32, %arg2: i32) -> (i32, i32, i32) {
    %c0_i32 = arith.constant 0 : i32
    %c0_i32_0 = arith.constant 0 : i32
    %c0_i32_1 = arith.constant 0 : i32
    return %arg1, %c0_i32, %c0_i32_0 : i32, i32, i32
  }
  func.func @transform_4(%arg0: i32, %arg1: i32, %arg2: i32) -> (i32, i32, i32) {
    %c0_i32 = arith.constant 0 : i32
    %c0_i32_0 = arith.constant 0 : i32
    %c0_i32_1 = arith.constant 0 : i32
    return %arg1, %c0_i32, %c0_i32_0 : i32, i32, i32
  }
  func.func @transform_5(%arg0: i32, %arg1: i32, %arg2: i32) -> (i32, i32, i32) {
    %c0_i32 = arith.constant 0 : i32
    %c0_i32_0 = arith.constant 0 : i32
    %c0_i32_1 = arith.constant 0 : i32
    return %arg1, %c0_i32, %c0_i32_0 : i32, i32, i32
  }
  func.func @transform_6(%arg0: i32, %arg1: i32, %arg2: i32) -> (i32, i32, i32) {
    %c0_i32 = arith.constant 0 : i32
    %c0_i32_0 = arith.constant 0 : i32
    %c0_i32_1 = arith.constant 0 : i32
    return %arg1, %c0_i32, %c0_i32_0 : i32, i32, i32
  }
  func.func @transform_7(%arg0: i32, %arg1: i32, %arg2: i32) -> (i32, i32, i32, i32) {
    %c0_i32 = arith.constant 0 : i32
    %c0_i32_0 = arith.constant 0 : i32
    %c0_i32_1 = arith.constant 0 : i32
    %c0_i32_2 = arith.constant 0 : i32
    return %arg1, %c0_i32, %c0_i32_0, %c0_i32_1 : i32, i32, i32, i32
  }
  func.func @transform_8(%arg0: i32, %arg1: i32, %arg2: i32) -> (i32, i32, i32) {
    %c0_i32 = arith.constant 0 : i32
    %c0_i32_0 = arith.constant 0 : i32
    %c0_i32_1 = arith.constant 0 : i32
    return %arg1, %c0_i32, %c0_i32_0 : i32, i32, i32
  }
  func.func @transform_9(%arg0: i32, %arg1: i32, %arg2: i32) -> (i32, i32, i32) {
    %c0_i32 = arith.constant 0 : i32
    %c0_i32_0 = arith.constant 0 : i32
    %c0_i32_1 = arith.constant 0 : i32
    return %arg1, %c0_i32, %c0_i32_0 : i32, i32, i32
  }
  func.func @transform_10(%arg0: i32, %arg1: i32, %arg2: i32) -> (i32, i32, i32) {
    %c0_i32 = arith.constant 0 : i32
    %c0_i32_0 = arith.constant 0 : i32
    %c0_i32_1 = arith.constant 0 : i32
    return %arg1, %c0_i32, %c0_i32_0 : i32, i32, i32
  }
  func.func @transform_11(%arg0: i32, %arg1: i32, %arg2: i32) -> (i32, i32, i32) {
    %c0_i32 = arith.constant 0 : i32
    %c0_i32_0 = arith.constant 0 : i32
    return %arg1, %c0_i32, %arg2 : i32, i32, i32
  }
  func.func @transform_12(%arg0: i32, %arg1: i32, %arg2: i32) -> (i32, i32, i32) {
    %c0_i32 = arith.constant 0 : i32
    %c0_i32_0 = arith.constant 0 : i32
    return %arg1, %c0_i32, %arg2 : i32, i32, i32
  }
  func.func @transform_13(%arg0: i32, %arg1: i32, %arg2: i32) -> (i32, i32, i32) {
    %c0_i32 = arith.constant 0 : i32
    %c0_i32_0 = arith.constant 0 : i32
    return %arg1, %arg2, %c0_i32 : i32, i32, i32
  }
  func.func @transform_14(%arg0: i32, %arg1: i32, %arg2: i32) -> (i32, i32, i32) {
    %c0_i32 = arith.constant 0 : i32
    %c0_i32_0 = arith.constant 0 : i32
    %c0_i32_1 = arith.constant 0 : i32
    return %arg1, %c0_i32, %c0_i32_0 : i32, i32, i32
  }
  func.func @transform_15(%arg0: i32, %arg1: i32, %arg2: i32) -> (i32, i32, i32) {
    %c0_i32 = arith.constant 0 : i32
    %c0_i32_0 = arith.constant 0 : i32
    %c0_i32_1 = arith.constant 0 : i32
    return %arg0, %c0_i32, %c0_i32_0 : i32, i32, i32
  }
}

module attributes {stable_mosaic.version = 11 : i64} {
  func.func @_head_kernel(%arg0: i32, %arg1: memref<2x32xf32, #tpu.memory_space<vmem>>, %arg2: memref<1x32xf32, #tpu.memory_space<vmem>>, %arg3: memref<1x32xf32, #tpu.memory_space<vmem>>, %arg4: memref<32x16xbf16, #tpu.memory_space<vmem>>, %arg5: memref<2x16xf32, #tpu.memory_space<vmem>>) attributes {dimension_semantics = [#tpu.dimension_semantics<arbitrary>], iteration_bounds = array<i64: 1>, scalar_prefetch = 0 : i64, scratch_operands = 0 : i64, tpu.core_type = #tpu.core_type<tc>, window_params = [{pipeline_mode = #tpu.pipeline_mode<synchronous>, transform_indices = @transform_0, window_bounds = array<i64: 2, 32>}, {pipeline_mode = #tpu.pipeline_mode<synchronous>, transform_indices = @transform_1, window_bounds = array<i64: 1, 32>}, {pipeline_mode = #tpu.pipeline_mode<synchronous>, transform_indices = @transform_2, window_bounds = array<i64: 1, 32>}, {pipeline_mode = #tpu.pipeline_mode<synchronous>, transform_indices = @transform_3, window_bounds = array<i64: 32, 16>}, {pipeline_mode = #tpu.pipeline_mode<synchronous>, transform_indices = @transform_4, window_bounds = array<i64: 2, 16>}]} {
    %c0 = arith.constant 0 : index
    %c0_0 = arith.constant 0 : index
    %0 = vector.load %arg1[%c0, %c0_0] : memref<2x32xf32, #tpu.memory_space<vmem>>, vector<2x32xf32>
    %c0_1 = arith.constant 0 : index
    %c0_2 = arith.constant 0 : index
    %1 = vector.load %arg2[%c0_1, %c0_2] : memref<1x32xf32, #tpu.memory_space<vmem>>, vector<1x32xf32>
    %c0_3 = arith.constant 0 : index
    %c0_4 = arith.constant 0 : index
    %2 = vector.load %arg3[%c0_3, %c0_4] : memref<1x32xf32, #tpu.memory_space<vmem>>, vector<1x32xf32>
    %cst = arith.constant dense<0.000000e+00> : vector<2xf32>
    %3 = vector.multi_reduction <add>, %0, %cst [1] : vector<2x32xf32> to vector<2xf32>
    %4 = vector.shape_cast %3 : vector<2xf32> to vector<2x1xf32>
    %cst_5 = arith.constant 3.200000e+01 : f32
    %5 = vector.broadcast %cst_5 : f32 to vector<2x1xf32>
    %6 = arith.divf %4, %5 : vector<2x1xf32>
    %7 = vector.broadcast %6 : vector<2x1xf32> to vector<2x32xf32>
    %8 = arith.subf %0, %7 : vector<2x32xf32>
    %9 = arith.mulf %8, %8 : vector<2x32xf32>
    %cst_6 = arith.constant dense<0.000000e+00> : vector<2xf32>
    %10 = vector.multi_reduction <add>, %9, %cst_6 [1] : vector<2x32xf32> to vector<2xf32>
    %11 = vector.shape_cast %10 : vector<2xf32> to vector<2x1xf32>
    %cst_7 = arith.constant 3.200000e+01 : f32
    %12 = vector.broadcast %cst_7 : f32 to vector<2x1xf32>
    %13 = arith.divf %11, %12 : vector<2x1xf32>
    %14 = vector.broadcast %6 : vector<2x1xf32> to vector<2x32xf32>
    %15 = arith.subf %0, %14 : vector<2x32xf32>
    %cst_8 = arith.constant 9.99999974E-6 : f32
    %16 = vector.broadcast %cst_8 : f32 to vector<2x1xf32>
    %17 = arith.addf %13, %16 : vector<2x1xf32>
    %18 = math.rsqrt %17 : vector<2x1xf32>
    %19 = vector.broadcast %18 : vector<2x1xf32> to vector<2x32xf32>
    %20 = arith.mulf %15, %19 : vector<2x32xf32>
    %21 = vector.broadcast %1 : vector<1x32xf32> to vector<2x32xf32>
    %22 = arith.mulf %20, %21 : vector<2x32xf32>
    %23 = vector.broadcast %2 : vector<1x32xf32> to vector<2x32xf32>
    %24 = arith.addf %22, %23 : vector<2x32xf32>
    %25 = arith.truncf %24 : vector<2x32xf32> to vector<2x32xbf16>
    %c0_9 = arith.constant 0 : index
    %c0_10 = arith.constant 0 : index
    %26 = vector.load %arg4[%c0_9, %c0_10] : memref<32x16xbf16, #tpu.memory_space<vmem>>, vector<32x16xbf16>
    %cst_11 = arith.constant dense<0.000000e+00> : vector<2x16xf32>
    %27 = tpu.matmul %25, %26, %cst_11 {dimension_numbers = #tpu.dot_dimension_numbers<[1], [0], [0], [1], [0, 0, 1, 1], [], []>} : vector<2x32xbf16>, vector<32x16xbf16>, vector<2x16xf32> -> vector<2x16xf32>
    %c0_12 = arith.constant 0 : index
    %c0_13 = arith.constant 0 : index
    %28 = vector.load %arg5[%c0_12, %c0_13] : memref<2x16xf32, #tpu.memory_space<vmem>>, vector<2x16xf32>
    tpu.vector_store %arg5[%c0_12, %c0_13], %27 {strides = array<i32>} : memref<2x16xf32, #tpu.memory_space<vmem>>, vector<2x16xf32>,
    return
  }
  func.func @transform_0(%arg0: i32) -> (i32, i32) {
    %c0_i32 = arith.constant 0 : i32
    %c0_i32_0 = arith.constant 0 : i32
    %c0_i32_1 = arith.constant 0 : i32
    return %c0_i32, %c0_i32_0 : i32, i32
  }
  func.func @transform_1(%arg0: i32) -> (i32, i32) {
    %c0_i32 = arith.constant 0 : i32
    %c0_i32_0 = arith.constant 0 : i32
    %c0_i32_1 = arith.constant 0 : i32
    return %c0_i32, %c0_i32_0 : i32, i32
  }
  func.func @transform_2(%arg0: i32) -> (i32, i32) {
    %c0_i32 = arith.constant 0 : i32
    %c0_i32_0 = arith.constant 0 : i32
    %c0_i32_1 = arith.constant 0 : i32
    return %c0_i32, %c0_i32_0 : i32, i32
  }
  func.func @transform_3(%arg0: i32) -> (i32, i32) {
    %c0_i32 = arith.constant 0 : i32
    %c0_i32_0 = arith.constant 0 : i32
    %c0_i32_1 = arith.constant 0 : i32
    return %c0_i32, %c0_i32_0 : i32, i32
  }
  func.func @transform_4(%arg0: i32) -> (i32, i32) {
    %c0_i32 = arith.constant 0 : i32
    %c0_i32_0 = arith.constant 0 : i32
    %c0_i32_1 = arith.constant 0 : i32
    return %c0_i32, %c0_i32_0 : i32, i32
  }
}

</mosaic_0001>

<llo_original>
// kernel: clip_vit_encoder_forward.3
$region0: #{clip_vit_encoder_forward.3}
  #allocation0 [shape = 'u32[]', space=smem, size = 0x4, offset = 0x4, fixed_abs, tag = 'smem constant byte address 0x4 - core index']
  #allocation1 [shape = 'u32[144,128]{1,0:T(1,128)}', space=vmem, size = 0x12000, scoped, tag = 'internal scratch']
  %s0 = inlined_call_operand.vmem [shape: f32[32,128], index: 0, kind: input, shape index: {}]
  %s1 = inlined_call_operand.vmem [shape: bf16[128,32], index: 1, kind: input, shape index: {}]
  %s2 = inlined_call_operand.vmem [shape: f32[32,32], index: 2, kind: output, shape index: {}]
  %s3 = sld [smem:[#allocation0]]
  $region18: #{clip_vit_encoder_forward.3} parent=0
    _
  %s5 = ssub.s32 1, %s3
  %s6 = scalar_select 0, %s5, %s3
  // Predicated region
  $region2: #{clip_vit_encoder_forward.3} parent=0 // pred_check
    _
  $region3: #{clip_vit_encoder_forward.3} parent=0 // pred_check_branch
    %8 = sbr.rel (0) target = $region5
  $region4: #{clip_vit_encoder_forward.3} parent=0 // pred_region
    _
  $region5: #{clip_vit_encoder_forward.3} parent=0 // pred_fallthru
    _
  // Predicated region
  $region6: #{clip_vit_encoder_forward.3} parent=0 // pred_check
    _
  $region7: #{clip_vit_encoder_forward.3} parent=0 // pred_check_branch
    %10 = sbr.rel (0) target = $region9
  $region8: #{clip_vit_encoder_forward.3} parent=0 // pred_region
    _
  $region9: #{clip_vit_encoder_forward.3} parent=0 // pred_fallthru
    _
  %v12 = vld [vmem:[%s0] sm:$0xff]
  %v13 = vld [vmem:[%s0 + $0x8] sm:$0xff]
  %v14 = vld [vmem:[%s0 + $0x10] sm:$0xff]
  %v15 = vld [vmem:[%s0 + $0x18] sm:$0xff]
  %v16 = vpack.c.bf16 %v13, %v12
  %v17 = vpack.c.bf16 %v15, %v14
  %v18 = vld [vmem:[%s1] sm:$0xf]
  %v19 = vld [vmem:[%s1 + $0x4] sm:$0xf]
  %v20 = vld [vmem:[%s1 + $0x8] sm:$0xf]
  %v21 = vld [vmem:[%s1 + $0xc] sm:$0xf]
  %v22 = vld [vmem:[%s1 + $0x10] sm:$0xf]
  %v23 = vld [vmem:[%s1 + $0x14] sm:$0xf]
  %v24 = vld [vmem:[%s1 + $0x18] sm:$0xf]
  %v25 = vld [vmem:[%s1 + $0x1c] sm:$0xf]
  %v26 = vld [vmem:[%s1 + $0x20] sm:$0xf]
  %v27 = vld [vmem:[%s1 + $0x24] sm:$0xf]
  %v28 = vld [vmem:[%s1 + $0x28] sm:$0xf]
  %v29 = vld [vmem:[%s1 + $0x2c] sm:$0xf]
  %v30 = vld [vmem:[%s1 + $0x30] sm:$0xf]
  %v31 = vld [vmem:[%s1 + $0x34] sm:$0xf]
  %v32 = vld [vmem:[%s1 + $0x38] sm:$0xf]
  %v33 = vld [vmem:[%s1 + $0x3c] sm:$0xf]
  %v50 = vunpack.c.l.b16 %v18
  %v51 = vunpack.c.l.b16 %v19
  %v52 = vunpack.c.l.b16 %v20
  %v53 = vunpack.c.l.b16 %v21
  %v54 = vunpack.c.l.b16 %v22
  %v55 = vunpack.c.l.b16 %v23
  %v56 = vunpack.c.l.b16 %v24
  %v57 = vunpack.c.l.b16 %v25
  %v58 = vunpack.c.l.b16 %v26
  %v59 = vunpack.c.l.b16 %v27
  %v60 = vunpack.c.l.b16 %v28
  %v61 = vunpack.c.l.b16 %v29
  %v62 = vunpack.c.l.b16 %v30
  %v63 = vunpack.c.l.b16 %v31
  %v64 = vunpack.c.l.b16 %v32
  %v65 = vunpack.c.l.b16 %v33
  %v66 = vpack.c.b16 %v51, %v50
  %v67 = vpack.c.b16 %v53, %v52
  %v68 = vpack.c.b16 %v55, %v54
  %v69 = vpack.c.b16 %v57, %v56
  %v70 = vpack.c.b16 %v59, %v58
  %v71 = vpack.c.b16 %v61, %v60
  %v72 = vpack.c.b16 %v63, %v62
  %v73 = vpack.c.b16 %v65, %v64
  %82 = vmatprep.subr.bf16.mxu0 0
  %83 = vmatpush1.bf16.msra.mxu0 %v66
  %84 = vmatprep.subr.bf16.mxu0 0
  %85 = vmatpush1.bf16.msra.mxu0 %v67
  %86 = vmatprep.subr.bf16.mxu0 0
  %87 = vmatpush1.bf16.msra.mxu0 %v68
  %88 = vmatprep.subr.bf16.mxu0 0
  %89 = vmatpush1.bf16.msra.mxu0 %v69
  %90 = vmatprep.subr.bf16.mxu0 0
  %91 = vmatpush1.bf16.msra.mxu0 %v70
  %92 = vmatprep.subr.bf16.mxu0 0
  %93 = vmatpush1.bf16.msra.mxu0 %v71
  %94 = vmatprep.subr.bf16.mxu0 0
  %95 = vmatpush1.bf16.msra.mxu0 %v72
  %96 = vmatprep.subr.bf16.mxu0 0
  %97 = vmatpush1.bf16.msra.mxu0 %v73
  %98 = vmatprep.subr.bf16.mxu0 0
  %99 = vmatpush1.bf16.msra.mxu0 0
  %100 = vmatprep.subr.bf16.mxu0 0
  %101 = vmatpush1.bf16.msra.mxu0 0
  %102 = vmatprep.subr.bf16.mxu0 0
  %103 = vmatpush1.bf16.msra.mxu0 0
  %104 = vmatprep.subr.bf16.mxu0 0
  %105 = vmatpush1.bf16.msra.mxu0 0
  %106 = vmatprep.subr.bf16.mxu0 0
  %107 = vmatpush1.bf16.msra.mxu0 0
  %108 = vmatprep.subr.bf16.mxu0 0
  %109 = vmatpush1.bf16.msra.mxu0 0
  %110 = vmatprep.subr.bf16.mxu0 0
  %111 = vmatpush1.bf16.msra.mxu0 0
  %112 = vmatprep.subr.bf16.mxu0 0
  %113 = vmatpush1.bf16.msra.mxu0 0
  %114 = vmatprep.mubr.bf16.mxu0 0
  %115 = vmatmul.mubr.bf16.gmra.mrb[0].mxu0 %v16
  %v116 = vpop.f32.mrb[0].mxu0
  %v117 = vadd.f32 0.0, %v116
  %v118 = vpop.f32.mrb[0].mxu0
  %v119 = vpop.f32.mrb[0].mxu0
  %v120 = vadd.f32 0.0, %v119
  %v121 = vpop.f32.mrb[0].mxu0
  %122 = vmatprep.mubr.bf16.mxu0 0
  %123 = vmatmul.mubr.bf16.gmra.mrb[0].mxu0 %v17
  %v124 = vpop.f32.mrb[0].mxu0
  %v125 = vadd.f32 0.0, %v124
  %v126 = vpop.f32.mrb[0].mxu0
  %v127 = vpop.f32.mrb[0].mxu0
  %v128 = vadd.f32 0.0, %v127
  %v129 = vpop.f32.mrb[0].mxu0
  %130 = vdwg.mxu0
  %vm131 = vcmask 261120
  %132 = vst.msk [vmem:[%s2] sm:$0xff] %vm131, %v117
  %133 = vst.msk [vmem:[%s2 + $0x8] sm:$0xff] %vm131, %v120
  %134 = vst.msk [vmem:[%s2 + $0x10] sm:$0xff] %vm131, %v125
  %135 = vst.msk [vmem:[%s2 + $0x18] sm:$0xff] %vm131, %v128
  // Predicated region
  $region10: #{clip_vit_encoder_forward.3} parent=0 // pred_check
    _
  $region11: #{clip_vit_encoder_forward.3} parent=0 // pred_check_branch
    %137 = sbr.rel (0) target = $region13
  $region12: #{clip_vit_encoder_forward.3} parent=0 // pred_region
    _
  $region13: #{clip_vit_encoder_forward.3} parent=0 // pred_fallthru
    _
  // Predicated region
  $region14: #{clip_vit_encoder_forward.3} parent=0 // pred_check
    _
  $region15: #{clip_vit_encoder_forward.3} parent=0 // pred_check_branch
    %139 = sbr.rel (0) target = $region17
  $region16: #{clip_vit_encoder_forward.3} parent=0 // pred_region
    _
  $region17: #{clip_vit_encoder_forward.3} parent=0 // pred_fallthru
    _

// kernel: clip_vit_encoder_forward.5
$region0: #{clip_vit_encoder_forward.5}
  #allocation0 [shape = 'u32[]', space=smem, size = 0x4, offset = 0x4, fixed_abs, tag = 'smem constant byte address 0x4 - core index']
  #allocation1 [shape = 'u32[144,128]{1,0:T(1,128)}', space=vmem, size = 0x12000, scoped, tag = 'internal scratch']
  %s0 = inlined_call_operand.vmem [shape: f32[2,32], index: 0, kind: input, shape index: {}]
  %s1 = inlined_call_operand.vmem [shape: f32[1,32], index: 1, kind: input, shape index: {}]
  %s2 = inlined_call_operand.vmem [shape: f32[1,32], index: 2, kind: input, shape index: {}]
  %s3 = inlined_call_operand.vmem [shape: bf16[32,16], index: 3, kind: input, shape index: {}]
  %s4 = inlined_call_operand.hbm [shape: f32[2,16], index: 4, kind: output, shape index: {}]
  %s5 = sld [smem:[#allocation0]]
  $region26: #{clip_vit_encoder_forward.5} parent=0
    _
  %s7 = ssub.s32 1, %s5
  %s8 = scalar_select 0, %s7, %s5
  $region1: #{clip_vit_encoder_forward.5} parent=0
    #allocation2 [shape = 'u8[1024]{0}', space=vmem, size = 0x400, scoped, tag = 'output window, operand 0, single buffered']
    #allocation3 [shape = 's32[1]{0}', space=sflag, size = 0x4, scoped, tag = 'scoped memory for clip_vit_encoder_forward.5']
    %9 = vsyncpa [#allocation3], 0
    // Predicated region
    $region2: #{clip_vit_encoder_forward.5} parent=1 // pred_check
      _
    $region3: #{clip_vit_encoder_forward.5} parent=1 // pred_check_branch
      %11 = sbr.rel (0) target = $region5
    $region4: #{clip_vit_encoder_forward.5} parent=1 // pred_region
      _
    $region5: #{clip_vit_encoder_forward.5} parent=1 // pred_fallthru
      _
    // Predicated region
    $region6: #{clip_vit_encoder_forward.5} parent=1 // pred_check
      _
    $region7: #{clip_vit_encoder_forward.5} parent=1 // pred_check_branch
      %13 = sbr.rel (0) target = $region9
    $region8: #{clip_vit_encoder_forward.5} parent=1 // pred_region
      _
    $region9: #{clip_vit_encoder_forward.5} parent=1 // pred_fallthru
      _
    // Predicated region
    $region10: #{clip_vit_encoder_forward.5} parent=1 // pred_check
      _
    $region11: #{clip_vit_encoder_forward.5} parent=1 // pred_check_branch
      %15 = sbr.rel (0) target = $region13
    $region12: #{clip_vit_encoder_forward.5} parent=1 // pred_region
      _
    $region13: #{clip_vit_encoder_forward.5} parent=1 // pred_fallthru
      _
    // Predicated region
    $region14: #{clip_vit_encoder_forward.5} parent=1 // pred_check
      _
    $region15: #{clip_vit_encoder_forward.5} parent=1 // pred_check_branch
      %17 = sbr.rel (0) target = $region17
    $region16: #{clip_vit_encoder_forward.5} parent=1 // pred_region
      _
    $region17: #{clip_vit_encoder_forward.5} parent=1 // pred_fallthru
      _
    %v19 = vld [vmem:[%s0] sm:$0x3]
    %v20 = vld [vmem:[%s1] sm:$0x1]
    %v21 = vld [vmem:[%s2] sm:$0x1]
    %vm22 = vcmask 254976
    %v23 = vsel %vm22, %v19, 0.0
    %24 = vadd.xlane.f32.xlu0 %v23
    %v25 = vpop.xlane.xlu0 %24
    %v26 = vrcp.pop 32.0
    %v27 = vmul.f32 %v25, %v26
    %v28 = vsub.f32 %v19, %v27
    %v29 = vmul.f32 %v28, %v28
    %v30 = vsel %vm22, %v29, 0.0
    %31 = vadd.xlane.f32.xlu0 %v30
    %v32 = vpop.xlane.xlu0 %31
    %v33 = vmul.f32 %v32, %v26
    %v34 = vadd.f32 %v33, 1e-05
    %v35 = vrsqrt.pop %v34
    %v36 = vmul.f32 %v28, %v35
    %v38 = vlaneseq
    %v39 = vshrl.u32 %v38, 7
    %v40 = vsub.s32 0, %v39
    %v41 = vrot.slane %v20, %v40
    %v43 = vmul.f32 %v36, %v41
    %v45 = vlaneseq
    %v46 = vshrl.u32 %v45, 7
    %v47 = vsub.s32 0, %v46
    %v48 = vrot.slane %v21, %v47
    %v50 = vadd.f32 %v43, %v48
    %v51 = vpack.c.bf16 %v50, %v50
    %v52 = vld [vmem:[%s3] sm:$0xf]
    %v53 = vld [vmem:[%s3 + $0x4] sm:$0xf]
    %v54 = vld [vmem:[%s3 + $0x8] sm:$0xf]
    %v55 = vld [vmem:[%s3 + $0xc] sm:$0xf]
    %v60 = vunpack.c.l.b16 %v52
    %v61 = vunpack.c.l.b16 %v53
    %v62 = vunpack.c.l.b16 %v54
    %v63 = vunpack.c.l.b16 %v55
    %v64 = vpack.c.b16 %v61, %v60
    %v65 = vpack.c.b16 %v63, %v62
    %vm68 = vcmask 261120
    %v70 = vsel %vm68, %v51, 0
    %72 = vmatprep.subr.bf16.mxu0 0
    %73 = vmatpush1.bf16.msra.mxu0 %v64
    %74 = vmatprep.subr.bf16.mxu0 0
    %75 = vmatpush1.bf16.msra.mxu0 %v65
    %76 = vmatprep.subr.bf16.mxu0 0
    %77 = vmatpush1.bf16.msra.mxu0 0
    %78 = vmatprep.subr.bf16.mxu0 0
    %79 = vmatpush1.bf16.msra.mxu0 0
    %80 = vmatprep.subr.bf16.mxu0 0
    %81 = vmatpush1.bf16.msra.mxu0 0
    %82 = vmatprep.subr.bf16.mxu0 0
    %83 = vmatpush1.bf16.msra.mxu0 0
    %84 = vmatprep.subr.bf16.mxu0 0
    %85 = vmatpush1.bf16.msra.mxu0 0
    %86 = vmatprep.subr.bf16.mxu0 0
    %87 = vmatpush1.bf16.msra.mxu0 0
    %88 = vmatprep.subr.bf16.mxu0 0
    %89 = vmatpush1.bf16.msra.mxu0 0
    %90 = vmatprep.subr.bf16.mxu0 0
    %91 = vmatpush1.bf16.msra.mxu0 0
    %92 = vmatprep.subr.bf16.mxu0 0
    %93 = vmatpush1.bf16.msra.mxu0 0
    %94 = vmatprep.subr.bf16.mxu0 0
    %95 = vmatpush1.bf16.msra.mxu0 0
    %96 = vmatprep.subr.bf16.mxu0 0
    %97 = vmatpush1.bf16.msra.mxu0 0
    %98 = vmatprep.subr.bf16.mxu0 0
    %99 = vmatpush1.bf16.msra.mxu0 0
    %100 = vmatprep.subr.bf16.mxu0 0
    %101 = vmatpush1.bf16.msra.mxu0 0
    %102 = vmatprep.subr.bf16.mxu0 0
    %103 = vmatpush1.bf16.msra.mxu0 0
    %104 = vmatprep.mubr.bf16.mxu0 0
    %105 = vmatmul.mubr.bf16.gmra.mrb[0].mxu0 %v70
    %v106 = vpop.f32.mrb[0].mxu0
    %v107 = vadd.f32 0.0, %v106
    %v108 = vpop.f32.mrb[0].mxu0
    %v109 = vpop.f32.mrb[0].mxu0
    %v110 = vpop.f32.mrb[0].mxu0
    %111 = vdwg.mxu0
    %vm112 = vcmask 123904
    %113 = vst.msk [vmem:[#allocation2] sm:$0x3] %vm112, %v107
    // Predicated region
    $region18: #{clip_vit_encoder_forward.5} parent=1 // pred_check
      _
    $region19: #{clip_vit_encoder_forward.5} parent=1 // pred_check_branch
      %115 = sbr.rel (0) target = $region21
    $region20: #{clip_vit_encoder_forward.5} parent=1 // pred_region
      %s117 = ssub.s32 32, 32
      %118 = vsyncadd [#allocation3], %s117
      %s120 = sshll.u32 [#allocation2], 4
      %s121 = int_to_ptr.vmem [resolvable:$true] %s120
      %123 = dma.vmem_to_hbm [thread:$0]  %s121, 32, %s4, [#allocation3]
    $region21: #{clip_vit_encoder_forward.5} parent=1 // pred_fallthru
      _
    // Predicated region
    $region22: #{clip_vit_encoder_forward.5} parent=1 // pred_check
      _
    $region23: #{clip_vit_encoder_forward.5} parent=1 // pred_check_branch
      %125 = sbr.rel (0) target = $region25
    $region24: #{clip_vit_encoder_forward.5} parent=1 // pred_region
      %126 = dma.done [#allocation3], 32
    $region25: #{clip_vit_encoder_forward.5} parent=1 // pred_fallthru
      _
    %127 = vsyncpa [#allocation3], 1

// kernel: clip_vit_encoder_forward.4
$region0: #{clip_vit_encoder_forward.4}
  #allocation0 [shape = 'u32[]', space=smem, size = 0x4, offset = 0x4, fixed_abs, tag = 'smem constant byte address 0x4 - core index']
  #allocation1 [shape = 'u32[144,128]{1,0:T(1,128)}', space=vmem, size = 0x12000, scoped, tag = 'internal scratch']
  #allocation2 [shape = 'f32[17,32]{1,0:T(8,128)}', space=vmem, size = 0x3000, scoped, tag = 'scratch operand']
  #allocation3 [shape = 'bf16[17,32]{1,0:T(8,128)(2,1)}', space=vmem, size = 0x1800, scoped, tag = 'scratch operand']
  #allocation4 [shape = 'f32[17,32]{1,0:T(8,128)}', space=vmem, size = 0x3000, scoped, tag = 'scratch operand']
  %s0 = inlined_call_operand.vmem [shape: f32[2,17,32], index: 0, kind: input, shape index: {}]
  %s1 = inlined_call_operand.vmem [shape: f32[1,32], index: 1, kind: input, shape index: {}]
  %s2 = inlined_call_operand.vmem [shape: f32[1,32], index: 2, kind: input, shape index: {}]
  %s3 = inlined_call_operand.vmem [shape: f32[2,1,32], index: 3, kind: input, shape index: {}]
  %s4 = inlined_call_operand.vmem [shape: f32[2,1,32], index: 4, kind: input, shape index: {}]
  %s5 = inlined_call_operand.vmem [shape: bf16[2,32,96], index: 5, kind: input, shape index: {}]
  %s6 = inlined_call_operand.vmem [shape: f32[2,1,96], index: 6, kind: input, shape index: {}]
  %s7 = inlined_call_operand.vmem [shape: bf16[2,4,8,32], index: 7, kind: input, shape index: {}]
  %s8 = inlined_call_operand.vmem [shape: f32[2,1,32], index: 8, kind: input, shape index: {}]
  %s9 = inlined_call_operand.vmem [shape: f32[2,1,32], index: 9, kind: input, shape index: {}]
  %s10 = inlined_call_operand.vmem [shape: f32[2,1,32], index: 10, kind: input, shape index: {}]
  %s11 = inlined_call_operand.vmem [shape: bf16[2,32,128], index: 11, kind: input, shape index: {}]
  %s12 = inlined_call_operand.vmem [shape: f32[2,1,128], index: 12, kind: input, shape index: {}]
  %s13 = inlined_call_operand.vmem [shape: bf16[2,128,32], index: 13, kind: input, shape index: {}]
  %s14 = inlined_call_operand.vmem [shape: f32[2,1,32], index: 14, kind: input, shape index: {}]
  %s15 = inlined_call_operand.vmem [shape: f32[2,17,32], index: 15, kind: output, shape index: {}]
  %s16 = sld [smem:[#allocation0]]
  $region109: #{clip_vit_encoder_forward.4} parent=0
    _
  %s18 = ssub.s32 1, %s16
  %s19 = scalar_select 0, %s18, %s16
  loop: start=0, step=1, limit=6
  $region2: #{clip_vit_encoder_forward.4} parent=0 // loop_pre_header
    _
  $region3: #{clip_vit_encoder_forward.4} parent=0 // loop_header
    %s21 = sphi 0, %s25
    %p22 = scmp.ge.s32.totalorder %s21, 6
    %s28 = sphi 0, %s47
    %s29 = sphi 0, %s43
    %s30 = sphi 0, %s39
    %s31 = sphi 0, %s28
    %s32 = sphi 0, %s29
    %s33 = sphi 0, %s30
    %s34 = sphi 0, %s31
    %s35 = sphi 0, %s32
    %s36 = sphi 0, %s33
    %s50 = sphi 0, %s52
    %s53 = sphi 0, %s50
    %s54 = sphi 0, %s53
    %s70 = sphi 0, %s54
    %s74 = sphi 0, %s74
    %s76 = sphi 0, %s74
    %s77 = sphi 0, %s76
    %s91 = sphi 0, %s77
    %s95 = sphi 0, %s95
    %s97 = sphi 0, %s95
    %s98 = sphi 0, %s97
    %s112 = sphi 0, %s98
    %s118 = sphi 0, %s120
    %s121 = sphi 0, %s118
    %s122 = sphi 0, %s121
    %s138 = sphi 0, %s122
    %s144 = sphi 0, %s146
    %s147 = sphi 0, %s144
    %s148 = sphi 0, %s147
    %s164 = sphi 0, %s148
    %s170 = sphi 0, %s172
    %s173 = sphi 0, %s170
    %s174 = sphi 0, %s173
    %s190 = sphi 0, %s174
    %s196 = sphi 0, %s198
    %s199 = sphi 0, %s196
    %s200 = sphi 0, %s199
    %s216 = sphi 0, %s200
    %s222 = sphi 0, %s224
    %s225 = sphi 0, %s222
    %s226 = sphi 0, %s225
    %s242 = sphi 0, %s226
    %s248 = sphi 0, %s250
    %s251 = sphi 0, %s248
    %s252 = sphi 0, %s251
    %s268 = sphi 0, %s252
    %s274 = sphi 0, %s276
    %s277 = sphi 0, %s274
    %s278 = sphi 0, %s277
    %s294 = sphi 0, %s278
    %s300 = sphi 0, %s302
    %s303 = sphi 0, %s300
    %s304 = sphi 0, %s303
    %s320 = sphi 0, %s304
    %s328 = sphi 0, %s330
    %s331 = sphi 0, %s328
    %s332 = sphi 0, %s331
    %s348 = sphi 0, %s332
    %s356 = sphi 0, %s358
    %s359 = sphi 0, %s356
    %s360 = sphi 0, %s359
    %s376 = sphi 0, %s360
    %s384 = sphi 0, %s386
    %s387 = sphi 0, %s384
    %s388 = sphi 0, %s387
    %s404 = sphi 0, %s388
    %s410 = sphi 0, %s412
    %s413 = sphi 0, %s410
    %s414 = sphi 0, %s413
    %s430 = sphi 0, %s414
    %s436 = sphi 0, %s438
    %s439 = sphi 0, %s436
    %s440 = sphi 0, %s439
    %s456 = sphi 0, %s440
  $region4: #{clip_vit_encoder_forward.4} parent=0 // loop_header_branch
    %24 = sbr.rel (%p22) target = $region8
  $region5: #{clip_vit_encoder_forward.4} parent=0 // loop_body
    %s26 = ssub.s32 %s21, 1
    %s27 = ssub.s32 %s21, 2
    %s37 = sadd.s32 1, %s30
    %p38 = scmp.ge.s32.totalorder %s37, 1
    %s39 = scalar_select %p38, 0, %s37
    %s40 = sadd.s32 1, %s29
    %s41 = scalar_select %p38, %s40, %s29
    %p42 = scmp.ge.s32.totalorder %s41, 2
    %s43 = scalar_select %p42, 0, %s41
    %s44 = sadd.s32 1, %s28
    %s45 = scalar_select %p42, %s44, %s28
    %p46 = scmp.ge.s32.totalorder %s45, 2
    %s47 = scalar_select %p46, 0, %s45
    %s48 = ssub.s32 %s28, %s47
    %p49 = scmp.eq.s32.totalorder %s48, 0
    %s51 = sadd.s32 %s50, 1
    %s52 = scalar_select %p49, %s50, %s51
    %p55 = pneg %p49
    %p56 = scmp.eq.s32.totalorder %s21, 3
    %p57 = por %p55, %p56
    %p58 = scmp.ne.s32.totalorder %s50, %s53
    %p59 = scmp.eq.s32.totalorder %s21, 0
    %p60 = por %p58, %p59
    %p61 = scmp.ne.s32.totalorder %s50, %s53
    %p62 = scmp.eq.s32.totalorder %s26, 3
    %p63 = por %p61, %p62
    %p64 = scmp.ne.s32.totalorder %s53, %s54
    %p65 = scmp.eq.s32.totalorder %s26, 0
    %p66 = por %p64, %p65
    %p67 = scmp.ne.s32.totalorder %s53, %s54
    %p68 = scmp.eq.s32.totalorder %s27, 3
    %p69 = por %p67, %p68
    %p71 = scmp.ne.s32.totalorder %s54, %s70
    %p72 = scmp.eq.s32.totalorder %s27, 0
    %p73 = por %p71, %p72
    %s75 = sadd.s32 %s74, 1
    %p78 = scmp.eq.s32.totalorder %s21, 3
    %p79 = scmp.ne.s32.totalorder %s74, %s76
    %p80 = scmp.eq.s32.totalorder %s21, 0
    %p81 = por %p79, %p80
    %p82 = scmp.ne.s32.totalorder %s74, %s76
    %p83 = scmp.eq.s32.totalorder %s26, 3
    %p84 = por %p82, %p83
    %p85 = scmp.ne.s32.totalorder %s76, %s77
    %p86 = scmp.eq.s32.totalorder %s26, 0
    %p87 = por %p85, %p86
    %p88 = scmp.ne.s32.totalorder %s76, %s77
    %p89 = scmp.eq.s32.totalorder %s27, 3
    %p90 = por %p88, %p89
    %p92 = scmp.ne.s32.totalorder %s77, %s91
    %p93 = scmp.eq.s32.totalorder %s27, 0
    %p94 = por %p92, %p93
    %s96 = sadd.s32 %s95, 1
    %p99 = scmp.eq.s32.totalorder %s21, 3
    %p100 = scmp.ne.s32.totalorder %s95, %s97
    %p101 = scmp.eq.s32.totalorder %s21, 0
    %p102 = por %p100, %p101
    %p103 = scmp.ne.s32.totalorder %s95, %s97
    %p104 = scmp.eq.s32.totalorder %s26, 3
    %p105 = por %p103, %p104
    %p106 = scmp.ne.s32.totalorder %s97, %s98
    %p107 = scmp.eq.s32.totalorder %s26, 0
    %p108 = por %p106, %p107
    %p109 = scmp.ne.s32.totalorder %s97, %s98
    %p110 = scmp.eq.s32.totalorder %s27, 3
    %p111 = por %p109, %p110
    %p113 = scmp.ne.s32.totalorder %s98, %s112
    %p114 = scmp.eq.s32.totalorder %s27, 0
    %p115 = por %p113, %p114
    %s116 = ssub.s32 %s29, %s43
    %p117 = scmp.eq.s32.totalorder %s116, 0
    %s119 = sadd.s32 %s118, 1
    %s120 = scalar_select %p117, %s118, %s119
    %p123 = pneg %p117
    %p124 = scmp.eq.s32.totalorder %s21, 3
    %p125 = por %p123, %p124
    %p126 = scmp.ne.s32.totalorder %s118, %s121
    %p127 = scmp.eq.s32.totalorder %s21, 0
    %p128 = por %p126, %p127
    %p129 = scmp.ne.s32.totalorder %s118, %s121
    %p130 = scmp.eq.s32.totalorder %s26, 3
    %p131 = por %p129, %p130
    %p132 = scmp.ne.s32.totalorder %s121, %s122
    %p133 = scmp.eq.s32.totalorder %s26, 0
    %p134 = por %p132, %p133
    %p135 = scmp.ne.s32.totalorder %s121, %s122
    %p136 = scmp.eq.s32.totalorder %s27, 3
    %p137 = por %p135, %p136
    %p139 = scmp.ne.s32.totalorder %s122, %s138
    %p140 = scmp.eq.s32.totalorder %s27, 0
    %p141 = por %p139, %p140
    %s142 = ssub.s32 %s29, %s43
    %p143 = scmp.eq.s32.totalorder %s142, 0
    %s145 = sadd.s32 %s144, 1
    %s146 = scalar_select %p143, %s144, %s145
    %p149 = pneg %p143
    %p150 = scmp.eq.s32.totalorder %s21, 3
    %p151 = por %p149, %p150
    %p152 = scmp.ne.s32.totalorder %s144, %s147
    %p153 = scmp.eq.s32.totalorder %s21, 0
    %p154 = por %p152, %p153
    %p155 = scmp.ne.s32.totalorder %s144, %s147
    %p156 = scmp.eq.s32.totalorder %s26, 3
    %p157 = por %p155, %p156
    %p158 = scmp.ne.s32.totalorder %s147, %s148
    %p159 = scmp.eq.s32.totalorder %s26, 0
    %p160 = por %p158, %p159
    %p161 = scmp.ne.s32.totalorder %s147, %s148
    %p162 = scmp.eq.s32.totalorder %s27, 3
    %p163 = por %p161, %p162
    %p165 = scmp.ne.s32.totalorder %s148, %s164
    %p166 = scmp.eq.s32.totalorder %s27, 0
    %p167 = por %p165, %p166
    %s168 = ssub.s32 %s29, %s43
    %p169 = scmp.eq.s32.totalorder %s168, 0
    %s171 = sadd.s32 %s170, 1
    %s172 = scalar_select %p169, %s170, %s171
    %p175 = pneg %p169
    %p176 = scmp.eq.s32.totalorder %s21, 3
    %p177 = por %p175, %p176
    %p178 = scmp.ne.s32.totalorder %s170, %s173
    %p179 = scmp.eq.s32.totalorder %s21, 0
    %p180 = por %p178, %p179
    %p181 = scmp.ne.s32.totalorder %s170, %s173
    %p182 = scmp.eq.s32.totalorder %s26, 3
    %p183 = por %p181, %p182
    %p184 = scmp.ne.s32.totalorder %s173, %s174
    %p185 = scmp.eq.s32.totalorder %s26, 0
    %p186 = por %p184, %p185
    %p187 = scmp.ne.s32.totalorder %s173, %s174
    %p188 = scmp.eq.s32.totalorder %s27, 3
    %p189 = por %p187, %p188
    %p191 = scmp.ne.s32.totalorder %s174, %s190
    %p192 = scmp.eq.s32.totalorder %s27, 0
    %p193 = por %p191, %p192
    %s194 = ssub.s32 %s29, %s43
    %p195 = scmp.eq.s32.totalorder %s194, 0
    %s197 = sadd.s32 %s196, 1
    %s198 = scalar_select %p195, %s196, %s197
    %p201 = pneg %p195
    %p202 = scmp.eq.s32.totalorder %s21, 3
    %p203 = por %p201, %p202
    %p204 = scmp.ne.s32.totalorder %s196, %s199
    %p205 = scmp.eq.s32.totalorder %s21, 0
    %p206 = por %p204, %p205
    %p207 = scmp.ne.s32.totalorder %s196, %s199
    %p208 = scmp.eq.s32.totalorder %s26, 3
    %p209 = por %p207, %p208
    %p210 = scmp.ne.s32.totalorder %s199, %s200
    %p211 = scmp.eq.s32.totalorder %s26, 0
    %p212 = por %p210, %p211
    %p213 = scmp.ne.s32.totalorder %s199, %s200
    %p214 = scmp.eq.s32.totalorder %s27, 3
    %p215 = por %p213, %p214
    %p217 = scmp.ne.s32.totalorder %s200, %s216
    %p218 = scmp.eq.s32.totalorder %s27, 0
    %p219 = por %p217, %p218
    %s220 = ssub.s32 %s29, %s43
    %p221 = scmp.eq.s32.totalorder %s220, 0
    %s223 = sadd.s32 %s222, 1
    %s224 = scalar_select %p221, %s222, %s223
    %p227 = pneg %p221
    %p228 = scmp.eq.s32.totalorder %s21, 3
    %p229 = por %p227, %p228
    %p230 = scmp.ne.s32.totalorder %s222, %s225
    %p231 = scmp.eq.s32.totalorder %s21, 0
    %p232 = por %p230, %p231
    %p233 = scmp.ne.s32.totalorder %s222, %s225
    %p234 = scmp.eq.s32.totalorder %s26, 3
    %p235 = por %p233, %p234
    %p236 = scmp.ne.s32.totalorder %s225, %s226
    %p237 = scmp.eq.s32.totalorder %s26, 0
    %p238 = por %p236, %p237
    %p239 = scmp.ne.s32.totalorder %s225, %s226
    %p240 = scmp.eq.s32.totalorder %s27, 3
    %p241 = por %p239, %p240
    %p243 = scmp.ne.s32.totalorder %s226, %s242
    %p244 = scmp.eq.s32.totalorder %s27, 0
    %p245 = por %p243, %p244
    %s246 = ssub.s32 %s29, %s43
    %p247 = scmp.eq.s32.totalorder %s246, 0
    %s249 = sadd.s32 %s248, 1
    %s250 = scalar_select %p247, %s248, %s249
    %p253 = pneg %p247
    %p254 = scmp.eq.s32.totalorder %s21, 3
    %p255 = por %p253, %p254
    %p256 = scmp.ne.s32.totalorder %s248, %s251
    %p257 = scmp.eq.s32.totalorder %s21, 0
    %p258 = por %p256, %p257
    %p259 = scmp.ne.s32.totalorder %s248, %s251
    %p260 = scmp.eq.s32.totalorder %s26, 3
    %p261 = por %p259, %p260
    %p262 = scmp.ne.s32.totalorder %s251, %s252
    %p263 = scmp.eq.s32.totalorder %s26, 0
    %p264 = por %p262, %p263
    %p265 = scmp.ne.s32.totalorder %s251, %s252
    %p266 = scmp.eq.s32.totalorder %s27, 3
    %p267 = por %p265, %p266
    %p269 = scmp.ne.s32.totalorder %s252, %s268
    %p270 = scmp.eq.s32.totalorder %s27, 0
    %p271 = por %p269, %p270
    %s272 = ssub.s32 %s29, %s43
    %p273 = scmp.eq.s32.totalorder %s272, 0
    %s275 = sadd.s32 %s274, 1
    %s276 = scalar_select %p273, %s274, %s275
    %p279 = pneg %p273
    %p280 = scmp.eq.s32.totalorder %s21, 3
    %p281 = por %p279, %p280
    %p282 = scmp.ne.s32.totalorder %s274, %s277
    %p283 = scmp.eq.s32.totalorder %s21, 0
    %p284 = por %p282, %p283
    %p285 = scmp.ne.s32.totalorder %s274, %s277
    %p286 = scmp.eq.s32.totalorder %s26, 3
    %p287 = por %p285, %p286
    %p288 = scmp.ne.s32.totalorder %s277, %s278
    %p289 = scmp.eq.s32.totalorder %s26, 0
    %p290 = por %p288, %p289
    %p291 = scmp.ne.s32.totalorder %s277, %s278
    %p292 = scmp.eq.s32.totalorder %s27, 3
    %p293 = por %p291, %p292
    %p295 = scmp.ne.s32.totalorder %s278, %s294
    %p296 = scmp.eq.s32.totalorder %s27, 0
    %p297 = por %p295, %p296
    %s298 = ssub.s32 %s29, %s43
    %p299 = scmp.eq.s32.totalorder %s298, 0
    %s301 = sadd.s32 %s300, 1
    %s302 = scalar_select %p299, %s300, %s301
    %p305 = pneg %p299
    %p306 = scmp.eq.s32.totalorder %s21, 3
    %p307 = por %p305, %p306
    %p308 = scmp.ne.s32.totalorder %s300, %s303
    %p309 = scmp.eq.s32.totalorder %s21, 0
    %p310 = por %p308, %p309
    %p311 = scmp.ne.s32.totalorder %s300, %s303
    %p312 = scmp.eq.s32.totalorder %s26, 3
    %p313 = por %p311, %p312
    %p314 = scmp.ne.s32.totalorder %s303, %s304
    %p315 = scmp.eq.s32.totalorder %s26, 0
    %p316 = por %p314, %p315
    %p317 = scmp.ne.s32.totalorder %s303, %s304
    %p318 = scmp.eq.s32.totalorder %s27, 3
    %p319 = por %p317, %p318
    %p321 = scmp.ne.s32.totalorder %s304, %s320
    %p322 = scmp.eq.s32.totalorder %s27, 0
    %p323 = por %p321, %p322
    %s324 = ssub.s32 %s29, %s43
    %s325 = ssub.s32 %s30, %s39
    %s326 = sor.u32 %s324, %s325
    %p327 = scmp.eq.s32.totalorder %s326, 0
    %s329 = sadd.s32 %s328, 1
    %s330 = scalar_select %p327, %s328, %s329
    %p333 = pneg %p327
    %p334 = scmp.eq.s32.totalorder %s21, 3
    %p335 = por %p333, %p334
    %p336 = scmp.ne.s32.totalorder %s328, %s331
    %p337 = scmp.eq.s32.totalorder %s21, 0
    %p338 = por %p336, %p337
    %p339 = scmp.ne.s32.totalorder %s328, %s331
    %p340 = scmp.eq.s32.totalorder %s26, 3
    %p341 = por %p339, %p340
    %p342 = scmp.ne.s32.totalorder %s331, %s332
    %p343 = scmp.eq.s32.totalorder %s26, 0
    %p344 = por %p342, %p343
    %p345 = scmp.ne.s32.totalorder %s331, %s332
    %p346 = scmp.eq.s32.totalorder %s27, 3
    %p347 = por %p345, %p346
    %p349 = scmp.ne.s32.totalorder %s332, %s348
    %p350 = scmp.eq.s32.totalorder %s27, 0
    %p351 = por %p349, %p350
    %s352 = ssub.s32 %s29, %s43
    %s353 = ssub.s32 %s30, %s39
    %s354 = sor.u32 %s352, %s353
    %p355 = scmp.eq.s32.totalorder %s354, 0
    %s357 = sadd.s32 %s356, 1
    %s358 = scalar_select %p355, %s356, %s357
    %p361 = pneg %p355
    %p362 = scmp.eq.s32.totalorder %s21, 3
    %p363 = por %p361, %p362
    %p364 = scmp.ne.s32.totalorder %s356, %s359
    %p365 = scmp.eq.s32.totalorder %s21, 0
    %p366 = por %p364, %p365
    %p367 = scmp.ne.s32.totalorder %s356, %s359
    %p368 = scmp.eq.s32.totalorder %s26, 3
    %p369 = por %p367, %p368
    %p370 = scmp.ne.s32.totalorder %s359, %s360
    %p371 = scmp.eq.s32.totalorder %s26, 0
    %p372 = por %p370, %p371
    %p373 = scmp.ne.s32.totalorder %s359, %s360
    %p374 = scmp.eq.s32.totalorder %s27, 3
    %p375 = por %p373, %p374
    %p377 = scmp.ne.s32.totalorder %s360, %s376
    %p378 = scmp.eq.s32.totalorder %s27, 0
    %p379 = por %p377, %p378
    %s380 = ssub.s32 %s29, %s43
    %s381 = ssub.s32 %s30, %s39
    %s382 = sor.u32 %s380, %s381
    %p383 = scmp.eq.s32.totalorder %s382, 0
    %s385 = sadd.s32 %s384, 1
    %s386 = scalar_select %p383, %s384, %s385
    %p389 = pneg %p383
    %p390 = scmp.eq.s32.totalorder %s21, 3
    %p391 = por %p389, %p390
    %p392 = scmp.ne.s32.totalorder %s384, %s387
    %p393 = scmp.eq.s32.totalorder %s21, 0
    %p394 = por %p392, %p393
    %p395 = scmp.ne.s32.totalorder %s384, %s387
    %p396 = scmp.eq.s32.totalorder %s26, 3
    %p397 = por %p395, %p396
    %p398 = scmp.ne.s32.totalorder %s387, %s388
    %p399 = scmp.eq.s32.totalorder %s26, 0
    %p400 = por %p398, %p399
    %p401 = scmp.ne.s32.totalorder %s387, %s388
    %p402 = scmp.eq.s32.totalorder %s27, 3
    %p403 = por %p401, %p402
    %p405 = scmp.ne.s32.totalorder %s388, %s404
    %p406 = scmp.eq.s32.totalorder %s27, 0
    %p407 = por %p405, %p406
    %s408 = ssub.s32 %s29, %s43
    %p409 = scmp.eq.s32.totalorder %s408, 0
    %s411 = sadd.s32 %s410, 1
    %s412 = scalar_select %p409, %s410, %s411
    %p415 = pneg %p409
    %p416 = scmp.eq.s32.totalorder %s21, 3
    %p417 = por %p415, %p416
    %p418 = scmp.ne.s32.totalorder %s410, %s413
    %p419 = scmp.eq.s32.totalorder %s21, 0
    %p420 = por %p418, %p419
    %p421 = scmp.ne.s32.totalorder %s410, %s413
    %p422 = scmp.eq.s32.totalorder %s26, 3
    %p423 = por %p421, %p422
    %p424 = scmp.ne.s32.totalorder %s413, %s414
    %p425 = scmp.eq.s32.totalorder %s26, 0
    %p426 = por %p424, %p425
    %p427 = scmp.ne.s32.totalorder %s413, %s414
    %p428 = scmp.eq.s32.totalorder %s27, 3
    %p429 = por %p427, %p428
    %p431 = scmp.ne.s32.totalorder %s414, %s430
    %p432 = scmp.eq.s32.totalorder %s27, 0
    %p433 = por %p431, %p432
    %s434 = ssub.s32 %s28, %s47
    %p435 = scmp.eq.s32.totalorder %s434, 0
    %s437 = sadd.s32 %s436, 1
    %s438 = scalar_select %p435, %s436, %s437
    %p441 = pneg %p435
    %p442 = scmp.eq.s32.totalorder %s21, 3
    %p443 = por %p441, %p442
    %p444 = scmp.ne.s32.totalorder %s436, %s439
    %p445 = scmp.eq.s32.totalorder %s21, 0
    %p446 = por %p444, %p445
    %p447 = scmp.ne.s32.totalorder %s436, %s439
    %p448 = scmp.eq.s32.totalorder %s26, 3
    %p449 = por %p447, %p448
    %p450 = scmp.ne.s32.totalorder %s439, %s440
    %p451 = scmp.eq.s32.totalorder %s26, 0
    %p452 = por %p450, %p451
    %p453 = scmp.ne.s32.totalorder %s439, %s440
    %p454 = scmp.eq.s32.totalorder %s27, 3
    %p455 = por %p453, %p454
    %p457 = scmp.ne.s32.totalorder %s440, %s456
    %p458 = scmp.eq.s32.totalorder %s27, 0
    %p459 = por %p457, %p458
    %p460 = scmp.le.s32.totalorder 1, %s21
    %p461 = scmp.lt.s32.totalorder %s21, 5
    %p462 = pnand %p460, %p461
    %p463 = pneg %p462
    // Predicated region
    $region9: #{clip_vit_encoder_forward.4} parent=5 // pred_check
      _
    $region10: #{clip_vit_encoder_forward.4} parent=5 // pred_check_branch
      %465 = sbr.rel (%p462) target = $region12
    $region11: #{clip_vit_encoder_forward.4} parent=5 // pred_region
      %s466 = ssub.s32 %s21, 1
      // Predicated region
      $region13: #{clip_vit_encoder_forward.4} parent=11 // pred_check
        %p467 = pneg %p87
      $region14: #{clip_vit_encoder_forward.4} parent=11 // pred_check_branch
        %469 = sbr.rel (%p467) target = $region16
      $region15: #{clip_vit_encoder_forward.4} parent=11 // pred_region
        _
      $region16: #{clip_vit_encoder_forward.4} parent=11 // pred_fallthru
        _
      // Predicated region
      $region17: #{clip_vit_encoder_forward.4} parent=11 // pred_check
        %p470 = pneg %p108
      $region18: #{clip_vit_encoder_forward.4} parent=11 // pred_check_branch
        %472 = sbr.rel (%p470) target = $region20
      $region19: #{clip_vit_encoder_forward.4} parent=11 // pred_region
        _
      $region20: #{clip_vit_encoder_forward.4} parent=11 // pred_fallthru
        _
    $region12: #{clip_vit_encoder_forward.4} parent=5 // pred_fallthru
      _
    %p473 = scmp.lt.s32.totalorder %s21, 4
    // Predicated region
    $region21: #{clip_vit_encoder_forward.4} parent=5 // pred_check
      %p474 = pneg %p473
    $region22: #{clip_vit_encoder_forward.4} parent=5 // pred_check_branch
      %476 = sbr.rel (%p474) target = $region24
    $region23: #{clip_vit_encoder_forward.4} parent=5 // pred_region
      // Predicated region
      $region25: #{clip_vit_encoder_forward.4} parent=23 // pred_check
        %p477 = pneg %p60
      $region26: #{clip_vit_encoder_forward.4} parent=23 // pred_check_branch
        %479 = sbr.rel (%p477) target = $region28
      $region27: #{clip_vit_encoder_forward.4} parent=23 // pred_region
        %p480 = scmp.lt.s32.totalorder %s28, 1
        %s481 = scalar_select %p480, %s28, 1
        %s482 = smul.addr %s481, 3
        %s483 = smul.addr %s482, 8
        %s484 = scalar_lea.vmem %s0, %s483
      $region28: #{clip_vit_encoder_forward.4} parent=23 // pred_fallthru
        _
      // Predicated region
      $region29: #{clip_vit_encoder_forward.4} parent=23 // pred_check
        %p485 = pneg %p128
      $region30: #{clip_vit_encoder_forward.4} parent=23 // pred_check_branch
        %487 = sbr.rel (%p485) target = $region32
      $region31: #{clip_vit_encoder_forward.4} parent=23 // pred_region
        %p488 = scmp.lt.s32.totalorder %s29, 1
        %s489 = scalar_select %p488, %s29, 1
        %s490 = scalar_lea.vmem %s3, %s489
      $region32: #{clip_vit_encoder_forward.4} parent=23 // pred_fallthru
        _
      // Predicated region
      $region33: #{clip_vit_encoder_forward.4} parent=23 // pred_check
        %p491 = pneg %p154
      $region34: #{clip_vit_encoder_forward.4} parent=23 // pred_check_branch
        %493 = sbr.rel (%p491) target = $region36
      $region35: #{clip_vit_encoder_forward.4} parent=23 // pred_region
        %p494 = scmp.lt.s32.totalorder %s29, 1
        %s495 = scalar_select %p494, %s29, 1
        %s496 = scalar_lea.vmem %s4, %s495
      $region36: #{clip_vit_encoder_forward.4} parent=23 // pred_fallthru
        _
      // Predicated region
      $region37: #{clip_vit_encoder_forward.4} parent=23 // pred_check
        %p497 = pneg %p180
      $region38: #{clip_vit_encoder_forward.4} parent=23 // pred_check_branch
        %499 = sbr.rel (%p497) target = $region40
      $region39: #{clip_vit_encoder_forward.4} parent=23 // pred_region
        %p500 = scmp.lt.s32.totalorder %s29, 1
        %s501 = scalar_select %p500, %s29, 1
        %s502 = smul.addr %s501, 4
        %s503 = smul.addr %s502, 4
        %s504 = scalar_lea.vmem %s5, %s503
      $region40: #{clip_vit_encoder_forward.4} parent=23 // pred_fallthru
        _
      // Predicated region
      $region41: #{clip_vit_encoder_forward.4} parent=23 // pred_check
        %p505 = pneg %p206
      $region42: #{clip_vit_encoder_forward.4} parent=23 // pred_check_branch
        %507 = sbr.rel (%p505) target = $region44
      $region43: #{clip_vit_encoder_forward.4} parent=23 // pred_region
        %p508 = scmp.lt.s32.totalorder %s29, 1
        %s509 = scalar_select %p508, %s29, 1
        %s510 = scalar_lea.vmem %s6, %s509
      $region44: #{clip_vit_encoder_forward.4} parent=23 // pred_fallthru
        _
      // Predicated region
      $region45: #{clip_vit_encoder_forward.4} parent=23 // pred_check
        %p511 = pneg %p232
      $region46: #{clip_vit_encoder_forward.4} parent=23 // pred_check_branch
        %513 = sbr.rel (%p511) target = $region48
      $region47: #{clip_vit_encoder_forward.4} parent=23 // pred_region
        %p514 = scmp.lt.s32.totalorder %s29, 1
        %s515 = scalar_select %p514, %s29, 1
        %s516 = smul.addr %s515, 4
        %s517 = smul.addr %s516, 4
        %s518 = scalar_lea.vmem %s7, %s517
      $region48: #{clip_vit_encoder_forward.4} parent=23 // pred_fallthru
        _
      // Predicated region
      $region49: #{clip_vit_encoder_forward.4} parent=23 // pred_check
        %p519 = pneg %p258
      $region50: #{clip_vit_encoder_forward.4} parent=23 // pred_check_branch
        %521 = sbr.rel (%p519) target = $region52
      $region51: #{clip_vit_encoder_forward.4} parent=23 // pred_region
        %p522 = scmp.lt.s32.totalorder %s29, 1
        %s523 = scalar_select %p522, %s29, 1
        %s524 = scalar_lea.vmem %s8, %s523
      $region52: #{clip_vit_encoder_forward.4} parent=23 // pred_fallthru
        _
      // Predicated region
      $region53: #{clip_vit_encoder_forward.4} parent=23 // pred_check
        %p525 = pneg %p284
      $region54: #{clip_vit_encoder_forward.4} parent=23 // pred_check_branch
        %527 = sbr.rel (%p525) target = $region56
      $region55: #{clip_vit_encoder_forward.4} parent=23 // pred_region
        %p528 = scmp.lt.s32.totalorder %s29, 1
        %s529 = scalar_select %p528, %s29, 1
        %s530 = scalar_lea.vmem %s9, %s529
      $region56: #{clip_vit_encoder_forward.4} parent=23 // pred_fallthru
        _
      // Predicated region
      $region57: #{clip_vit_encoder_forward.4} parent=23 // pred_check
        %p531 = pneg %p310
      $region58: #{clip_vit_encoder_forward.4} parent=23 // pred_check_branch
        %533 = sbr.rel (%p531) target = $region60
      $region59: #{clip_vit_encoder_forward.4} parent=23 // pred_region
        %p534 = scmp.lt.s32.totalorder %s29, 1
        %s535 = scalar_select %p534, %s29, 1
        %s536 = scalar_lea.vmem %s10, %s535
      $region60: #{clip_vit_encoder_forward.4} parent=23 // pred_fallthru
        _
      // Predicated region
      $region61: #{clip_vit_encoder_forward.4} parent=23 // pred_check
        %p537 = pneg %p338
      $region62: #{clip_vit_encoder_forward.4} parent=23 // pred_check_branch
        %539 = sbr.rel (%p537) target = $region64
      $region63: #{clip_vit_encoder_forward.4} parent=23 // pred_region
        %p540 = scmp.lt.s32.totalorder %s29, 1
        %s541 = scalar_select %p540, %s29, 1
        %p542 = scmp.lt.s32.totalorder %s30, 0
        %s543 = scalar_select %p542, %s30, 0
        %s544 = smul.addr %s541, 4
        %s545 = sadd.s32 %s543, %s544
        %s546 = smul.addr %s545, 4
        %s547 = scalar_lea.vmem %s11, %s546
      $region64: #{clip_vit_encoder_forward.4} parent=23 // pred_fallthru
        _
      // Predicated region
      $region65: #{clip_vit_encoder_forward.4} parent=23 // pred_check
        %p548 = pneg %p366
      $region66: #{clip_vit_encoder_forward.4} parent=23 // pred_check_branch
        %550 = sbr.rel (%p548) target = $region68
      $region67: #{clip_vit_encoder_forward.4} parent=23 // pred_region
        %p551 = scmp.lt.s32.totalorder %s29, 1
        %s552 = scalar_select %p551, %s29, 1
        %p553 = scmp.lt.s32.totalorder %s30, 0
        %s554 = scalar_select %p553, %s30, 0
        %s555 = sadd.s32 %s554, %s552
        %s556 = scalar_lea.vmem %s12, %s555
      $region68: #{clip_vit_encoder_forward.4} parent=23 // pred_fallthru
        _
      // Predicated region
      $region69: #{clip_vit_encoder_forward.4} parent=23 // pred_check
        %p557 = pneg %p394
      $region70: #{clip_vit_encoder_forward.4} parent=23 // pred_check_branch
        %559 = sbr.rel (%p557) target = $region72
      $region71: #{clip_vit_encoder_forward.4} parent=23 // pred_region
        %s560 = smul.u32 16, %s30
        %p561 = scmp.lt.s32.totalorder %s29, 1
        %s562 = scalar_select %p561, %s29, 1
        %p563 = scmp.lt.s32.totalorder %s560, 15
        %s564 = scalar_select %p563, %s560, 15
        %s565 = smul.addr %s562, 16
        %s566 = sadd.s32 %s564, %s565
        %s567 = smul.addr %s566, 4
        %s568 = scalar_lea.vmem %s13, %s567
        %s569 = smul.u32 16, %s30
      $region72: #{clip_vit_encoder_forward.4} parent=23 // pred_fallthru
        _
      // Predicated region
      $region73: #{clip_vit_encoder_forward.4} parent=23 // pred_check
        %p570 = pneg %p420
      $region74: #{clip_vit_encoder_forward.4} parent=23 // pred_check_branch
        %572 = sbr.rel (%p570) target = $region76
      $region75: #{clip_vit_encoder_forward.4} parent=23 // pred_region
        %p573 = scmp.lt.s32.totalorder %s29, 1
        %s574 = scalar_select %p573, %s29, 1
        %s575 = scalar_lea.vmem %s14, %s574
      $region76: #{clip_vit_encoder_forward.4} parent=23 // pred_fallthru
        _
    $region24: #{clip_vit_encoder_forward.4} parent=5 // pred_fallthru
      _
    %p576 = scmp.le.s32.totalorder 1, %s21
    %p577 = scmp.lt.s32.totalorder %s21, 5
    %p578 = pnand %p576, %p577
    %p579 = pneg %p578
    // Predicated region
    $region77: #{clip_vit_encoder_forward.4} parent=5 // pred_check
      _
    $region78: #{clip_vit_encoder_forward.4} parent=5 // pred_check_branch
      %581 = sbr.rel (%p578) target = $region80
    $region79: #{clip_vit_encoder_forward.4} parent=5 // pred_region
      %s582 = ssub.s32 %s21, 1
      %p583 = scmp.lt.s32.totalorder %s31, 1
      %s584 = scalar_select %p583, %s31, 1
      %s585 = smul.addr %s584, 3
      %s586 = smul.addr %s585, 8
      %s587 = scalar_lea.vmem %s0, %s586
      %p588 = pneg %p66
      %p589 = pneg %p63
      %p590 = pneg %p87
      %p591 = pneg %p84
      %p592 = pneg %p108
      %p593 = pneg %p105
      %p594 = scmp.lt.s32.totalorder %s32, 1
      %s595 = scalar_select %p594, %s32, 1
      %s596 = scalar_lea.vmem %s3, %s595
      %p597 = pneg %p134
      %p598 = pneg %p131
      %p599 = scmp.lt.s32.totalorder %s32, 1
      %s600 = scalar_select %p599, %s32, 1
      %s601 = scalar_lea.vmem %s4, %s600
      %p602 = pneg %p160
      %p603 = pneg %p157
      %p604 = scmp.lt.s32.totalorder %s32, 1
      %s605 = scalar_select %p604, %s32, 1
      %s606 = smul.addr %s605, 4
      %s607 = smul.addr %s606, 4
      %s608 = scalar_lea.vmem %s5, %s607
      %p609 = pneg %p186
      %p610 = pneg %p183
      %p611 = scmp.lt.s32.totalorder %s32, 1
      %s612 = scalar_select %p611, %s32, 1
      %s613 = scalar_lea.vmem %s6, %s612
      %p614 = pneg %p212
      %p615 = pneg %p209
      %p616 = scmp.lt.s32.totalorder %s32, 1
      %s617 = scalar_select %p616, %s32, 1
      %s618 = smul.addr %s617, 4
      %s619 = smul.addr %s618, 4
      %s620 = scalar_lea.vmem %s7, %s619
      %p621 = pneg %p238
      %p622 = pneg %p235
      %p623 = scmp.lt.s32.totalorder %s32, 1
      %s624 = scalar_select %p623, %s32, 1
      %s625 = scalar_lea.vmem %s8, %s624
      %p626 = pneg %p264
      %p627 = pneg %p261
      %p628 = scmp.lt.s32.totalorder %s32, 1
      %s629 = scalar_select %p628, %s32, 1
      %s630 = scalar_lea.vmem %s9, %s629
      %p631 = pneg %p290
      %p632 = pneg %p287
      %p633 = scmp.lt.s32.totalorder %s32, 1
      %s634 = scalar_select %p633, %s32, 1
      %s635 = scalar_lea.vmem %s10, %s634
      %p636 = pneg %p316
      %p637 = pneg %p313
      %p638 = scmp.lt.s32.totalorder %s32, 1
      %s639 = scalar_select %p638, %s32, 1
      %p640 = scmp.lt.s32.totalorder %s33, 0
      %s641 = scalar_select %p640, %s33, 0
      %s642 = smul.addr %s639, 4
      %s643 = sadd.s32 %s641, %s642
      %s644 = smul.addr %s643, 4
      %s645 = scalar_lea.vmem %s11, %s644
      %p646 = pneg %p344
      %p647 = pneg %p341
      %p648 = scmp.lt.s32.totalorder %s32, 1
      %s649 = scalar_select %p648, %s32, 1
      %p650 = scmp.lt.s32.totalorder %s33, 0
      %s651 = scalar_select %p650, %s33, 0
      %s652 = sadd.s32 %s651, %s649
      %s653 = scalar_lea.vmem %s12, %s652
      %p654 = pneg %p372
      %p655 = pneg %p369
      %s656 = smul.u32 16, %s33
      %p657 = scmp.lt.s32.totalorder %s32, 1
      %s658 = scalar_select %p657, %s32, 1
      %p659 = scmp.lt.s32.totalorder %s656, 15
      %s660 = scalar_select %p659, %s656, 15
      %s661 = smul.addr %s658, 16
      %s662 = sadd.s32 %s660, %s661
      %s663 = smul.addr %s662, 4
      %s664 = scalar_lea.vmem %s13, %s663
      %p665 = pneg %p400
      %p666 = pneg %p397
      %p667 = scmp.lt.s32.totalorder %s32, 1
      %s668 = scalar_select %p667, %s32, 1
      %s669 = scalar_lea.vmem %s14, %s668
      %p670 = pneg %p426
      %p671 = pneg %p423
      %p672 = pneg %p452
      %p673 = pneg %p449
      %p674 = scmp.lt.s32.totalorder %s31, 1
      %s675 = scalar_select %p674, %s31, 1
      %s676 = smul.addr %s675, 3
      %s677 = smul.addr %s676, 8
      %s678 = scalar_lea.vmem %s15, %s677
      %p679 = scmp.lt.s32.totalorder %s31, 1
      %s680 = scalar_select %p679, %s31, 1
      %s681 = smul.addr %s680, 3
      %s682 = smul.addr %s681, 8
      %s683 = scalar_lea.vmem %s0, %s682
      %p684 = scmp.lt.s32.totalorder %s32, 1
      %s685 = scalar_select %p684, %s32, 1
      %s686 = scalar_lea.vmem %s3, %s685
      %p687 = scmp.lt.s32.totalorder %s32, 1
      %s688 = scalar_select %p687, %s32, 1
      %s689 = scalar_lea.vmem %s4, %s688
      %p690 = scmp.lt.s32.totalorder %s32, 1
      %s691 = scalar_select %p690, %s32, 1
      %s692 = smul.addr %s691, 4
      %s693 = smul.addr %s692, 4
      %s694 = scalar_lea.vmem %s5, %s693
      %p695 = scmp.lt.s32.totalorder %s32, 1
      %s696 = scalar_select %p695, %s32, 1
      %s697 = scalar_lea.vmem %s6, %s696
      %p698 = scmp.lt.s32.totalorder %s32, 1
      %s699 = scalar_select %p698, %s32, 1
      %s700 = smul.addr %s699, 4
      %s701 = smul.addr %s700, 4
      %s702 = scalar_lea.vmem %s7, %s701
      %p703 = scmp.lt.s32.totalorder %s32, 1
      %s704 = scalar_select %p703, %s32, 1
      %s705 = scalar_lea.vmem %s8, %s704
      %p706 = scmp.lt.s32.totalorder %s32, 1
      %s707 = scalar_select %p706, %s32, 1
      %s708 = scalar_lea.vmem %s9, %s707
      %p709 = scmp.lt.s32.totalorder %s32, 1
      %s710 = scalar_select %p709, %s32, 1
      %s711 = scalar_lea.vmem %s10, %s710
      %p712 = scmp.lt.s32.totalorder %s32, 1
      %s713 = scalar_select %p712, %s32, 1
      %p714 = scmp.lt.s32.totalorder %s33, 0
      %s715 = scalar_select %p714, %s33, 0
      %s716 = smul.addr %s713, 4
      %s717 = sadd.s32 %s715, %s716
      %s718 = smul.addr %s717, 4
      %s719 = scalar_lea.vmem %s11, %s718
      %p720 = scmp.lt.s32.totalorder %s32, 1
      %s721 = scalar_select %p720, %s32, 1
      %p722 = scmp.lt.s32.totalorder %s33, 0
      %s723 = scalar_select %p722, %s33, 0
      %s724 = sadd.s32 %s723, %s721
      %s725 = scalar_lea.vmem %s12, %s724
      %s726 = smul.u32 16, %s33
      %p727 = scmp.lt.s32.totalorder %s32, 1
      %s728 = scalar_select %p727, %s32, 1
      %p729 = scmp.lt.s32.totalorder %s726, 15
      %s730 = scalar_select %p729, %s726, 15
      %s731 = smul.addr %s728, 16
      %s732 = sadd.s32 %s730, %s731
      %s733 = smul.addr %s732, 4
      %s734 = scalar_lea.vmem %s13, %s733
      %s735 = smul.u32 16, %s33
      %p736 = scmp.lt.s32.totalorder %s32, 1
      %s737 = scalar_select %p736, %s32, 1
      %s738 = scalar_lea.vmem %s14, %s737
      %p739 = scmp.lt.s32.totalorder %s31, 1
      %s740 = scalar_select %p739, %s31, 1
      %s741 = smul.addr %s740, 3
      %s742 = smul.addr %s741, 8
      %s743 = scalar_lea.vmem %s15, %s742
      %p745 = scmp.eq.s32.totalorder %s32, 0
      %p746 = scmp.eq.s32.totalorder %s33, 0
      %p747 = pnand %p745, %p746
      %p748 = pneg %p747
      // Predicated region
      $region81: #{clip_vit_encoder_forward.4} parent=79 // pred_check
        _
      $region82: #{clip_vit_encoder_forward.4} parent=79 // pred_check_branch
        %750 = sbr.rel (%p747) target = $region84
      $region83: #{clip_vit_encoder_forward.4} parent=79 // pred_region
        %v751 = vld [vmem:[%s683] sm:$0xff]
        %v752 = vld [vmem:[%s683 + $0x8] sm:$0xff]
        %v753 = vld [vmem:[%s683 + $0x10] sm:$0x1]
        %v754 = vld [vmem:[%s1] sm:$0x1]
        %v755 = vld [vmem:[%s2] sm:$0x1]
        %vm756 = vcmask 261120
        %v757 = vsel %vm756, %v751, 0.0
        %758 = vadd.xlane.f32.xlu0 %v757
        %v759 = vpop.xlane.xlu0 %758
        %v760 = vsel %vm756, %v752, 0.0
        %761 = vadd.xlane.f32.xlu0 %v760
        %v762 = vpop.xlane.xlu0 %761
        %vm763 = vcmask 253952
        %v764 = vsel %vm763, %v753, 0.0
        %765 = vadd.xlane.f32.xlu0 %v764
        %v766 = vpop.xlane.xlu0 %765
        %v767 = vrcp.pop 32.0
        %v768 = vmul.f32 %v759, %v767
        %v769 = vmul.f32 %v762, %v767
        %v770 = vmul.f32 %v766, %v767
        %v771 = vsub.f32 %v751, %v768
        %v772 = vsub.f32 %v752, %v769
        %v773 = vsub.f32 %v753, %v770
        %v774 = vmul.f32 %v771, %v771
        %v775 = vmul.f32 %v772, %v772
        %v776 = vmul.f32 %v773, %v773
        %v777 = vsel %vm756, %v774, 0.0
        %778 = vadd.xlane.f32.xlu0 %v777
        %v779 = vpop.xlane.xlu0 %778
        %v780 = vsel %vm756, %v775, 0.0
        %781 = vadd.xlane.f32.xlu0 %v780
        %v782 = vpop.xlane.xlu0 %781
        %v783 = vsel %vm763, %v776, 0.0
        %784 = vadd.xlane.f32.xlu0 %v783
        %v785 = vpop.xlane.xlu0 %784
        %v786 = vmul.f32 %v779, %v767
        %v787 = vmul.f32 %v782, %v767
        %v788 = vmul.f32 %v785, %v767
        %v789 = vadd.f32 %v786, 1e-05
        %v790 = vadd.f32 %v787, 1e-05
        %v791 = vadd.f32 %v788, 1e-05
        %v792 = vrsqrt.pop %v789
        %v793 = vrsqrt.pop %v790
        %v794 = vrsqrt.pop %v791
        %v795 = vmul.f32 %v771, %v792
        %v796 = vmul.f32 %v772, %v793
        %v797 = vmul.f32 %v773, %v794
        %v799 = vlaneseq
        %v800 = vshrl.u32 %v799, 7
        %v801 = vsub.s32 0, %v800
        %v802 = vrot.slane %v754, %v801
        %v804 = vmul.f32 %v795, %v802
        %v805 = vmul.f32 %v796, %v802
        %v806 = vmul.f32 %v797, %v802
        %v808 = vlaneseq
        %v809 = vshrl.u32 %v808, 7
        %v810 = vsub.s32 0, %v809
        %v811 = vrot.slane %v755, %v810
        %v813 = vadd.f32 %v804, %v811
        %v814 = vadd.f32 %v805, %v811
        %v815 = vadd.f32 %v806, %v811
        %816 = vst.msk [vmem:[#allocation2] sm:$0xff] %vm756, %v813
        %817 = vst.msk [vmem:[#allocation2 + $0x8] sm:$0xff] %vm756, %v814
        %818 = vst.msk [vmem:[#allocation2 + $0x10] sm:$0x1] %vm763, %v815
      $region84: #{clip_vit_encoder_forward.4} parent=79 // pred_fallthru
        _
      // Predicated region
      $region85: #{clip_vit_encoder_forward.4} parent=79 // pred_check
        %p819 = pneg %p746
      $region86: #{clip_vit_encoder_forward.4} parent=79 // pred_check_branch
        %821 = sbr.rel (%p819) target = $region88
      $region87: #{clip_vit_encoder_forward.4} parent=79 // pred_region
        %v822 = vld [vmem:[#allocation2] sm:$0xff]
        %v823 = vld [vmem:[#allocation2 + $0x8] sm:$0xff]
        %v824 = vld [vmem:[#allocation2 + $0x10] sm:$0x1]
        %v825 = vld [vmem:[%s686] sm:$0x1]
        %v826 = vld [vmem:[%s689] sm:$0x1]
        %vm827 = vcmask 261120
        %v828 = vsel %vm827, %v822, 0.0
        %829 = vadd.xlane.f32.xlu0 %v828
        %v830 = vpop.xlane.xlu0 %829
        %v831 = vsel %vm827, %v823, 0.0
        %832 = vadd.xlane.f32.xlu0 %v831
        %v833 = vpop.xlane.xlu0 %832
        %vm834 = vcmask 253952
        %v835 = vsel %vm834, %v824, 0.0
        %836 = vadd.xlane.f32.xlu0 %v835
        %v837 = vpop.xlane.xlu0 %836
        %v838 = vrcp.pop 32.0
        %v839 = vmul.f32 %v830, %v838
        %v840 = vmul.f32 %v833, %v838
        %v841 = vmul.f32 %v837, %v838
        %v842 = vsub.f32 %v822, %v839
        %v843 = vsub.f32 %v823, %v840
        %v844 = vsub.f32 %v824, %v841
        %v845 = vmul.f32 %v842, %v842
        %v846 = vmul.f32 %v843, %v843
        %v847 = vmul.f32 %v844, %v844
        %v848 = vsel %vm827, %v845, 0.0
        %849 = vadd.xlane.f32.xlu0 %v848
        %v850 = vpop.xlane.xlu0 %849
        %v851 = vsel %vm827, %v846, 0.0
        %852 = vadd.xlane.f32.xlu0 %v851
        %v853 = vpop.xlane.xlu0 %852
        %v854 = vsel %vm834, %v847, 0.0
        %855 = vadd.xlane.f32.xlu0 %v854
        %v856 = vpop.xlane.xlu0 %855
        %v857 = vmul.f32 %v850, %v838
        %v858 = vmul.f32 %v853, %v838
        %v859 = vmul.f32 %v856, %v838
        %v860 = vadd.f32 %v857, 1e-05
        %v861 = vadd.f32 %v858, 1e-05
        %v862 = vadd.f32 %v859, 1e-05
        %v863 = vrsqrt.pop %v860
        %v864 = vrsqrt.pop %v861
        %v865 = vrsqrt.pop %v862
        %v866 = vmul.f32 %v842, %v863
        %v867 = vmul.f32 %v843, %v864
        %v868 = vmul.f32 %v844, %v865
        %v870 = vlaneseq
        %v871 = vshrl.u32 %v870, 7
        %v872 = vsub.s32 0, %v871
        %v873 = vrot.slane %v825, %v872
        %v875 = vmul.f32 %v866, %v873
        %v876 = vmul.f32 %v867, %v873
        %v877 = vmul.f32 %v868, %v873
        %v879 = vlaneseq
        %v880 = vshrl.u32 %v879, 7
        %v881 = vsub.s32 0, %v880
        %v882 = vrot.slane %v826, %v881
        %v884 = vadd.f32 %v875, %v882
        %v885 = vadd.f32 %v876, %v882
        %v886 = vadd.f32 %v877, %v882
        %v887 = vpack.c.bf16 %v885, %v884
        %v888 = vpack.c.bf16 %v886, %v886
        %v889 = vld [vmem:[%s694] sm:$0xf]
        %v890 = vld [vmem:[%s694 + $0x4] sm:$0xf]
        %v891 = vld [vmem:[%s694 + $0x8] sm:$0xf]
        %v892 = vld [vmem:[%s694 + $0xc] sm:$0xf]
        %v893 = vld [vmem:[%s697] sm:$0x1]
        %v895 = vlaneseq
        %v896 = vshrl.u32 %v895, 7
        %v897 = vsub.s32 0, %v896
        %v898 = vrot.slane %v893, %v897
        %v904 = vunpack.c.l.b16 %v889
        %v905 = vunpack.c.l.b16 %v890
        %v906 = vunpack.c.l.b16 %v891
        %v907 = vunpack.c.l.b16 %v892
        %v908 = vpack.c.b16 %v905, %v904
        %v909 = vpack.c.b16 %v907, %v906
        %v913 = vsel %vm827, %v887, 0
        %v916 = vsel %vm827, %v888, 0
        %918 = vmatprep.subr.bf16.mxu0 0
        %919 = vmatpush1.bf16.msra.mxu0 %v908
        %920 = vmatprep.subr.bf16.mxu0 0
        %921 = vmatpush1.bf16.msra.mxu0 %v909
        %922 = vmatprep.subr.bf16.mxu0 0
        %923 = vmatpush1.bf16.msra.mxu0 0
        %924 = vmatprep.subr.bf16.mxu0 0
        %925 = vmatpush1.bf16.msra.mxu0 0
        %926 = vmatprep.subr.bf16.mxu0 0
        %927 = vmatpush1.bf16.msra.mxu0 0
        %928 = vmatprep.subr.bf16.mxu0 0
        %929 = vmatpush1.bf16.msra.mxu0 0
        %930 = vmatprep.subr.bf16.mxu0 0
        %931 = vmatpush1.bf16.msra.mxu0 0
        %932 = vmatprep.subr.bf16.mxu0 0
        %933 = vmatpush1.bf16.msra.mxu0 0
        %934 = vmatprep.subr.bf16.mxu0 0
        %935 = vmatpush1.bf16.msra.mxu0 0
        %936 = vmatprep.subr.bf16.mxu0 0
        %937 = vmatpush1.bf16.msra.mxu0 0
        %938 = vmatprep.subr.bf16.mxu0 0
        %939 = vmatpush1.bf16.msra.mxu0 0
        %940 = vmatprep.subr.bf16.mxu0 0
        %941 = vmatpush1.bf16.msra.mxu0 0
        %942 = vmatprep.subr.bf16.mxu0 0
        %943 = vmatpush1.bf16.msra.mxu0 0
        %944 = vmatprep.subr.bf16.mxu0 0
        %945 = vmatpush1.bf16.msra.mxu0 0
        %946 = vmatprep.subr.bf16.mxu0 0
        %947 = vmatpush1.bf16.msra.mxu0 0
        %948 = vmatprep.subr.bf16.mxu0 0
        %949 = vmatpush1.bf16.msra.mxu0 0
        %950 = vmatprep.mubr.bf16.mxu0 0
        %951 = vmatmul.mubr.bf16.gmra.mrb[0].mxu0 %v913
        %v952 = vpop.f32.mrb[0].mxu0
        %v953 = vadd.f32 %v898, %v952
        %v954 = vpop.f32.mrb[0].mxu0
        %v955 = vpop.f32.mrb[0].mxu0
        %v956 = vadd.f32 %v898, %v955
        %v957 = vpop.f32.mrb[0].mxu0
        %958 = vmatprep.mubr.bf16.mxu0 0
        %959 = vmatmul.mubr.bf16.gmra.mrb[0].mxu0 %v916
        %v960 = vpop.f32.mrb[0].mxu0
        %v961 = vadd.f32 %v898, %v960
        %v962 = vpop.f32.mrb[0].mxu0
        %v963 = vpop.f32.mrb[0].mxu0
        %v964 = vpop.f32.mrb[0].mxu0
        %965 = vdwg.mxu0
        %969 = vrot.lane.b32.xlu0 %v953, 120
        %v970 = vpop.permute.xlu0 %969
        %971 = vrot.lane.b32.xlu0 %v956, 120
        %v972 = vpop.permute.xlu0 %971
        %973 = vrot.lane.b32.xlu0 %v961, 120
        %v974 = vpop.permute.xlu0 %973
        %978 = vrot.lane.b32.xlu0 %v953, 112
        %v979 = vpop.permute.xlu0 %978
        %980 = vrot.lane.b32.xlu0 %v956, 112
        %v981 = vpop.permute.xlu0 %980
        %982 = vrot.lane.b32.xlu0 %v961, 112
        %v983 = vpop.permute.xlu0 %982
        %987 = vrot.lane.b32.xlu0 %v953, 104
        %v988 = vpop.permute.xlu0 %987
        %989 = vrot.lane.b32.xlu0 %v956, 104
        %v990 = vpop.permute.xlu0 %989
        %991 = vrot.lane.b32.xlu0 %v961, 104
        %v992 = vpop.permute.xlu0 %991
        %v996 = vpack.c.bf16 %v956, %v953
        %v997 = vpack.c.bf16 %v961, %v961
        %v998 = vpack.c.bf16 %v972, %v970
        %v999 = vpack.c.bf16 %v974, %v974
        %v1000 = vpack.c.bf16 %v981, %v979
        %v1001 = vpack.c.bf16 %v983, %v983
        %v1002 = vpack.c.bf16 %v990, %v988
        %v1003 = vpack.c.bf16 %v992, %v992
        %1006 = vrot.lane.b32.xlu0 %v996, 96
        %v1007 = vpop.permute.xlu0 %1006
        %1008 = vrot.lane.b32.xlu0 %v997, 96
        %v1009 = vpop.permute.xlu0 %1008
        %vm1010 = vcmask 64512
        %v1012 = vsel %vm1010, %v996, 0
        %v1015 = vsel %vm1010, %v997, 0
        %v1018 = vsel %vm1010, %v1007, 0
        %v1021 = vsel %vm1010, %v1009, 0
        %1023 = vmatprep.subr.bf16.mxu0 0
        %1024 = vmatpush1.bf16.xpose.msra.mxu0 %v1018
        %1025 = vmatprep.subr.bf16.mxu0 0
        %1026 = vmatpush1.bf16.xpose.msra.mxu0 %v1021
        %1027 = vmatprep.subr.bf16.mxu0 0
        %1028 = vmatpush1.bf16.xpose.msra.mxu0 0
        %1029 = vmatprep.subr.bf16.mxu0 0
        %1030 = vmatpush1.bf16.xpose.msra.mxu0 0
        %1031 = vmatprep.subr.bf16.mxu0 0
        %1032 = vmatpush1.bf16.xpose.msra.mxu0 0
        %1033 = vmatprep.subr.bf16.mxu0 0
        %1034 = vmatpush1.bf16.xpose.msra.mxu0 0
        %1035 = vmatprep.subr.bf16.mxu0 0
        %1036 = vmatpush1.bf16.xpose.msra.mxu0 0
        %1037 = vmatprep.subr.bf16.mxu0 0
        %1038 = vmatpush1.bf16.xpose.msra.mxu0 0
        %1039 = vmatprep.subr.bf16.mxu0 0
        %1040 = vmatpush1.bf16.xpose.msra.mxu0 0
        %1041 = vmatprep.subr.bf16.mxu0 0
        %1042 = vmatpush1.bf16.xpose.msra.mxu0 0
        %1043 = vmatprep.subr.bf16.mxu0 0
        %1044 = vmatpush1.bf16.xpose.msra.mxu0 0
        %1045 = vmatprep.subr.bf16.mxu0 0
        %1046 = vmatpush1.bf16.xpose.msra.mxu0 0
        %1047 = vmatprep.subr.bf16.mxu0 0
        %1048 = vmatpush1.bf16.xpose.msra.mxu0 0
        %1049 = vmatprep.subr.bf16.mxu0 0
        %1050 = vmatpush1.bf16.xpose.msra.mxu0 0
        %1051 = vmatprep.subr.bf16.mxu0 0
        %1052 = vmatpush1.bf16.xpose.msra.mxu0 0
        %1053 = vmatprep.subr.bf16.mxu0 0
        %1054 = vmatpush1.bf16.xpose.msra.mxu0 0
        %1055 = vmatprep.mubr.bf16.mxu0 0
        %1056 = vmatmul.mubr.bf16.gmra.mrb[0].mxu0 %v1012
        %v1057 = vpop.f32.mrb[0].mxu0
        %v1058 = vadd.f32 0.0, %v1057
        %v1059 = vpop.f32.mrb[0].mxu0
        %v1060 = vpop.f32.mrb[0].mxu0
        %v1061 = vadd.f32 0.0, %v1060
        %v1062 = vpop.f32.mrb[0].mxu0
        %1063 = vmatprep.mubr.bf16.mxu0 0
        %1064 = vmatmul.mubr.bf16.gmra.mrb[0].mxu0 %v1015
        %v1065 = vpop.f32.mrb[0].mxu0
        %v1066 = vadd.f32 0.0, %v1065
        %v1067 = vpop.f32.mrb[0].mxu0
        %v1068 = vpop.f32.mrb[0].mxu0
        %v1069 = vpop.f32.mrb[0].mxu0
        %1070 = vdwg.mxu0
        %1073 = vrot.lane.b32.xlu0 %v998, 96
        %v1074 = vpop.permute.xlu0 %1073
        %1075 = vrot.lane.b32.xlu0 %v999, 96
        %v1076 = vpop.permute.xlu0 %1075
        %v1078 = vsel %vm1010, %v998, 0
        %v1081 = vsel %vm1010, %v999, 0
        %v1084 = vsel %vm1010, %v1074, 0
        %v1087 = vsel %vm1010, %v1076, 0
        %1089 = vmatprep.subr.bf16.mxu0 0
        %1090 = vmatpush1.bf16.xpose.msra.mxu0 %v1084
        %1091 = vmatprep.subr.bf16.mxu0 0
        %1092 = vmatpush1.bf16.xpose.msra.mxu0 %v1087
        %1093 = vmatprep.subr.bf16.mxu0 0
        %1094 = vmatpush1.bf16.xpose.msra.mxu0 0
        %1095 = vmatprep.subr.bf16.mxu0 0
        %1096 = vmatpush1.bf16.xpose.msra.mxu0 0
        %1097 = vmatprep.subr.bf16.mxu0 0
        %1098 = vmatpush1.bf16.xpose.msra.mxu0 0
        %1099 = vmatprep.subr.bf16.mxu0 0
        %1100 = vmatpush1.bf16.xpose.msra.mxu0 0
        %1101 = vmatprep.subr.bf16.mxu0 0
        %1102 = vmatpush1.bf16.xpose.msra.mxu0 0
        %1103 = vmatprep.subr.bf16.mxu0 0
        %1104 = vmatpush1.bf16.xpose.msra.mxu0 0
        %1105 = vmatprep.subr.bf16.mxu0 0
        %1106 = vmatpush1.bf16.xpose.msra.mxu0 0
        %1107 = vmatprep.subr.bf16.mxu0 0
        %1108 = vmatpush1.bf16.xpose.msra.mxu0 0
        %1109 = vmatprep.subr.bf16.mxu0 0
        %1110 = vmatpush1.bf16.xpose.msra.mxu0 0
        %1111 = vmatprep.subr.bf16.mxu0 0
        %1112 = vmatpush1.bf16.xpose.msra.mxu0 0
        %1113 = vmatprep.subr.bf16.mxu0 0
        %1114 = vmatpush1.bf16.xpose.msra.mxu0 0
        %1115 = vmatprep.subr.bf16.mxu0 0
        %1116 = vmatpush1.bf16.xpose.msra.mxu0 0
        %1117 = vmatprep.subr.bf16.mxu0 0
        %1118 = vmatpush1.bf16.xpose.msra.mxu0 0
        %1119 = vmatprep.subr.bf16.mxu0 0
        %1120 = vmatpush1.bf16.xpose.msra.mxu0 0
        %1121 = vmatprep.mubr.bf16.mxu0 0
        %1122 = vmatmul.mubr.bf16.gmra.mrb[0].mxu0 %v1078
        %v1123 = vpop.f32.mrb[0].mxu0
        %v1124 = vadd.f32 0.0, %v1123
        %v1125 = vpop.f32.mrb[0].mxu0
        %v1126 = vpop.f32.mrb[0].mxu0
        %v1127 = vadd.f32 0.0, %v1126
        %v1128 = vpop.f32.mrb[0].mxu0
        %1129 = vmatprep.mubr.bf16.mxu0 0
        %1130 = vmatmul.mubr.bf16.gmra.mrb[0].mxu0 %v1081
        %v1131 = vpop.f32.mrb[0].mxu0
        %v1132 = vadd.f32 0.0, %v1131
        %v1133 = vpop.f32.mrb[0].mxu0
        %v1134 = vpop.f32.mrb[0].mxu0
        %v1135 = vpop.f32.mrb[0].mxu0
        %1136 = vdwg.mxu0
        %1139 = vrot.lane.b32.xlu0 %v1000, 96
        %v1140 = vpop.permute.xlu0 %1139
        %1141 = vrot.lane.b32.xlu0 %v1001, 96
        %v1142 = vpop.permute.xlu0 %1141
        %v1144 = vsel %vm1010, %v1000, 0
        %v1147 = vsel %vm1010, %v1001, 0
        %v1150 = vsel %vm1010, %v1140, 0
        %v1153 = vsel %vm1010, %v1142, 0
        %1155 = vmatprep.subr.bf16.mxu0 0
        %1156 = vmatpush1.bf16.xpose.msra.mxu0 %v1150
        %1157 = vmatprep.subr.bf16.mxu0 0
        %1158 = vmatpush1.bf16.xpose.msra.mxu0 %v1153
        %1159 = vmatprep.subr.bf16.mxu0 0
        %1160 = vmatpush1.bf16.xpose.msra.mxu0 0
        %1161 = vmatprep.subr.bf16.mxu0 0
        %1162 = vmatpush1.bf16.xpose.msra.mxu0 0
        %1163 = vmatprep.subr.bf16.mxu0 0
        %1164 = vmatpush1.bf16.xpose.msra.mxu0 0
        %1165 = vmatprep.subr.bf16.mxu0 0
        %1166 = vmatpush1.bf16.xpose.msra.mxu0 0
        %1167 = vmatprep.subr.bf16.mxu0 0
        %1168 = vmatpush1.bf16.xpose.msra.mxu0 0
        %1169 = vmatprep.subr.bf16.mxu0 0
        %1170 = vmatpush1.bf16.xpose.msra.mxu0 0
        %1171 = vmatprep.subr.bf16.mxu0 0
        %1172 = vmatpush1.bf16.xpose.msra.mxu0 0
        %1173 = vmatprep.subr.bf16.mxu0 0
        %1174 = vmatpush1.bf16.xpose.msra.mxu0 0
        %1175 = vmatprep.subr.bf16.mxu0 0
        %1176 = vmatpush1.bf16.xpose.msra.mxu0 0
        %1177 = vmatprep.subr.bf16.mxu0 0
        %1178 = vmatpush1.bf16.xpose.msra.mxu0 0
        %1179 = vmatprep.subr.bf16.mxu0 0
        %1180 = vmatpush1.bf16.xpose.msra.mxu0 0
        %1181 = vmatprep.subr.bf16.mxu0 0
        %1182 = vmatpush1.bf16.xpose.msra.mxu0 0
        %1183 = vmatprep.subr.bf16.mxu0 0
        %1184 = vmatpush1.bf16.xpose.msra.mxu0 0
        %1185 = vmatprep.subr.bf16.mxu0 0
        %1186 = vmatpush1.bf16.xpose.msra.mxu0 0
        %1187 = vmatprep.mubr.bf16.mxu0 0
        %1188 = vmatmul.mubr.bf16.gmra.mrb[0].mxu0 %v1144
        %v1189 = vpop.f32.mrb[0].mxu0
        %v1190 = vadd.f32 0.0, %v1189
        %v1191 = vpop.f32.mrb[0].mxu0
        %v1192 = vpop.f32.mrb[0].mxu0
        %v1193 = vadd.f32 0.0, %v1192
        %v1194 = vpop.f32.mrb[0].mxu0
        %1195 = vmatprep.mubr.bf16.mxu0 0
        %1196 = vmatmul.mubr.bf16.gmra.mrb[0].mxu0 %v1147
        %v1197 = vpop.f32.mrb[0].mxu0
        %v1198 = vadd.f32 0.0, %v1197
        %v1199 = vpop.f32.mrb[0].mxu0
        %v1200 = vpop.f32.mrb[0].mxu0
        %v1201 = vpop.f32.mrb[0].mxu0
        %1202 = vdwg.mxu0
        %1205 = vrot.lane.b32.xlu0 %v1002, 96
        %v1206 = vpop.permute.xlu0 %1205
        %1207 = vrot.lane.b32.xlu0 %v1003, 96
        %v1208 = vpop.permute.xlu0 %1207
        %v1210 = vsel %vm1010, %v1002, 0
        %v1213 = vsel %vm1010, %v1003, 0
        %v1216 = vsel %vm1010, %v1206, 0
        %v1219 = vsel %vm1010, %v1208, 0
        %1221 = vmatprep.subr.bf16.mxu0 0
        %1222 = vmatpush1.bf16.xpose.msra.mxu0 %v1216
        %1223 = vmatprep.subr.bf16.mxu0 0
        %1224 = vmatpush1.bf16.xpose.msra.mxu0 %v1219
        %1225 = vmatprep.subr.bf16.mxu0 0
        %1226 = vmatpush1.bf16.xpose.msra.mxu0 0
        %1227 = vmatprep.subr.bf16.mxu0 0
        %1228 = vmatpush1.bf16.xpose.msra.mxu0 0
        %1229 = vmatprep.subr.bf16.mxu0 0
        %1230 = vmatpush1.bf16.xpose.msra.mxu0 0
        %1231 = vmatprep.subr.bf16.mxu0 0
        %1232 = vmatpush1.bf16.xpose.msra.mxu0 0
        %1233 = vmatprep.subr.bf16.mxu0 0
        %1234 = vmatpush1.bf16.xpose.msra.mxu0 0
        %1235 = vmatprep.subr.bf16.mxu0 0
        %1236 = vmatpush1.bf16.xpose.msra.mxu0 0
        %1237 = vmatprep.subr.bf16.mxu0 0
        %1238 = vmatpush1.bf16.xpose.msra.mxu0 0
        %1239 = vmatprep.subr.bf16.mxu0 0
        %1240 = vmatpush1.bf16.xpose.msra.mxu0 0
        %1241 = vmatprep.subr.bf16.mxu0 0
        %1242 = vmatpush1.bf16.xpose.msra.mxu0 0
        %1243 = vmatprep.subr.bf16.mxu0 0
        %1244 = vmatpush1.bf16.xpose.msra.mxu0 0
        %1245 = vmatprep.subr.bf16.mxu0 0
        %1246 = vmatpush1.bf16.xpose.msra.mxu0 0
        %1247 = vmatprep.subr.bf16.mxu0 0
        %1248 = vmatpush1.bf16.xpose.msra.mxu0 0
        %1249 = vmatprep.subr.bf16.mxu0 0
        %1250 = vmatpush1.bf16.xpose.msra.mxu0 0
        %1251 = vmatprep.subr.bf16.mxu0 0
        %1252 = vmatpush1.bf16.xpose.msra.mxu0 0
        %1253 = vmatprep.mubr.bf16.mxu0 0
        %1254 = vmatmul.mubr.bf16.gmra.mrb[0].mxu0 %v1210
        %v1255 = vpop.f32.mrb[0].mxu0
        %v1256 = vadd.f32 0.0, %v1255
        %v1257 = vpop.f32.mrb[0].mxu0
        %v1258 = vpop.f32.mrb[0].mxu0
        %v1259 = vadd.f32 0.0, %v1258
        %v1260 = vpop.f32.mrb[0].mxu0
        %1261 = vmatprep.mubr.bf16.mxu0 0
        %1262 = vmatmul.mubr.bf16.gmra.mrb[0].mxu0 %v1213
        %v1263 = vpop.f32.mrb[0].mxu0
        %v1264 = vadd.f32 0.0, %v1263
        %v1265 = vpop.f32.mrb[0].mxu0
        %v1266 = vpop.f32.mrb[0].mxu0
        %v1267 = vpop.f32.mrb[0].mxu0
        %1268 = vdwg.mxu0
        %v1269 = vmul.f32 %v1058, 0.35355338
        %v1270 = vmul.f32 %v1061, 0.35355338
        %v1271 = vmul.f32 %v1066, 0.35355338
        %v1272 = vmul.f32 %v1124, 0.35355338
        %v1273 = vmul.f32 %v1127, 0.35355338
        %v1274 = vmul.f32 %v1132, 0.35355338
        %v1275 = vmul.f32 %v1190, 0.35355338
        %v1276 = vmul.f32 %v1193, 0.35355338
        %v1277 = vmul.f32 %v1198, 0.35355338
        %v1278 = vmul.f32 %v1256, 0.35355338
        %v1279 = vmul.f32 %v1259, 0.35355338
        %v1280 = vmul.f32 %v1264, 0.35355338
        %vm1281 = vcmask 138240
        %v1282 = vsel %vm1281, %v1269, -inf
        %1283 = vmax.xlane.f32.xlu0 %v1282
        %v1284 = vpop.xlane.xlu0 %1283
        %v1285 = vsel %vm1281, %v1270, -inf
        %1286 = vmax.xlane.f32.xlu0 %v1285
        %v1287 = vpop.xlane.xlu0 %1286
        %vm1288 = vcmask 131072
        %v1289 = vsel %vm1288, %v1271, -inf
        %1290 = vmax.xlane.f32.xlu0 %v1289
        %v1291 = vpop.xlane.xlu0 %1290
        %v1292 = vsel %vm1281, %v1272, -inf
        %1293 = vmax.xlane.f32.xlu0 %v1292
        %v1294 = vpop.xlane.xlu0 %1293
        %v1295 = vsel %vm1281, %v1273, -inf
        %1296 = vmax.xlane.f32.xlu0 %v1295
        %v1297 = vpop.xlane.xlu0 %1296
        %v1298 = vsel %vm1288, %v1274, -inf
        %1299 = vmax.xlane.f32.xlu0 %v1298
        %v1300 = vpop.xlane.xlu0 %1299
        %v1301 = vsel %vm1281, %v1275, -inf
        %1302 = vmax.xlane.f32.xlu0 %v1301
        %v1303 = vpop.xlane.xlu0 %1302
        %v1304 = vsel %vm1281, %v1276, -inf
        %1305 = vmax.xlane.f32.xlu0 %v1304
        %v1306 = vpop.xlane.xlu0 %1305
        %v1307 = vsel %vm1288, %v1277, -inf
        %1308 = vmax.xlane.f32.xlu0 %v1307
        %v1309 = vpop.xlane.xlu0 %1308
        %v1310 = vsel %vm1281, %v1278, -inf
        %1311 = vmax.xlane.f32.xlu0 %v1310
        %v1312 = vpop.xlane.xlu0 %1311
        %v1313 = vsel %vm1281, %v1279, -inf
        %1314 = vmax.xlane.f32.xlu0 %v1313
        %v1315 = vpop.xlane.xlu0 %1314
        %v1316 = vsel %vm1288, %v1280, -inf
        %1317 = vmax.xlane.f32.xlu0 %v1316
        %v1318 = vpop.xlane.xlu0 %1317
        %v1319 = vsub.f32 %v1269, %v1284
        %v1320 = vsub.f32 %v1270, %v1287
        %v1321 = vsub.f32 %v1271, %v1291
        %v1322 = vsub.f32 %v1272, %v1294
        %v1323 = vsub.f32 %v1273, %v1297
        %v1324 = vsub.f32 %v1274, %v1300
        %v1325 = vsub.f32 %v1275, %v1303
        %v1326 = vsub.f32 %v1276, %v1306
        %v1327 = vsub.f32 %v1277, %v1309
        %v1328 = vsub.f32 %v1278, %v1312
        %v1329 = vsub.f32 %v1279, %v1315
        %v1330 = vsub.f32 %v1280, %v1318
        %v1331 = vmul.f32 %v1319, 1.442695
        %v1332 = vpow.pop %v1331
        %v1333 = vmul.f32 %v1320, 1.442695
        %v1334 = vpow.pop %v1333
        %v1335 = vmul.f32 %v1321, 1.442695
        %v1336 = vpow.pop %v1335
        %v1337 = vmul.f32 %v1322, 1.442695
        %v1338 = vpow.pop %v1337
        %v1339 = vmul.f32 %v1323, 1.442695
        %v1340 = vpow.pop %v1339
        %v1341 = vmul.f32 %v1324, 1.442695
        %v1342 = vpow.pop %v1341
        %v1343 = vmul.f32 %v1325, 1.442695
        %v1344 = vpow.pop %v1343
        %v1345 = vmul.f32 %v1326, 1.442695
        %v1346 = vpow.pop %v1345
        %v1347 = vmul.f32 %v1327, 1.442695
        %v1348 = vpow.pop %v1347
        %v1349 = vmul.f32 %v1328, 1.442695
        %v1350 = vpow.pop %v1349
        %v1351 = vmul.f32 %v1329, 1.442695
        %v1352 = vpow.pop %v1351
        %v1353 = vmul.f32 %v1330, 1.442695
        %v1354 = vpow.pop %v1353
        %v1355 = vsel %vm1281, %v1332, 0.0
        %1356 = vadd.xlane.f32.xlu0 %v1355
        %v1357 = vpop.xlane.xlu0 %1356
        %v1358 = vsel %vm1281, %v1334, 0.0
        %1359 = vadd.xlane.f32.xlu0 %v1358
        %v1360 = vpop.xlane.xlu0 %1359
        %v1361 = vsel %vm1288, %v1336, 0.0
        %1362 = vadd.xlane.f32.xlu0 %v1361
        %v1363 = vpop.xlane.xlu0 %1362
        %v1364 = vsel %vm1281, %v1338, 0.0
        %1365 = vadd.xlane.f32.xlu0 %v1364
        %v1366 = vpop.xlane.xlu0 %1365
        %v1367 = vsel %vm1281, %v1340, 0.0
        %1368 = vadd.xlane.f32.xlu0 %v1367
        %v1369 = vpop.xlane.xlu0 %1368
        %v1370 = vsel %vm1288, %v1342, 0.0
        %1371 = vadd.xlane.f32.xlu0 %v1370
        %v1372 = vpop.xlane.xlu0 %1371
        %v1373 = vsel %vm1281, %v1344, 0.0
        %1374 = vadd.xlane.f32.xlu0 %v1373
        %v1375 = vpop.xlane.xlu0 %1374
        %v1376 = vsel %vm1281, %v1346, 0.0
        %1377 = vadd.xlane.f32.xlu0 %v1376
        %v1378 = vpop.xlane.xlu0 %1377
        %v1379 = vsel %vm1288, %v1348, 0.0
        %1380 = vadd.xlane.f32.xlu0 %v1379
        %v1381 = vpop.xlane.xlu0 %1380
        %v1382 = vsel %vm1281, %v1350, 0.0
        %1383 = vadd.xlane.f32.xlu0 %v1382
        %v1384 = vpop.xlane.xlu0 %1383
        %v1385 = vsel %vm1281, %v1352, 0.0
        %1386 = vadd.xlane.f32.xlu0 %v1385
        %v1387 = vpop.xlane.xlu0 %1386
        %v1388 = vsel %vm1288, %v1354, 0.0
        %1389 = vadd.xlane.f32.xlu0 %v1388
        %v1390 = vpop.xlane.xlu0 %1389
        %v1391 = vrcp.pop %v1357
        %v1392 = vrcp.pop %v1360
        %v1393 = vrcp.pop %v1363
        %v1394 = vrcp.pop %v1366
        %v1395 = vrcp.pop %v1369
        %v1396 = vrcp.pop %v1372
        %v1397 = vrcp.pop %v1375
        %v1398 = vrcp.pop %v1378
        %v1399 = vrcp.pop %v1381
        %v1400 = vrcp.pop %v1384
        %v1401 = vrcp.pop %v1387
        %v1402 = vrcp.pop %v1390
        %v1403 = vmul.f32 %v1332, %v1391
        %v1404 = vmul.f32 %v1334, %v1392
        %v1405 = vmul.f32 %v1336, %v1393
        %v1406 = vmul.f32 %v1338, %v1394
        %v1407 = vmul.f32 %v1340, %v1395
        %v1408 = vmul.f32 %v1342, %v1396
        %v1409 = vmul.f32 %v1344, %v1397
        %v1410 = vmul.f32 %v1346, %v1398
        %v1411 = vmul.f32 %v1348, %v1399
        %v1412 = vmul.f32 %v1350, %v1400
        %v1413 = vmul.f32 %v1352, %v1401
        %v1414 = vmul.f32 %v1354, %v1402
        %v1415 = vpack.c.bf16 %v1404, %v1403
        %v1416 = vpack.c.bf16 %v1405, %v1405
        %v1417 = vpack.c.bf16 %v1407, %v1406
        %v1418 = vpack.c.bf16 %v1408, %v1408
        %v1419 = vpack.c.bf16 %v1410, %v1409
        %v1420 = vpack.c.bf16 %v1411, %v1411
        %v1421 = vpack.c.bf16 %v1413, %v1412
        %v1422 = vpack.c.bf16 %v1414, %v1414
        %1423 = vrot.lane.b32.xlu0 %v996, 64
        %v1424 = vpop.permute.xlu0 %1423
        %1425 = vrot.lane.b32.xlu0 %v997, 64
        %v1426 = vpop.permute.xlu0 %1425
        %v1429 = vsel %vm1281, %v1415, 0
        %v1432 = vsel %vm1281, %v1416, 0
        %vm1434 = vcmask 1040384
        %v1435 = vsel 0, 4294967295, 65535
        %v1436 = vsel %vm1434, %v1435, 0
        %v1438 = vand.u32 %v1426, %v1436
        %1440 = vmatprep.subr.bf16.mxu0 0
        %1441 = vmatpush1.bf16.msra.mxu0 %v1424
        %1442 = vmatprep.subr.bf16.mxu0 0
        %1443 = vmatpush1.bf16.msra.mxu0 %v1438
        %1444 = vmatprep.subr.bf16.mxu0 0
        %1445 = vmatpush1.bf16.msra.mxu0 0
        %1446 = vmatprep.subr.bf16.mxu0 0
        %1447 = vmatpush1.bf16.msra.mxu0 0
        %1448 = vmatprep.subr.bf16.mxu0 0
        %1449 = vmatpush1.bf16.msra.mxu0 0
        %1450 = vmatprep.subr.bf16.mxu0 0
        %1451 = vmatpush1.bf16.msra.mxu0 0
        %1452 = vmatprep.subr.bf16.mxu0 0
        %1453 = vmatpush1.bf16.msra.mxu0 0
        %1454 = vmatprep.subr.bf16.mxu0 0
        %1455 = vmatpush1.bf16.msra.mxu0 0
        %1456 = vmatprep.subr.bf16.mxu0 0
        %1457 = vmatpush1.bf16.msra.mxu0 0
        %1458 = vmatprep.subr.bf16.mxu0 0
        %1459 = vmatpush1.bf16.msra.mxu0 0
        %1460 = vmatprep.subr.bf16.mxu0 0
        %1461 = vmatpush1.bf16.msra.mxu0 0
        %1462 = vmatprep.subr.bf16.mxu0 0
        %1463 = vmatpush1.bf16.msra.mxu0 0
        %1464 = vmatprep.subr.bf16.mxu0 0
        %1465 = vmatpush1.bf16.msra.mxu0 0
        %1466 = vmatprep.subr.bf16.mxu0 0
        %1467 = vmatpush1.bf16.msra.mxu0 0
        %1468 = vmatprep.subr.bf16.mxu0 0
        %1469 = vmatpush1.bf16.msra.mxu0 0
        %1470 = vmatprep.subr.bf16.mxu0 0
        %1471 = vmatpush1.bf16.msra.mxu0 0
        %1472 = vmatprep.mubr.bf16.mxu0 0
        %1473 = vmatmul.mubr.bf16.gmra.mrb[0].mxu0 %v1429
        %v1474 = vpop.f32.mrb[0].mxu0
        %v1475 = vadd.f32 0.0, %v1474
        %v1476 = vpop.f32.mrb[0].mxu0
        %v1477 = vpop.f32.mrb[0].mxu0
        %v1478 = vadd.f32 0.0, %v1477
        %v1479 = vpop.f32.mrb[0].mxu0
        %1480 = vmatprep.mubr.bf16.mxu0 0
        %1481 = vmatmul.mubr.bf16.gmra.mrb[0].mxu0 %v1432
        %v1482 = vpop.f32.mrb[0].mxu0
        %v1483 = vadd.f32 0.0, %v1482
        %v1484 = vpop.f32.mrb[0].mxu0
        %v1485 = vpop.f32.mrb[0].mxu0
        %v1486 = vpop.f32.mrb[0].mxu0
        %1487 = vdwg.mxu0
        %1488 = vrot.lane.b32.xlu0 %v998, 64
        %v1489 = vpop.permute.xlu0 %1488
        %1490 = vrot.lane.b32.xlu0 %v999, 64
        %v1491 = vpop.permute.xlu0 %1490
        %v1494 = vsel %vm1281, %v1417, 0
        %v1497 = vsel %vm1281, %v1418, 0
        %v1500 = vand.u32 %v1491, %v1436
        %1502 = vmatprep.subr.bf16.mxu0 0
        %1503 = vmatpush1.bf16.msra.mxu0 %v1489
        %1504 = vmatprep.subr.bf16.mxu0 0
        %1505 = vmatpush1.bf16.msra.mxu0 %v1500
        %1506 = vmatprep.subr.bf16.mxu0 0
        %1507 = vmatpush1.bf16.msra.mxu0 0
        %1508 = vmatprep.subr.bf16.mxu0 0
        %1509 = vmatpush1.bf16.msra.mxu0 0
        %1510 = vmatprep.subr.bf16.mxu0 0
        %1511 = vmatpush1.bf16.msra.mxu0 0
        %1512 = vmatprep.subr.bf16.mxu0 0
        %1513 = vmatpush1.bf16.msra.mxu0 0
        %1514 = vmatprep.subr.bf16.mxu0 0
        %1515 = vmatpush1.bf16.msra.mxu0 0
        %1516 = vmatprep.subr.bf16.mxu0 0
        %1517 = vmatpush1.bf16.msra.mxu0 0
        %1518 = vmatprep.subr.bf16.mxu0 0
        %1519 = vmatpush1.bf16.msra.mxu0 0
        %1520 = vmatprep.subr.bf16.mxu0 0
        %1521 = vmatpush1.bf16.msra.mxu0 0
        %1522 = vmatprep.subr.bf16.mxu0 0
        %1523 = vmatpush1.bf16.msra.mxu0 0
        %1524 = vmatprep.subr.bf16.mxu0 0
        %1525 = vmatpush1.bf16.msra.mxu0 0
        %1526 = vmatprep.subr.bf16.mxu0 0
        %1527 = vmatpush1.bf16.msra.mxu0 0
        %1528 = vmatprep.subr.bf16.mxu0 0
        %1529 = vmatpush1.bf16.msra.mxu0 0
        %1530 = vmatprep.subr.bf16.mxu0 0
        %1531 = vmatpush1.bf16.msra.mxu0 0
        %1532 = vmatprep.subr.bf16.mxu0 0
        %1533 = vmatpush1.bf16.msra.mxu0 0
        %1534 = vmatprep.mubr.bf16.mxu0 0
        %1535 = vmatmul.mubr.bf16.gmra.mrb[0].mxu0 %v1494
        %v1536 = vpop.f32.mrb[0].mxu0
        %v1537 = vadd.f32 0.0, %v1536
        %v1538 = vpop.f32.mrb[0].mxu0
        %v1539 = vpop.f32.mrb[0].mxu0
        %v1540 = vadd.f32 0.0, %v1539
        %v1541 = vpop.f32.mrb[0].mxu0
        %1542 = vmatprep.mubr.bf16.mxu0 0
        %1543 = vmatmul.mubr.bf16.gmra.mrb[0].mxu0 %v1497
        %v1544 = vpop.f32.mrb[0].mxu0
        %v1545 = vadd.f32 0.0, %v1544
        %v1546 = vpop.f32.mrb[0].mxu0
        %v1547 = vpop.f32.mrb[0].mxu0
        %v1548 = vpop.f32.mrb[0].mxu0
        %1549 = vdwg.mxu0
        %1550 = vrot.lane.b32.xlu0 %v1000, 64
        %v1551 = vpop.permute.xlu0 %1550
        %1552 = vrot.lane.b32.xlu0 %v1001, 64
        %v1553 = vpop.permute.xlu0 %1552
        %v1556 = vsel %vm1281, %v1419, 0
        %v1559 = vsel %vm1281, %v1420, 0
        %v1562 = vand.u32 %v1553, %v1436
        %1564 = vmatprep.subr.bf16.mxu0 0
        %1565 = vmatpush1.bf16.msra.mxu0 %v1551
        %1566 = vmatprep.subr.bf16.mxu0 0
        %1567 = vmatpush1.bf16.msra.mxu0 %v1562
        %1568 = vmatprep.subr.bf16.mxu0 0
        %1569 = vmatpush1.bf16.msra.mxu0 0
        %1570 = vmatprep.subr.bf16.mxu0 0
        %1571 = vmatpush1.bf16.msra.mxu0 0
        %1572 = vmatprep.subr.bf16.mxu0 0
        %1573 = vmatpush1.bf16.msra.mxu0 0
        %1574 = vmatprep.subr.bf16.mxu0 0
        %1575 = vmatpush1.bf16.msra.mxu0 0
        %1576 = vmatprep.subr.bf16.mxu0 0
        %1577 = vmatpush1.bf16.msra.mxu0 0
        %1578 = vmatprep.subr.bf16.mxu0 0
        %1579 = vmatpush1.bf16.msra.mxu0 0
        %1580 = vmatprep.subr.bf16.mxu0 0
        %1581 = vmatpush1.bf16.msra.mxu0 0
        %1582 = vmatprep.subr.bf16.mxu0 0
        %1583 = vmatpush1.bf16.msra.mxu0 0
        %1584 = vmatprep.subr.bf16.mxu0 0
        %1585 = vmatpush1.bf16.msra.mxu0 0
        %1586 = vmatprep.subr.bf16.mxu0 0
        %1587 = vmatpush1.bf16.msra.mxu0 0
        %1588 = vmatprep.subr.bf16.mxu0 0
        %1589 = vmatpush1.bf16.msra.mxu0 0
        %1590 = vmatprep.subr.bf16.mxu0 0
        %1591 = vmatpush1.bf16.msra.mxu0 0
        %1592 = vmatprep.subr.bf16.mxu0 0
        %1593 = vmatpush1.bf16.msra.mxu0 0
        %1594 = vmatprep.subr.bf16.mxu0 0
        %1595 = vmatpush1.bf16.msra.mxu0 0
        %1596 = vmatprep.mubr.bf16.mxu0 0
        %1597 = vmatmul.mubr.bf16.gmra.mrb[0].mxu0 %v1556
        %v1598 = vpop.f32.mrb[0].mxu0
        %v1599 = vadd.f32 0.0, %v1598
        %v1600 = vpop.f32.mrb[0].mxu0
        %v1601 = vpop.f32.mrb[0].mxu0
        %v1602 = vadd.f32 0.0, %v1601
        %v1603 = vpop.f32.mrb[0].mxu0
        %1604 = vmatprep.mubr.bf16.mxu0 0
        %1605 = vmatmul.mubr.bf16.gmra.mrb[0].mxu0 %v1559
        %v1606 = vpop.f32.mrb[0].mxu0
        %v1607 = vadd.f32 0.0, %v1606
        %v1608 = vpop.f32.mrb[0].mxu0
        %v1609 = vpop.f32.mrb[0].mxu0
        %v1610 = vpop.f32.mrb[0].mxu0
        %1611 = vdwg.mxu0
        %1612 = vrot.lane.b32.xlu0 %v1002, 64
        %v1613 = vpop.permute.xlu0 %1612
        %1614 = vrot.lane.b32.xlu0 %v1003, 64
        %v1615 = vpop.permute.xlu0 %1614
        %v1618 = vsel %vm1281, %v1421, 0
        %v1621 = vsel %vm1281, %v1422, 0
        %v1624 = vand.u32 %v1615, %v1436
        %1626 = vmatprep.subr.bf16.mxu0 0
        %1627 = vmatpush1.bf16.msra.mxu0 %v1613
        %1628 = vmatprep.subr.bf16.mxu0 0
        %1629 = vmatpush1.bf16.msra.mxu0 %v1624
        %1630 = vmatprep.subr.bf16.mxu0 0
        %1631 = vmatpush1.bf16.msra.mxu0 0
        %1632 = vmatprep.subr.bf16.mxu0 0
        %1633 = vmatpush1.bf16.msra.mxu0 0
        %1634 = vmatprep.subr.bf16.mxu0 0
        %1635 = vmatpush1.bf16.msra.mxu0 0
        %1636 = vmatprep.subr.bf16.mxu0 0
        %1637 = vmatpush1.bf16.msra.mxu0 0
        %1638 = vmatprep.subr.bf16.mxu0 0
        %1639 = vmatpush1.bf16.msra.mxu0 0
        %1640 = vmatprep.subr.bf16.mxu0 0
        %1641 = vmatpush1.bf16.msra.mxu0 0
        %1642 = vmatprep.subr.bf16.mxu0 0
        %1643 = vmatpush1.bf16.msra.mxu0 0
        %1644 = vmatprep.subr.bf16.mxu0 0
        %1645 = vmatpush1.bf16.msra.mxu0 0
        %1646 = vmatprep.subr.bf16.mxu0 0
        %1647 = vmatpush1.bf16.msra.mxu0 0
        %1648 = vmatprep.subr.bf16.mxu0 0
        %1649 = vmatpush1.bf16.msra.mxu0 0
        %1650 = vmatprep.subr.bf16.mxu0 0
        %1651 = vmatpush1.bf16.msra.mxu0 0
        %1652 = vmatprep.subr.bf16.mxu0 0
        %1653 = vmatpush1.bf16.msra.mxu0 0
        %1654 = vmatprep.subr.bf16.mxu0 0
        %1655 = vmatpush1.bf16.msra.mxu0 0
        %1656 = vmatprep.subr.bf16.mxu0 0
        %1657 = vmatpush1.bf16.msra.mxu0 0
        %1658 = vmatprep.mubr.bf16.mxu0 0
        %1659 = vmatmul.mubr.bf16.gmra.mrb[0].mxu0 %v1618
        %v1660 = vpop.f32.mrb[0].mxu0
        %v1661 = vadd.f32 0.0, %v1660
        %v1662 = vpop.f32.mrb[0].mxu0
        %v1663 = vpop.f32.mrb[0].mxu0
        %v1664 = vadd.f32 0.0, %v1663
        %v1665 = vpop.f32.mrb[0].mxu0
        %1666 = vmatprep.mubr.bf16.mxu0 0
        %1667 = vmatmul.mubr.bf16.gmra.mrb[0].mxu0 %v1621
        %v1668 = vpop.f32.mrb[0].mxu0
        %v1669 = vadd.f32 0.0, %v1668
        %v1670 = vpop.f32.mrb[0].mxu0
        %v1671 = vpop.f32.mrb[0].mxu0
        %v1672 = vpop.f32.mrb[0].mxu0
        %1673 = vdwg.mxu0
        %v1674 = vpack.c.bf16 %v1478, %v1475
        %v1675 = vpack.c.bf16 %v1483, %v1483
        %v1676 = vpack.c.bf16 %v1540, %v1537
        %v1677 = vpack.c.bf16 %v1545, %v1545
        %v1678 = vpack.c.bf16 %v1602, %v1599
        %v1679 = vpack.c.bf16 %v1607, %v1607
        %v1680 = vpack.c.bf16 %v1664, %v1661
        %v1681 = vpack.c.bf16 %v1669, %v1669
        %v1682 = vld [vmem:[%s702] sm:$0xf]
        %v1683 = vld [vmem:[%s702 + $0x4] sm:$0xf]
        %v1684 = vld [vmem:[%s702 + $0x8] sm:$0xf]
        %v1685 = vld [vmem:[%s702 + $0xc] sm:$0xf]
        %v1687 = vsel %vm1010, %v1674, 0
        %v1690 = vsel %vm1010, %v1675, 0
        %vm1692 = vcmask 1043456
        %v1694 = vsel %vm1692, %v1682, 0
        %1696 = vmatprep.subr.bf16.mxu0 0
        %1697 = vmatpush1.bf16.msra.mxu0 %v1694
        %1698 = vmatprep.subr.bf16.mxu0 0
        %1699 = vmatpush1.bf16.msra.mxu0 0
        %1700 = vmatprep.subr.bf16.mxu0 0
        %1701 = vmatpush1.bf16.msra.mxu0 0
        %1702 = vmatprep.subr.bf16.mxu0 0
        %1703 = vmatpush1.bf16.msra.mxu0 0
        %1704 = vmatprep.subr.bf16.mxu0 0
        %1705 = vmatpush1.bf16.msra.mxu0 0
        %1706 = vmatprep.subr.bf16.mxu0 0
        %1707 = vmatpush1.bf16.msra.mxu0 0
        %1708 = vmatprep.subr.bf16.mxu0 0
        %1709 = vmatpush1.bf16.msra.mxu0 0
        %1710 = vmatprep.subr.bf16.mxu0 0
        %1711 = vmatpush1.bf16.msra.mxu0 0
        %1712 = vmatprep.subr.bf16.mxu0 0
        %1713 = vmatpush1.bf16.msra.mxu0 0
        %1714 = vmatprep.subr.bf16.mxu0 0
        %1715 = vmatpush1.bf16.msra.mxu0 0
        %1716 = vmatprep.subr.bf16.mxu0 0
        %1717 = vmatpush1.bf16.msra.mxu0 0
        %1718 = vmatprep.subr.bf16.mxu0 0
        %1719 = vmatpush1.bf16.msra.mxu0 0
        %1720 = vmatprep.subr.bf16.mxu0 0
        %1721 = vmatpush1.bf16.msra.mxu0 0
        %1722 = vmatprep.subr.bf16.mxu0 0
        %1723 = vmatpush1.bf16.msra.mxu0 0
        %1724 = vmatprep.subr.bf16.mxu0 0
        %1725 = vmatpush1.bf16.msra.mxu0 0
        %1726 = vmatprep.subr.bf16.mxu0 0
        %1727 = vmatpush1.bf16.msra.mxu0 0
        %1728 = vmatprep.mubr.bf16.mxu0 0
        %1729 = vmatmul.mubr.bf16.gmra.mrb[0].mxu0 %v1687
        %v1730 = vpop.f32.mrb[0].mxu0
        %v1731 = vadd.f32 0.0, %v1730
        %v1732 = vpop.f32.mrb[0].mxu0
        %v1733 = vpop.f32.mrb[0].mxu0
        %v1734 = vadd.f32 0.0, %v1733
        %v1735 = vpop.f32.mrb[0].mxu0
        %1736 = vmatprep.mubr.bf16.mxu0 0
        %1737 = vmatmul.mubr.bf16.gmra.mrb[0].mxu0 %v1690
        %v1738 = vpop.f32.mrb[0].mxu0
        %v1739 = vadd.f32 0.0, %v1738
        %v1740 = vpop.f32.mrb[0].mxu0
        %v1741 = vpop.f32.mrb[0].mxu0
        %v1742 = vpop.f32.mrb[0].mxu0
        %1743 = vdwg.mxu0
        %v1745 = vsel %vm1010, %v1676, 0
        %v1748 = vsel %vm1010, %v1677, 0
        %v1751 = vsel %vm1692, %v1683, 0
        %1753 = vmatprep.subr.bf16.mxu0 0
        %1754 = vmatpush1.bf16.msra.mxu0 %v1751
        %1755 = vmatprep.subr.bf16.mxu0 0
        %1756 = vmatpush1.bf16.msra.mxu0 0
        %1757 = vmatprep.subr.bf16.mxu0 0
        %1758 = vmatpush1.bf16.msra.mxu0 0
        %1759 = vmatprep.subr.bf16.mxu0 0
        %1760 = vmatpush1.bf16.msra.mxu0 0
        %1761 = vmatprep.subr.bf16.mxu0 0
        %1762 = vmatpush1.bf16.msra.mxu0 0
        %1763 = vmatprep.subr.bf16.mxu0 0
        %1764 = vmatpush1.bf16.msra.mxu0 0
        %1765 = vmatprep.subr.bf16.mxu0 0
        %1766 = vmatpush1.bf16.msra.mxu0 0
        %1767 = vmatprep.subr.bf16.mxu0 0
        %1768 = vmatpush1.bf16.msra.mxu0 0
        %1769 = vmatprep.subr.bf16.mxu0 0
        %1770 = vmatpush1.bf16.msra.mxu0 0
        %1771 = vmatprep.subr.bf16.mxu0 0
        %1772 = vmatpush1.bf16.msra.mxu0 0
        %1773 = vmatprep.subr.bf16.mxu0 0
        %1774 = vmatpush1.bf16.msra.mxu0 0
        %1775 = vmatprep.subr.bf16.mxu0 0
        %1776 = vmatpush1.bf16.msra.mxu0 0
        %1777 = vmatprep.subr.bf16.mxu0 0
        %1778 = vmatpush1.bf16.msra.mxu0 0
        %1779 = vmatprep.subr.bf16.mxu0 0
        %1780 = vmatpush1.bf16.msra.mxu0 0
        %1781 = vmatprep.subr.bf16.mxu0 0
        %1782 = vmatpush1.bf16.msra.mxu0 0
        %1783 = vmatprep.subr.bf16.mxu0 0
        %1784 = vmatpush1.bf16.msra.mxu0 0
        %1785 = vmatprep.mubr.bf16.mxu0 0
        %1786 = vmatmul.mubr.bf16.gmra.mrb[0].mxu0 %v1745
        %v1787 = vpop.f32.mrb[0].mxu0
        %v1788 = vadd.f32 0.0, %v1787
        %v1789 = vpop.f32.mrb[0].mxu0
        %v1790 = vpop.f32.mrb[0].mxu0
        %v1791 = vadd.f32 0.0, %v1790
        %v1792 = vpop.f32.mrb[0].mxu0
        %1793 = vmatprep.mubr.bf16.mxu0 0
        %1794 = vmatmul.mubr.bf16.gmra.mrb[0].mxu0 %v1748
        %v1795 = vpop.f32.mrb[0].mxu0
        %v1796 = vadd.f32 0.0, %v1795
        %v1797 = vpop.f32.mrb[0].mxu0
        %v1798 = vpop.f32.mrb[0].mxu0
        %v1799 = vpop.f32.mrb[0].mxu0
        %1800 = vdwg.mxu0
        %v1802 = vsel %vm1010, %v1678, 0
        %v1805 = vsel %vm1010, %v1679, 0
        %v1808 = vsel %vm1692, %v1684, 0
        %1810 = vmatprep.subr.bf16.mxu0 0
        %1811 = vmatpush1.bf16.msra.mxu0 %v1808
        %1812 = vmatprep.subr.bf16.mxu0 0
        %1813 = vmatpush1.bf16.msra.mxu0 0
        %1814 = vmatprep.subr.bf16.mxu0 0
        %1815 = vmatpush1.bf16.msra.mxu0 0
        %1816 = vmatprep.subr.bf16.mxu0 0
        %1817 = vmatpush1.bf16.msra.mxu0 0
        %1818 = vmatprep.subr.bf16.mxu0 0
        %1819 = vmatpush1.bf16.msra.mxu0 0
        %1820 = vmatprep.subr.bf16.mxu0 0
        %1821 = vmatpush1.bf16.msra.mxu0 0
        %1822 = vmatprep.subr.bf16.mxu0 0
        %1823 = vmatpush1.bf16.msra.mxu0 0
        %1824 = vmatprep.subr.bf16.mxu0 0
        %1825 = vmatpush1.bf16.msra.mxu0 0
        %1826 = vmatprep.subr.bf16.mxu0 0
        %1827 = vmatpush1.bf16.msra.mxu0 0
        %1828 = vmatprep.subr.bf16.mxu0 0
        %1829 = vmatpush1.bf16.msra.mxu0 0
        %1830 = vmatprep.subr.bf16.mxu0 0
        %1831 = vmatpush1.bf16.msra.mxu0 0
        %1832 = vmatprep.subr.bf16.mxu0 0
        %1833 = vmatpush1.bf16.msra.mxu0 0
        %1834 = vmatprep.subr.bf16.mxu0 0
        %1835 = vmatpush1.bf16.msra.mxu0 0
        %1836 = vmatprep.subr.bf16.mxu0 0
        %1837 = vmatpush1.bf16.msra.mxu0 0
        %1838 = vmatprep.subr.bf16.mxu0 0
        %1839 = vmatpush1.bf16.msra.mxu0 0
        %1840 = vmatprep.subr.bf16.mxu0 0
        %1841 = vmatpush1.bf16.msra.mxu0 0
        %1842 = vmatprep.mubr.bf16.mxu0 0
        %1843 = vmatmul.mubr.bf16.gmra.mrb[0].mxu0 %v1802
        %v1844 = vpop.f32.mrb[0].mxu0
        %v1845 = vadd.f32 0.0, %v1844
        %v1846 = vpop.f32.mrb[0].mxu0
        %v1847 = vpop.f32.mrb[0].mxu0
        %v1848 = vadd.f32 0.0, %v1847
        %v1849 = vpop.f32.mrb[0].mxu0
        %1850 = vmatprep.mubr.bf16.mxu0 0
        %1851 = vmatmul.mubr.bf16.gmra.mrb[0].mxu0 %v1805
        %v1852 = vpop.f32.mrb[0].mxu0
        %v1853 = vadd.f32 0.0, %v1852
        %v1854 = vpop.f32.mrb[0].mxu0
        %v1855 = vpop.f32.mrb[0].mxu0
        %v1856 = vpop.f32.mrb[0].mxu0
        %1857 = vdwg.mxu0
        %v1859 = vsel %vm1010, %v1680, 0
        %v1862 = vsel %vm1010, %v1681, 0
        %v1865 = vsel %vm1692, %v1685, 0
        %1867 = vmatprep.subr.bf16.mxu0 0
        %1868 = vmatpush1.bf16.msra.mxu0 %v1865
        %1869 = vmatprep.subr.bf16.mxu0 0
        %1870 = vmatpush1.bf16.msra.mxu0 0
        %1871 = vmatprep.subr.bf16.mxu0 0
        %1872 = vmatpush1.bf16.msra.mxu0 0
        %1873 = vmatprep.subr.bf16.mxu0 0
        %1874 = vmatpush1.bf16.msra.mxu0 0
        %1875 = vmatprep.subr.bf16.mxu0 0
        %1876 = vmatpush1.bf16.msra.mxu0 0
        %1877 = vmatprep.subr.bf16.mxu0 0
        %1878 = vmatpush1.bf16.msra.mxu0 0
        %1879 = vmatprep.subr.bf16.mxu0 0
        %1880 = vmatpush1.bf16.msra.mxu0 0
        %1881 = vmatprep.subr.bf16.mxu0 0
        %1882 = vmatpush1.bf16.msra.mxu0 0
        %1883 = vmatprep.subr.bf16.mxu0 0
        %1884 = vmatpush1.bf16.msra.mxu0 0
        %1885 = vmatprep.subr.bf16.mxu0 0
        %1886 = vmatpush1.bf16.msra.mxu0 0
        %1887 = vmatprep.subr.bf16.mxu0 0
        %1888 = vmatpush1.bf16.msra.mxu0 0
        %1889 = vmatprep.subr.bf16.mxu0 0
        %1890 = vmatpush1.bf16.msra.mxu0 0
        %1891 = vmatprep.subr.bf16.mxu0 0
        %1892 = vmatpush1.bf16.msra.mxu0 0
        %1893 = vmatprep.subr.bf16.mxu0 0
        %1894 = vmatpush1.bf16.msra.mxu0 0
        %1895 = vmatprep.subr.bf16.mxu0 0
        %1896 = vmatpush1.bf16.msra.mxu0 0
        %1897 = vmatprep.subr.bf16.mxu0 0
        %1898 = vmatpush1.bf16.msra.mxu0 0
        %1899 = vmatprep.mubr.bf16.mxu0 0
        %1900 = vmatmul.mubr.bf16.gmra.mrb[0].mxu0 %v1859
        %v1901 = vpop.f32.mrb[0].mxu0
        %v1902 = vadd.f32 0.0, %v1901
        %v1903 = vpop.f32.mrb[0].mxu0
        %v1904 = vpop.f32.mrb[0].mxu0
        %v1905 = vadd.f32 0.0, %v1904
        %v1906 = vpop.f32.mrb[0].mxu0
        %1907 = vmatprep.mubr.bf16.mxu0 0
        %1908 = vmatmul.mubr.bf16.gmra.mrb[0].mxu0 %v1862
        %v1909 = vpop.f32.mrb[0].mxu0
        %v1910 = vadd.f32 0.0, %v1909
        %v1911 = vpop.f32.mrb[0].mxu0
        %v1912 = vpop.f32.mrb[0].mxu0
        %v1913 = vpop.f32.mrb[0].mxu0
        %1914 = vdwg.mxu0
        %v1915 = vsel %vm827, %v1731, 0.0
        %v1916 = vsel %vm827, %v1788, 0.0
        %v1917 = vadd.f32 %v1915, %v1916
        %v1918 = vsel %vm827, %v1845, 0.0
        %v1919 = vadd.f32 %v1917, %v1918
        %v1920 = vsel %vm827, %v1902, 0.0
        %v1921 = vadd.f32 %v1919, %v1920
        %v1922 = vsel %vm827, %v1734, 0.0
        %v1923 = vsel %vm827, %v1791, 0.0
        %v1924 = vadd.f32 %v1922, %v1923
        %v1925 = vsel %vm827, %v1848, 0.0
        %v1926 = vadd.f32 %v1924, %v1925
        %v1927 = vsel %vm827, %v1905, 0.0
        %v1928 = vadd.f32 %v1926, %v1927
        %v1929 = vsel %vm834, %v1739, 0.0
        %v1930 = vsel %vm834, %v1796, 0.0
        %v1931 = vadd.f32 %v1929, %v1930
        %v1932 = vsel %vm834, %v1853, 0.0
        %v1933 = vadd.f32 %v1931, %v1932
        %v1934 = vsel %vm834, %v1910, 0.0
        %v1935 = vadd.f32 %v1933, %v1934
        %v1936 = vld [vmem:[%s705] sm:$0x1]
        %v1938 = vlaneseq
        %v1939 = vshrl.u32 %v1938, 7
        %v1940 = vsub.s32 0, %v1939
        %v1941 = vrot.slane %v1936, %v1940
        %v1943 = vadd.f32 %v1921, %v1941
        %v1944 = vadd.f32 %v1928, %v1941
        %v1945 = vadd.f32 %v1935, %v1941
        %v1946 = vadd.f32 %v822, %v1943
        %v1947 = vadd.f32 %v823, %v1944
        %v1948 = vadd.f32 %v824, %v1945
        %1949 = vst.msk [vmem:[#allocation2] sm:$0xff] %vm827, %v1946
        %1950 = vst.msk [vmem:[#allocation2 + $0x8] sm:$0xff] %vm827, %v1947
        %1951 = vst.msk [vmem:[#allocation2 + $0x10] sm:$0x1] %vm834, %v1948
        %v1952 = vld [vmem:[%s708] sm:$0x1]
        %v1953 = vld [vmem:[%s711] sm:$0x1]
        %v1954 = vsel %vm827, %v1946, 0.0
        %1955 = vadd.xlane.f32.xlu0 %v1954
        %v1956 = vpop.xlane.xlu0 %1955
        %v1957 = vsel %vm827, %v1947, 0.0
        %1958 = vadd.xlane.f32.xlu0 %v1957
        %v1959 = vpop.xlane.xlu0 %1958
        %v1960 = vsel %vm834, %v1948, 0.0
        %1961 = vadd.xlane.f32.xlu0 %v1960
        %v1962 = vpop.xlane.xlu0 %1961
        %v1963 = vmul.f32 %v1956, %v838
        %v1964 = vmul.f32 %v1959, %v838
        %v1965 = vmul.f32 %v1962, %v838
        %v1966 = vsub.f32 %v1946, %v1963
        %v1967 = vsub.f32 %v1947, %v1964
        %v1968 = vsub.f32 %v1948, %v1965
        %v1969 = vmul.f32 %v1966, %v1966
        %v1970 = vmul.f32 %v1967, %v1967
        %v1971 = vmul.f32 %v1968, %v1968
        %v1972 = vsel %vm827, %v1969, 0.0
        %1973 = vadd.xlane.f32.xlu0 %v1972
        %v1974 = vpop.xlane.xlu0 %1973
        %v1975 = vsel %vm827, %v1970, 0.0
        %1976 = vadd.xlane.f32.xlu0 %v1975
        %v1977 = vpop.xlane.xlu0 %1976
        %v1978 = vsel %vm834, %v1971, 0.0
        %1979 = vadd.xlane.f32.xlu0 %v1978
        %v1980 = vpop.xlane.xlu0 %1979
        %v1981 = vmul.f32 %v1974, %v838
        %v1982 = vmul.f32 %v1977, %v838
        %v1983 = vmul.f32 %v1980, %v838
        %v1984 = vadd.f32 %v1981, 1e-05
        %v1985 = vadd.f32 %v1982, 1e-05
        %v1986 = vadd.f32 %v1983, 1e-05
        %v1987 = vrsqrt.pop %v1984
        %v1988 = vrsqrt.pop %v1985
        %v1989 = vrsqrt.pop %v1986
        %v1990 = vmul.f32 %v1966, %v1987
        %v1991 = vmul.f32 %v1967, %v1988
        %v1992 = vmul.f32 %v1968, %v1989
        %v1994 = vlaneseq
        %v1995 = vshrl.u32 %v1994, 7
        %v1996 = vsub.s32 0, %v1995
        %v1997 = vrot.slane %v1952, %v1996
        %v1999 = vmul.f32 %v1990, %v1997
        %v2000 = vmul.f32 %v1991, %v1997
        %v2001 = vmul.f32 %v1992, %v1997
        %v2003 = vlaneseq
        %v2004 = vshrl.u32 %v2003, 7
        %v2005 = vsub.s32 0, %v2004
        %v2006 = vrot.slane %v1953, %v2005
        %v2008 = vadd.f32 %v1999, %v2006
        %v2009 = vadd.f32 %v2000, %v2006
        %v2010 = vadd.f32 %v2001, %v2006
        %v2011 = vpack.c.bf16 %v2009, %v2008
        %v2012 = vpack.c.bf16 %v2010, %v2010
        %v2015 = vunpack.c.l.b16 %v2011
        %v2016 = vunpack.c.h.b16 %v2011
        %v2017 = vunpack.c.l.b16 %v2012
        %v2018 = vpack.c.b16 %v2015, %v2015
        %v2019 = vpack.c.b16 %v2016, %v2016
        %v2020 = vpack.c.b16 %v2017, %v2017
        %vm2024 = vcmask 257024
        %2025 = vst.msk [vmem:[#allocation3] sm:$0xf] %vm2024, %v2018
        %2026 = vst.msk [vmem:[#allocation3 + $0x4] sm:$0xf] %vm2024, %v2019
        %vm2027 = vcmask 253952
        %vm2028 = vsmask.f32 256
        %vm2029 = vmand %vm2027, %vm2028
        %v2030 = vld [vmem:[#allocation3 + $0x8] sm:$0x1]
        %v2031 = vsel %vm2029, %v2020, %v2030
        %2032 = vst [vmem:[#allocation3 + $0x8] sm:$0x1] %v2031
        %2033 = vst.msk [vmem:[#allocation4] sm:$0xff] %vm827, 0.0
        %2034 = vst.msk [vmem:[#allocation4 + $0x8] sm:$0xff] %vm827, 0.0
        %2035 = vst.msk [vmem:[#allocation4 + $0x10] sm:$0x1] %vm834, 0.0
      $region88: #{clip_vit_encoder_forward.4} parent=79 // pred_fallthru
        _
      %v2036 = vld [vmem:[#allocation3] sm:$0xf]
      %v2037 = vld [vmem:[#allocation3 + $0x4] sm:$0xf]
      %v2038 = vld [vmem:[#allocation3 + $0x8] sm:$0x1]
      %v2039 = vld [vmem:[%s719] sm:$0xf]
      %v2040 = vld [vmem:[%s719 + $0x4] sm:$0xf]
      %v2041 = vld [vmem:[%s719 + $0x8] sm:$0xf]
      %v2042 = vld [vmem:[%s719 + $0xc] sm:$0xf]
      %v2043 = vld [vmem:[%s725] sm:$0x1]
      %v2045 = vlaneseq
      %v2046 = vshrl.u32 %v2045, 7
      %v2047 = vsub.s32 0, %v2046
      %v2048 = vrot.slane %v2043, %v2047
      %v2053 = vunpack.c.l.b16 %v2036
      %v2054 = vunpack.c.l.b16 %v2037
      %v2055 = vunpack.c.l.b16 %v2038
      %v2056 = vpack.c.b16 %v2054, %v2053
      %v2057 = vpack.c.b16 %v2055, %v2055
      %v2062 = vunpack.c.l.b16 %v2039
      %v2063 = vunpack.c.l.b16 %v2040
      %v2064 = vunpack.c.l.b16 %v2041
      %v2065 = vunpack.c.l.b16 %v2042
      %v2066 = vpack.c.b16 %v2063, %v2062
      %v2067 = vpack.c.b16 %v2065, %v2064
      %vm2070 = vcmask 261120
      %v2072 = vsel %vm2070, %v2056, 0
      %v2075 = vsel %vm2070, %v2057, 0
      %2077 = vmatprep.subr.bf16.mxu0 0
      %2078 = vmatpush1.bf16.msra.mxu0 %v2066
      %2079 = vmatprep.subr.bf16.mxu0 0
      %2080 = vmatpush1.bf16.msra.mxu0 %v2067
      %2081 = vmatprep.subr.bf16.mxu0 0
      %2082 = vmatpush1.bf16.msra.mxu0 0
      %2083 = vmatprep.subr.bf16.mxu0 0
      %2084 = vmatpush1.bf16.msra.mxu0 0
      %2085 = vmatprep.subr.bf16.mxu0 0
      %2086 = vmatpush1.bf16.msra.mxu0 0
      %2087 = vmatprep.subr.bf16.mxu0 0
      %2088 = vmatpush1.bf16.msra.mxu0 0
      %2089 = vmatprep.subr.bf16.mxu0 0
      %2090 = vmatpush1.bf16.msra.mxu0 0
      %2091 = vmatprep.subr.bf16.mxu0 0
      %2092 = vmatpush1.bf16.msra.mxu0 0
      %2093 = vmatprep.subr.bf16.mxu0 0
      %2094 = vmatpush1.bf16.msra.mxu0 0
      %2095 = vmatprep.subr.bf16.mxu0 0
      %2096 = vmatpush1.bf16.msra.mxu0 0
      %2097 = vmatprep.subr.bf16.mxu0 0
      %2098 = vmatpush1.bf16.msra.mxu0 0
      %2099 = vmatprep.subr.bf16.mxu0 0
      %2100 = vmatpush1.bf16.msra.mxu0 0
      %2101 = vmatprep.subr.bf16.mxu0 0
      %2102 = vmatpush1.bf16.msra.mxu0 0
      %2103 = vmatprep.subr.bf16.mxu0 0
      %2104 = vmatpush1.bf16.msra.mxu0 0
      %2105 = vmatprep.subr.bf16.mxu0 0
      %2106 = vmatpush1.bf16.msra.mxu0 0
      %2107 = vmatprep.subr.bf16.mxu0 0
      %2108 = vmatpush1.bf16.msra.mxu0 0
      %2109 = vmatprep.mubr.bf16.mxu0 0
      %2110 = vmatmul.mubr.bf16.gmra.mrb[0].mxu0 %v2072
      %v2111 = vpop.f32.mrb[0].mxu0
      %v2112 = vadd.f32 %v2048, %v2111
      %v2113 = vpop.f32.mrb[0].mxu0
      %v2114 = vpop.f32.mrb[0].mxu0
      %v2115 = vadd.f32 %v2048, %v2114
      %v2116 = vpop.f32.mrb[0].mxu0
      %2117 = vmatprep.mubr.bf16.mxu0 0
      %2118 = vmatmul.mubr.bf16.gmra.mrb[0].mxu0 %v2075
      %v2119 = vpop.f32.mrb[0].mxu0
      %v2120 = vadd.f32 %v2048, %v2119
      %v2121 = vpop.f32.mrb[0].mxu0
      %v2122 = vpop.f32.mrb[0].mxu0
      %v2123 = vpop.f32.mrb[0].mxu0
      %2124 = vdwg.mxu0
      %v2125 = vmul.f32 %v2112, 1.702
      %v2126 = vmul.f32 %v2115, 1.702
      %v2127 = vmul.f32 %v2120, 1.702
      %v2128 = vxor.u32 %v2125, 2147483648
      %v2129 = vxor.u32 %v2126, 2147483648
      %v2130 = vxor.u32 %v2127, 2147483648
      %v2131 = vmul.f32 %v2128, 1.442695
      %v2132 = vpow.pop %v2131
      %v2133 = vmul.f32 %v2129, 1.442695
      %v2134 = vpow.pop %v2133
      %v2135 = vmul.f32 %v2130, 1.442695
      %v2136 = vpow.pop %v2135
      %v2137 = vadd.f32 %v2132, 1.0
      %v2138 = vadd.f32 %v2134, 1.0
      %v2139 = vadd.f32 %v2136, 1.0
      %v2140 = vrcp.pop %v2137
      %v2141 = vmul.f32 1.0, %v2140
      %v2142 = vrcp.pop %v2138
      %v2143 = vmul.f32 1.0, %v2142
      %v2144 = vrcp.pop %v2139
      %v2145 = vmul.f32 1.0, %v2144
      %v2146 = vmul.f32 %v2112, %v2141
      %v2147 = vmul.f32 %v2115, %v2143
      %v2148 = vmul.f32 %v2120, %v2145
      %v2149 = vld [vmem:[#allocation4] sm:$0xff]
      %v2150 = vld [vmem:[#allocation4 + $0x8] sm:$0xff]
      %v2151 = vld [vmem:[#allocation4 + $0x10] sm:$0x1]
      %v2152 = vpack.c.bf16 %v2147, %v2146
      %v2153 = vpack.c.bf16 %v2148, %v2148
      %v2154 = vld [vmem:[%s734] sm:$0xf]
      %v2155 = vld [vmem:[%s734 + $0x4] sm:$0xf]
      %v2156 = vld [vmem:[%s734 + $0x8] sm:$0xf]
      %v2157 = vld [vmem:[%s734 + $0xc] sm:$0xf]
      %v2158 = vld [vmem:[%s734 + $0x10] sm:$0xf]
      %v2159 = vld [vmem:[%s734 + $0x14] sm:$0xf]
      %v2160 = vld [vmem:[%s734 + $0x18] sm:$0xf]
      %v2161 = vld [vmem:[%s734 + $0x1c] sm:$0xf]
      %v2162 = vld [vmem:[%s734 + $0x20] sm:$0xf]
      %v2163 = vld [vmem:[%s734 + $0x24] sm:$0xf]
      %v2164 = vld [vmem:[%s734 + $0x28] sm:$0xf]
      %v2165 = vld [vmem:[%s734 + $0x2c] sm:$0xf]
      %v2166 = vld [vmem:[%s734 + $0x30] sm:$0xf]
      %v2167 = vld [vmem:[%s734 + $0x34] sm:$0xf]
      %v2168 = vld [vmem:[%s734 + $0x38] sm:$0xf]
      %v2169 = vld [vmem:[%s734 + $0x3c] sm:$0xf]
      %v2186 = vunpack.c.l.b16 %v2154
      %v2187 = vunpack.c.l.b16 %v2155
      %v2188 = vunpack.c.l.b16 %v2156
      %v2189 = vunpack.c.l.b16 %v2157
      %v2190 = vunpack.c.l.b16 %v2158
      %v2191 = vunpack.c.l.b16 %v2159
      %v2192 = vunpack.c.l.b16 %v2160
      %v2193 = vunpack.c.l.b16 %v2161
      %v2194 = vunpack.c.l.b16 %v2162
      %v2195 = vunpack.c.l.b16 %v2163
      %v2196 = vunpack.c.l.b16 %v2164
      %v2197 = vunpack.c.l.b16 %v2165
      %v2198 = vunpack.c.l.b16 %v2166
      %v2199 = vunpack.c.l.b16 %v2167
      %v2200 = vunpack.c.l.b16 %v2168
      %v2201 = vunpack.c.l.b16 %v2169
      %v2202 = vpack.c.b16 %v2187, %v2186
      %v2203 = vpack.c.b16 %v2189, %v2188
      %v2204 = vpack.c.b16 %v2191, %v2190
      %v2205 = vpack.c.b16 %v2193, %v2192
      %v2206 = vpack.c.b16 %v2195, %v2194
      %v2207 = vpack.c.b16 %v2197, %v2196
      %v2208 = vpack.c.b16 %v2199, %v2198
      %v2209 = vpack.c.b16 %v2201, %v2200
      %2218 = vmatprep.subr.bf16.mxu0 0
      %2219 = vmatpush1.bf16.msra.mxu0 %v2202
      %2220 = vmatprep.subr.bf16.mxu0 0
      %2221 = vmatpush1.bf16.msra.mxu0 %v2203
      %2222 = vmatprep.subr.bf16.mxu0 0
      %2223 = vmatpush1.bf16.msra.mxu0 %v2204
      %2224 = vmatprep.subr.bf16.mxu0 0
      %2225 = vmatpush1.bf16.msra.mxu0 %v2205
      %2226 = vmatprep.subr.bf16.mxu0 0
      %2227 = vmatpush1.bf16.msra.mxu0 %v2206
      %2228 = vmatprep.subr.bf16.mxu0 0
      %2229 = vmatpush1.bf16.msra.mxu0 %v2207
      %2230 = vmatprep.subr.bf16.mxu0 0
      %2231 = vmatpush1.bf16.msra.mxu0 %v2208
      %2232 = vmatprep.subr.bf16.mxu0 0
      %2233 = vmatpush1.bf16.msra.mxu0 %v2209
      %2234 = vmatprep.subr.bf16.mxu0 0
      %2235 = vmatpush1.bf16.msra.mxu0 0
      %2236 = vmatprep.subr.bf16.mxu0 0
      %2237 = vmatpush1.bf16.msra.mxu0 0
      %2238 = vmatprep.subr.bf16.mxu0 0
      %2239 = vmatpush1.bf16.msra.mxu0 0
      %2240 = vmatprep.subr.bf16.mxu0 0
      %2241 = vmatpush1.bf16.msra.mxu0 0
      %2242 = vmatprep.subr.bf16.mxu0 0
      %2243 = vmatpush1.bf16.msra.mxu0 0
      %2244 = vmatprep.subr.bf16.mxu0 0
      %2245 = vmatpush1.bf16.msra.mxu0 0
      %2246 = vmatprep.subr.bf16.mxu0 0
      %2247 = vmatpush1.bf16.msra.mxu0 0
      %2248 = vmatprep.subr.bf16.mxu0 0
      %2249 = vmatpush1.bf16.msra.mxu0 0
      %2250 = vmatprep.mubr.bf16.mxu0 0
      %2251 = vmatmul.mubr.bf16.gmra.mrb[0].mxu0 %v2152
      %v2252 = vpop.f32.mrb[0].mxu0
      %v2253 = vadd.f32 0.0, %v2252
      %v2254 = vpop.f32.mrb[0].mxu0
      %v2255 = vpop.f32.mrb[0].mxu0
      %v2256 = vadd.f32 0.0, %v2255
      %v2257 = vpop.f32.mrb[0].mxu0
      %2258 = vmatprep.mubr.bf16.mxu0 0
      %2259 = vmatmul.mubr.bf16.gmra.mrb[0].mxu0 %v2153
      %v2260 = vpop.f32.mrb[0].mxu0
      %v2261 = vadd.f32 0.0, %v2260
      %v2262 = vpop.f32.mrb[0].mxu0
      %v2263 = vpop.f32.mrb[0].mxu0
      %v2264 = vpop.f32.mrb[0].mxu0
      %2265 = vdwg.mxu0
      %v2266 = vadd.f32 %v2149, %v2253
      %v2267 = vadd.f32 %v2150, %v2256
      %v2268 = vadd.f32 %v2151, %v2261
      %2269 = vst.msk [vmem:[#allocation4] sm:$0xff] %vm2070, %v2266
      %2270 = vst.msk [vmem:[#allocation4 + $0x8] sm:$0xff] %vm2070, %v2267
      %vm2271 = vcmask 253952
      %2272 = vst.msk [vmem:[#allocation4 + $0x10] sm:$0x1] %vm2271, %v2268
      // Predicated region
      $region89: #{clip_vit_encoder_forward.4} parent=79 // pred_check
        %p2273 = pneg %p746
      $region90: #{clip_vit_encoder_forward.4} parent=79 // pred_check_branch
        %2275 = sbr.rel (%p2273) target = $region92
      $region91: #{clip_vit_encoder_forward.4} parent=79 // pred_region
        %v2276 = vld [vmem:[#allocation2] sm:$0xff]
        %v2277 = vld [vmem:[#allocation2 + $0x8] sm:$0xff]
        %v2278 = vld [vmem:[#allocation2 + $0x10] sm:$0x1]
        %v2279 = vld [vmem:[#allocation4] sm:$0xff]
        %v2280 = vld [vmem:[#allocation4 + $0x8] sm:$0xff]
        %v2281 = vld [vmem:[#allocation4 + $0x10] sm:$0x1]
        %v2282 = vadd.f32 %v2276, %v2279
        %v2283 = vadd.f32 %v2277, %v2280
        %v2284 = vadd.f32 %v2278, %v2281
        %v2285 = vld [vmem:[%s738] sm:$0x1]
        %v2287 = vlaneseq
        %v2288 = vshrl.u32 %v2287, 7
        %v2289 = vsub.s32 0, %v2288
        %v2290 = vrot.slane %v2285, %v2289
        %v2292 = vadd.f32 %v2282, %v2290
        %v2293 = vadd.f32 %v2283, %v2290
        %v2294 = vadd.f32 %v2284, %v2290
        %2295 = vst.msk [vmem:[#allocation2] sm:$0xff] %vm2070, %v2292
        %2296 = vst.msk [vmem:[#allocation2 + $0x8] sm:$0xff] %vm2070, %v2293
        %2297 = vst.msk [vmem:[#allocation2 + $0x10] sm:$0x1] %vm2271, %v2294
      $region92: #{clip_vit_encoder_forward.4} parent=79 // pred_fallthru
        _
      %p2298 = scmp.eq.s32.totalorder %s32, 1
      %p2299 = pnand %p2298, %p746
      %p2300 = pneg %p2299
      // Predicated region
      $region93: #{clip_vit_encoder_forward.4} parent=79 // pred_check
        _
      $region94: #{clip_vit_encoder_forward.4} parent=79 // pred_check_branch
        %2302 = sbr.rel (%p2299) target = $region96
      $region95: #{clip_vit_encoder_forward.4} parent=79 // pred_region
        %v2303 = vld [vmem:[#allocation2] sm:$0xff]
        %v2304 = vld [vmem:[#allocation2 + $0x8] sm:$0xff]
        %v2305 = vld [vmem:[#allocation2 + $0x10] sm:$0x1]
        %2306 = vst.msk [vmem:[%s743] sm:$0xff] %vm2070, %v2303
        %2307 = vst.msk [vmem:[%s743 + $0x8] sm:$0xff] %vm2070, %v2304
        %2308 = vst.msk [vmem:[%s743 + $0x10] sm:$0x1] %vm2271, %v2305
      $region96: #{clip_vit_encoder_forward.4} parent=79 // pred_fallthru
        _
      %p2309 = scmp.lt.s32.totalorder %s31, 1
      %s2310 = scalar_select %p2309, %s31, 1
      %s2311 = smul.addr %s2310, 3
      %s2312 = smul.addr %s2311, 8
      %s2313 = scalar_lea.vmem %s15, %s2312
      // Predicated region
      $region97: #{clip_vit_encoder_forward.4} parent=79 // pred_check
        %p2314 = pneg %p449
      $region98: #{clip_vit_encoder_forward.4} parent=79 // pred_check_branch
        %2316 = sbr.rel (%p2314) target = $region100
      $region99: #{clip_vit_encoder_forward.4} parent=79 // pred_region
        _
      $region100: #{clip_vit_encoder_forward.4} parent=79 // pred_fallthru
        _
    $region80: #{clip_vit_encoder_forward.4} parent=5 // pred_fallthru
      _
    %p2317 = scmp.le.s32.totalorder 2, %s21
    // Predicated region
    $region101: #{clip_vit_encoder_forward.4} parent=5 // pred_check
      %p2318 = pneg %p2317
    $region102: #{clip_vit_encoder_forward.4} parent=5 // pred_check_branch
      %2320 = sbr.rel (%p2318) target = $region104
    $region103: #{clip_vit_encoder_forward.4} parent=5 // pred_region
      %s2321 = ssub.s32 %s21, 2
      // Predicated region
      $region105: #{clip_vit_encoder_forward.4} parent=103 // pred_check
        %p2322 = pneg %p455
      $region106: #{clip_vit_encoder_forward.4} parent=103 // pred_check_branch
        %2324 = sbr.rel (%p2322) target = $region108
      $region107: #{clip_vit_encoder_forward.4} parent=103 // pred_region
        %p2325 = scmp.lt.s32.totalorder %s34, 1
        %s2326 = scalar_select %p2325, %s34, 1
        %s2327 = smul.addr %s2326, 3
        %s2328 = smul.addr %s2327, 8
        %s2329 = scalar_lea.vmem %s15, %s2328
      $region108: #{clip_vit_encoder_forward.4} parent=103 // pred_fallthru
        _
    $region104: #{clip_vit_encoder_forward.4} parent=5 // pred_fallthru
      _
  $region6: #{clip_vit_encoder_forward.4} parent=0 // loop_footer
    %s25 = sadd.s32 1, %s21
  $region7: #{clip_vit_encoder_forward.4} parent=0 // loop_footer_branch
    %20 = sbr.rel target = $region3
  $region8: #{clip_vit_encoder_forward.4} parent=0 // loop_exit
    _

</llo_original>
